<compile_context>
chip_gen: v7x
topology: tpu7x:2x2x1
jax: 0.10.0
libtpu: 0.0.40
codegen_flags: <defaults>
</compile_context>

<pallas_src>
import functools

import numpy as np
import jax
import jax.numpy as jnp
from jax.experimental import pallas as pl
from jax.experimental.pallas import tpu as pltpu

_NEG = float(np.finfo(np.float32).min)   # -inf sentinel for max-pool padding


def _silu(z):
    # x * sigmoid(x) == x / (1 + exp(-x)); exp goes to the EUP slot.
    return z * (1.0 / (1.0 + jnp.exp(-z)))


def _spp_kernel(x_ref, w1_ref, s1_ref, b1_ref, w2_ref, s2_ref, b2_ref,
                o_ref, pad_ref, *, H, W, c_, c2, ks, pmax):
    """Fused SPP forward for one batch element.

    x_ref  : (1, H, W, c1)  NHWC input block
    w1_ref : (c1, c_)       cv1 1x1 conv weight
    s1/b1  : (1, c_)        cv1 BN folded scale / shift
    w2_ref : (nb, c_, c2)   cv2 weight split per pyramid branch
    s2/b2  : (1, c2)        cv2 BN folded scale / shift
    o_ref  : (1, H, W, c2)  NHWC output block
    pad_ref: (H+2p, W+2p, c_) VMEM scratch with a -inf border for the pooling
    """
    c1 = x_ref.shape[-1]
    x = x_ref[0].reshape(H * W, c1)

    # ---- cv1: 1x1 conv (matmul over channels) + BN + SiLU --------------------
    y = jnp.dot(x, w1_ref[...], preferred_element_type=jnp.float32)
    y = _silu(y * s1_ref[...] + b1_ref[...])                 # (H*W, c_)
    y3 = y.reshape(H, W, c_)

    # ---- cv2 projection folded into the branch loop (no channel concat) ------
    acc = jnp.dot(y, w2_ref[0], preferred_element_type=jnp.float32)   # branch 0

    # ---- chained separable max pooling ---------------------------------------
    # Initialize the padded scratch once; its border stays at the sentinel and
    # the center is overwritten every stage.
    pad_ref[...] = jnp.full(pad_ref.shape, _NEG, jnp.float32)

    cur = y3
    prev_k = 1
    for i, kk in enumerate(ks):
        win = kk - prev_k + 1          # delta window (odd); chained pooling
        p = win // 2
        prev_k = kk

        # rows (H direction): leading-dim slices of the padded scratch
        pad_ref[pmax:pmax + H, pmax:pmax + W, :] = cur
        hmax = pad_ref[pmax - p:pmax - p + H, pmax:pmax + W, :]
        for d in range(1, win):
            hmax = jnp.maximum(
                hmax, pad_ref[pmax - p + d:pmax - p + d + H, pmax:pmax + W, :])

        # cols (W direction): static sublane-offset slices of the padded scratch
        pad_ref[pmax:pmax + H, pmax:pmax + W, :] = hmax
        cur = pad_ref[pmax:pmax + H, pmax - p:pmax - p + W, :]
        for d in range(1, win):
            cur = jnp.maximum(
                cur, pad_ref[pmax:pmax + H, pmax - p + d:pmax - p + d + W, :])

        # fold this branch's contribution to cv2
        acc = acc + jnp.dot(cur.reshape(H * W, c_), w2_ref[i + 1],
                            preferred_element_type=jnp.float32)

    # ---- cv2 BN + SiLU, single bulk store -------------------------------------
    out = _silu(acc * s2_ref[...] + b2_ref[...])              # (H*W, c2)
    o_ref[0] = out.reshape(H, W, c2)


def spp_forward(x, params, *, ks=(5, 9, 13), eps=1e-5):
    """x: (bs, c1, H, W) NCHW float32 -> (bs, c2, H, W) NCHW float32."""
    bs, c1, H, W = x.shape
    c_ = params['w1'].shape[1]
    c2 = params['w2'].shape[1]
    nb = len(ks) + 1
    assert params['w2'].shape[0] == nb * c_

    # chained-pool windows must be odd (true for the default k=(5, 9, 13))
    wins = []
    prev = 1
    for kk in ks:
        win = kk - prev + 1
        assert win % 2 == 1, "chained separable pooling needs odd delta windows"
        wins.append(win)
        prev = kk
    pmax = max(w // 2 for w in wins)

    def fold_bn(g, b, m, v):
        scale = g / jnp.sqrt(v + eps)
        shift = b - m * scale
        return scale.reshape(1, -1).astype(jnp.float32), \
               shift.reshape(1, -1).astype(jnp.float32)

    s1, b1 = fold_bn(params['bn1_g'], params['bn1_b'],
                     params['bn1_m'], params['bn1_v'])
    s2, b2 = fold_bn(params['bn2_g'], params['bn2_b'],
                     params['bn2_m'], params['bn2_v'])
    w1 = params['w1']
    w2 = params['w2'].reshape(nb, c_, c2)     # split per pyramid branch

    # Channels -> lanes. (Single cheap XLA transpose of the input; everything
    # downstream is fused in one kernel.)
    x_nhwc = jnp.transpose(x, (0, 2, 3, 1))

    kern = functools.partial(_spp_kernel, H=H, W=W, c_=c_, c2=c2,
                             ks=tuple(ks), pmax=pmax)

    def full_spec(a):
        return pl.BlockSpec(a.shape, lambda b, _nd=a.ndim: (0,) * _nd)

    out_nhwc = pl.pallas_call(
        kern,
        grid=(bs,),
        in_specs=[pl.BlockSpec((1, H, W, c1), lambda b: (b, 0, 0, 0)),
                  full_spec(w1), full_spec(s1), full_spec(b1),
                  full_spec(w2), full_spec(s2), full_spec(b2)],
        out_specs=pl.BlockSpec((1, H, W, c2), lambda b: (b, 0, 0, 0)),
        out_shape=jax.ShapeDtypeStruct((bs, H, W, c2), jnp.float32),
        scratch_shapes=[pltpu.VMEM((H + 2 * pmax, W + 2 * pmax, c_),
                                   jnp.float32)],
        compiler_params=pltpu.CompilerParams(
            dimension_semantics=("parallel",)),
    )(x_nhwc, w1, s1, b1, w2, s2, b2)

    return jnp.transpose(out_nhwc, (0, 3, 1, 2))   # back to NCHW


# --------------------------- deterministic params -----------------------------

def init_params(key, c1, c2, ks):
    c_ = c1 // 2
    nb = len(ks) + 1
    k = jax.random.split(key, 8)

    def winit(k_, shape, fan_in):
        return (jax.random.normal(k_, shape, jnp.float32) /
                np.sqrt(float(fan_in))).astype(jnp.float32)

    return {
        'w1': winit(k[0], (c1, c_), c1),
        'bn1_g': 1.0 + 0.1 * jax.random.normal(k[1], (c_,), jnp.float32),
        'bn1_b': 0.05 * jnp.ones((c_,), jnp.float32),
        'bn1_m': 0.1 * jax.random.normal(k[2], (c_,), jnp.float32),
        'bn1_v': jax.random.uniform(k[3], (c_,), jnp.float32, 0.5, 1.5),
        'w2': winit(k[4], (nb * c_, c2), nb * c_),
        'bn2_g': 1.0 + 0.1 * jax.random.normal(k[5], (c2,), jnp.float32),
        'bn2_b': -0.05 * jnp.ones((c2,), jnp.float32),
        'bn2_m': 0.1 * jax.random.normal(k[6], (c2,), jnp.float32),
        'bn2_v': jax.random.uniform(k[7], (c2,), jnp.float32, 0.5, 1.5),
    }


# --------------------------- pure-JAX reference --------------------------------
# BatchNorm is applied in eval mode (running stats), matching the deployed module.

def reference(x, params, *, ks=(5, 9, 13), eps=1e-5):
    def conv_bn_silu(z, w, g, b, m, v):
        y = jnp.einsum('bchw,cd->bdhw', z, w)
        y = ((y - m[None, :, None, None]) /
             jnp.sqrt(v[None, :, None, None] + eps) *
             g[None, :, None, None] + b[None, :, None, None])
        return _silu(y)

    y = conv_bn_silu(x, params['w1'], params['bn1_g'], params['bn1_b'],
                     params['bn1_m'], params['bn1_v'])
    branches = [y]
    for kk in ks:
        p = kk // 2
        branches.append(jax.lax.reduce_window(
            y, -jnp.inf, jax.lax.max,
            window_dimensions=(1, 1, kk, kk),
            window_strides=(1, 1, 1, 1),
            padding=((0, 0), (0, 0), (p, p), (p, p))))
    cat = jnp.concatenate(branches, axis=1)
    return conv_bn_silu(cat, params['w2'], params['bn2_g'], params['bn2_b'],
                        params['bn2_m'], params['bn2_v'])


# ------------------------------------ main --------------------------------------

if __name__ == "__main__":
    c1, c2 = 32, 32                 # c_ = c1 // 2 = 16, cat channels = 64
    ks = (5, 9, 13)
    bs, H, W = 2, 16, 16

    key = jax.random.PRNGKey(0)
    kx, kp = jax.random.split(key)
    x = jax.random.normal(kx, (bs, c1, H, W), jnp.float32)
    params = init_params(kp, c1, c2, ks)

    out = spp_forward(x, params, ks=ks)
    out = jax.block_until_ready(out)

    ref = reference(x, params, ks=ks)
    np.testing.assert_allclose(np.asarray(out), np.asarray(ref),
                               rtol=1e-3, atol=1e-3)
    print("KERNEL_OK")
</pallas_src>

<mosaic_0001>
module attributes {stable_mosaic.version = 11 : i64} {
  func.func @_spp_kernel(%arg0: i32, %arg1: memref<1x16x16x32xf32, #tpu.memory_space<vmem>>, %arg2: memref<32x16xf32, #tpu.memory_space<vmem>>, %arg3: memref<1x16xf32, #tpu.memory_space<vmem>>, %arg4: memref<1x16xf32, #tpu.memory_space<vmem>>, %arg5: memref<4x16x32xf32, #tpu.memory_space<vmem>>, %arg6: memref<1x32xf32, #tpu.memory_space<vmem>>, %arg7: memref<1x32xf32, #tpu.memory_space<vmem>>, %arg8: memref<1x16x16x32xf32, #tpu.memory_space<vmem>>, %arg9: memref<20x20x16xf32, #tpu.memory_space<vmem>>) attributes {dimension_semantics = [#tpu.dimension_semantics<parallel>], iteration_bounds = array<i64: 2>, scalar_prefetch = 0 : i64, scratch_operands = 1 : i64, tpu.core_type = #tpu.core_type<tc>, window_params = [{transform_indices = @transform_0, window_bounds = array<i64: 1, 16, 16, 32>}, {pipeline_mode = #tpu.pipeline_mode<synchronous>, transform_indices = @transform_1, window_bounds = array<i64: 32, 16>}, {pipeline_mode = #tpu.pipeline_mode<synchronous>, transform_indices = @transform_2, window_bounds = array<i64: 1, 16>}, {pipeline_mode = #tpu.pipeline_mode<synchronous>, transform_indices = @transform_3, window_bounds = array<i64: 1, 16>}, {pipeline_mode = #tpu.pipeline_mode<synchronous>, transform_indices = @transform_4, window_bounds = array<i64: 4, 16, 32>}, {pipeline_mode = #tpu.pipeline_mode<synchronous>, transform_indices = @transform_5, window_bounds = array<i64: 1, 32>}, {pipeline_mode = #tpu.pipeline_mode<synchronous>, transform_indices = @transform_6, window_bounds = array<i64: 1, 32>}, {transform_indices = @transform_7, window_bounds = array<i64: 1, 16, 16, 32>}]} {
    %c0 = arith.constant 0 : index
    %c0_0 = arith.constant 0 : index
    %c0_1 = arith.constant 0 : index
    %c0_2 = arith.constant 0 : index
    %0 = vector.load %arg1[%c0, %c0_0, %c0_1, %c0_2] : memref<1x16x16x32xf32, #tpu.memory_space<vmem>>, vector<1x16x16x32xf32>
    %1 = vector.shape_cast %0 : vector<1x16x16x32xf32> to vector<16x16x32xf32>
    %2 = vector.shape_cast %1 : vector<16x16x32xf32> to vector<256x32xf32>
    %c0_3 = arith.constant 0 : index
    %c0_4 = arith.constant 0 : index
    %3 = vector.load %arg2[%c0_3, %c0_4] : memref<32x16xf32, #tpu.memory_space<vmem>>, vector<32x16xf32>
    %cst = arith.constant dense<0.000000e+00> : vector<256x16xf32>
    %4 = tpu.matmul %2, %3, %cst {dimension_numbers = #tpu.dot_dimension_numbers<[1], [0], [0], [1], [0, 0, 1, 1], [], []>} : vector<256x32xf32>, vector<32x16xf32>, vector<256x16xf32> -> vector<256x16xf32>
    %c0_5 = arith.constant 0 : index
    %c0_6 = arith.constant 0 : index
    %5 = vector.load %arg3[%c0_5, %c0_6] : memref<1x16xf32, #tpu.memory_space<vmem>>, vector<1x16xf32>
    %6 = vector.broadcast %5 : vector<1x16xf32> to vector<256x16xf32>
    %7 = arith.mulf %4, %6 : vector<256x16xf32>
    %c0_7 = arith.constant 0 : index
    %c0_8 = arith.constant 0 : index
    %8 = vector.load %arg4[%c0_7, %c0_8] : memref<1x16xf32, #tpu.memory_space<vmem>>, vector<1x16xf32>
    %9 = vector.broadcast %8 : vector<1x16xf32> to vector<256x16xf32>
    %10 = arith.addf %7, %9 : vector<256x16xf32>
    %cst_9 = arith.constant 0.000000e+00 : f32
    %11 = vector.broadcast %cst_9 : f32 to vector<256x16xf32>
    %12 = arith.subf %11, %10 : vector<256x16xf32>
    %13 = math.exp %12 : vector<256x16xf32>
    %cst_10 = arith.constant 1.000000e+00 : f32
    %14 = vector.broadcast %cst_10 : f32 to vector<256x16xf32>
    %15 = arith.addf %14, %13 : vector<256x16xf32>
    %cst_11 = arith.constant 1.000000e+00 : f32
    %16 = vector.broadcast %cst_11 : f32 to vector<256x16xf32>
    %17 = arith.divf %16, %15 : vector<256x16xf32>
    %18 = arith.mulf %10, %17 : vector<256x16xf32>
    %19 = vector.shape_cast %18 : vector<256x16xf32> to vector<16x16x16xf32>
    %c0_12 = arith.constant 0 : index
    %c0_13 = arith.constant 0 : index
    %c0_14 = arith.constant 0 : index
    %20 = vector.load %arg5[%c0_12, %c0_13, %c0_14] : memref<4x16x32xf32, #tpu.memory_space<vmem>>, vector<1x16x32xf32>
    %21 = vector.shape_cast %20 : vector<1x16x32xf32> to vector<16x32xf32>
    %cst_15 = arith.constant dense<0.000000e+00> : vector<256x32xf32>
    %22 = tpu.matmul %18, %21, %cst_15 {dimension_numbers = #tpu.dot_dimension_numbers<[1], [0], [0], [1], [0, 0, 1, 1], [], []>} : vector<256x16xf32>, vector<16x32xf32>, vector<256x32xf32> -> vector<256x32xf32>
    %cst_16 = arith.constant -3.40282347E+38 : f32
    %23 = vector.broadcast %cst_16 : f32 to vector<20x20x16xf32>
    %c0_17 = arith.constant 0 : index
    %c0_18 = arith.constant 0 : index
    %c0_19 = arith.constant 0 : index
    %24 = vector.load %arg9[%c0_17, %c0_18, %c0_19] : memref<20x20x16xf32, #tpu.memory_space<vmem>>, vector<20x20x16xf32>
    tpu.vector_store %arg9[%c0_17, %c0_18, %c0_19], %23 {strides = array<i32>} : memref<20x20x16xf32, #tpu.memory_space<vmem>>, vector<20x20x16xf32>,
    %c2 = arith.constant 2 : index
    %c2_20 = arith.constant 2 : index
    %c0_21 = arith.constant 0 : index
    %25 = vector.load %arg9[%c2, %c2_20, %c0_21] : memref<20x20x16xf32, #tpu.memory_space<vmem>>, vector<16x16x16xf32>
    tpu.vector_store %arg9[%c2, %c2_20, %c0_21], %19 {strides = array<i32>} : memref<20x20x16xf32, #tpu.memory_space<vmem>>, vector<16x16x16xf32>,
    %c0_22 = arith.constant 0 : index
    %c2_23 = arith.constant 2 : index
    %c0_24 = arith.constant 0 : index
    %26 = vector.load %arg9[%c0_22, %c2_23, %c0_24] : memref<20x20x16xf32, #tpu.memory_space<vmem>>, vector<16x16x16xf32>
    %c1 = arith.constant 1 : index
    %c2_25 = arith.constant 2 : index
    %c0_26 = arith.constant 0 : index
    %27 = vector.load %arg9[%c1, %c2_25, %c0_26] : memref<20x20x16xf32, #tpu.memory_space<vmem>>, vector<16x16x16xf32>
    %28 = arith.maximumf %26, %27 : vector<16x16x16xf32>
    %c2_27 = arith.constant 2 : index
    %c2_28 = arith.constant 2 : index
    %c0_29 = arith.constant 0 : index
    %29 = vector.load %arg9[%c2_27, %c2_28, %c0_29] : memref<20x20x16xf32, #tpu.memory_space<vmem>>, vector<16x16x16xf32>
    %30 = arith.maximumf %28, %29 : vector<16x16x16xf32>
    %c3 = arith.constant 3 : index
    %c2_30 = arith.constant 2 : index
    %c0_31 = arith.constant 0 : index
    %31 = vector.load %arg9[%c3, %c2_30, %c0_31] : memref<20x20x16xf32, #tpu.memory_space<vmem>>, vector<16x16x16xf32>
    %32 = arith.maximumf %30, %31 : vector<16x16x16xf32>
    %c4 = arith.constant 4 : index
    %c2_32 = arith.constant 2 : index
    %c0_33 = arith.constant 0 : index
    %33 = vector.load %arg9[%c4, %c2_32, %c0_33] : memref<20x20x16xf32, #tpu.memory_space<vmem>>, vector<16x16x16xf32>
    %34 = arith.maximumf %32, %33 : vector<16x16x16xf32>
    %c2_34 = arith.constant 2 : index
    %c2_35 = arith.constant 2 : index
    %c0_36 = arith.constant 0 : index
    %35 = vector.load %arg9[%c2_34, %c2_35, %c0_36] : memref<20x20x16xf32, #tpu.memory_space<vmem>>, vector<16x16x16xf32>
    tpu.vector_store %arg9[%c2_34, %c2_35, %c0_36], %34 {strides = array<i32>} : memref<20x20x16xf32, #tpu.memory_space<vmem>>, vector<16x16x16xf32>,
    %c2_37 = arith.constant 2 : index
    %c0_38 = arith.constant 0 : index
    %c0_39 = arith.constant 0 : index
    %36 = vector.load %arg9[%c2_37, %c0_38, %c0_39] : memref<20x20x16xf32, #tpu.memory_space<vmem>>, vector<16x16x16xf32>
    %c2_40 = arith.constant 2 : index
    %c1_41 = arith.constant 1 : index
    %c0_42 = arith.constant 0 : index
    %37 = vector.load %arg9[%c2_40, %c1_41, %c0_42] : memref<20x20x16xf32, #tpu.memory_space<vmem>>, vector<16x16x16xf32>
    %38 = arith.maximumf %36, %37 : vector<16x16x16xf32>
    %c2_43 = arith.constant 2 : index
    %c2_44 = arith.constant 2 : index
    %c0_45 = arith.constant 0 : index
    %39 = vector.load %arg9[%c2_43, %c2_44, %c0_45] : memref<20x20x16xf32, #tpu.memory_space<vmem>>, vector<16x16x16xf32>
    %40 = arith.maximumf %38, %39 : vector<16x16x16xf32>
    %c2_46 = arith.constant 2 : index
    %c3_47 = arith.constant 3 : index
    %c0_48 = arith.constant 0 : index
    %41 = vector.load %arg9[%c2_46, %c3_47, %c0_48] : memref<20x20x16xf32, #tpu.memory_space<vmem>>, vector<16x16x16xf32>
    %42 = arith.maximumf %40, %41 : vector<16x16x16xf32>
    %c2_49 = arith.constant 2 : index
    %c4_50 = arith.constant 4 : index
    %c0_51 = arith.constant 0 : index
    %43 = vector.load %arg9[%c2_49, %c4_50, %c0_51] : memref<20x20x16xf32, #tpu.memory_space<vmem>>, vector<16x16x16xf32>
    %44 = arith.maximumf %42, %43 : vector<16x16x16xf32>
    %45 = vector.shape_cast %44 : vector<16x16x16xf32> to vector<256x16xf32>
    %c1_52 = arith.constant 1 : index
    %c0_53 = arith.constant 0 : index
    %c0_54 = arith.constant 0 : index
    %46 = vector.load %arg5[%c1_52, %c0_53, %c0_54] : memref<4x16x32xf32, #tpu.memory_space<vmem>>, vector<1x16x32xf32>
    %47 = vector.shape_cast %46 : vector<1x16x32xf32> to vector<16x32xf32>
    %cst_55 = arith.constant dense<0.000000e+00> : vector<256x32xf32>
    %48 = tpu.matmul %45, %47, %cst_55 {dimension_numbers = #tpu.dot_dimension_numbers<[1], [0], [0], [1], [0, 0, 1, 1], [], []>} : vector<256x16xf32>, vector<16x32xf32>, vector<256x32xf32> -> vector<256x32xf32>
    %49 = arith.addf %22, %48 : vector<256x32xf32>
    %c2_56 = arith.constant 2 : index
    %c2_57 = arith.constant 2 : index
    %c0_58 = arith.constant 0 : index
    %50 = vector.load %arg9[%c2_56, %c2_57, %c0_58] : memref<20x20x16xf32, #tpu.memory_space<vmem>>, vector<16x16x16xf32>
    tpu.vector_store %arg9[%c2_56, %c2_57, %c0_58], %44 {strides = array<i32>} : memref<20x20x16xf32, #tpu.memory_space<vmem>>, vector<16x16x16xf32>,
    %c0_59 = arith.constant 0 : index
    %c2_60 = arith.constant 2 : index
    %c0_61 = arith.constant 0 : index
    %51 = vector.load %arg9[%c0_59, %c2_60, %c0_61] : memref<20x20x16xf32, #tpu.memory_space<vmem>>, vector<16x16x16xf32>
    %c1_62 = arith.constant 1 : index
    %c2_63 = arith.constant 2 : index
    %c0_64 = arith.constant 0 : index
    %52 = vector.load %arg9[%c1_62, %c2_63, %c0_64] : memref<20x20x16xf32, #tpu.memory_space<vmem>>, vector<16x16x16xf32>
    %53 = arith.maximumf %51, %52 : vector<16x16x16xf32>
    %c2_65 = arith.constant 2 : index
    %c2_66 = arith.constant 2 : index
    %c0_67 = arith.constant 0 : index
    %54 = vector.load %arg9[%c2_65, %c2_66, %c0_67] : memref<20x20x16xf32, #tpu.memory_space<vmem>>, vector<16x16x16xf32>
    %55 = arith.maximumf %53, %54 : vector<16x16x16xf32>
    %c3_68 = arith.constant 3 : index
    %c2_69 = arith.constant 2 : index
    %c0_70 = arith.constant 0 : index
    %56 = vector.load %arg9[%c3_68, %c2_69, %c0_70] : memref<20x20x16xf32, #tpu.memory_space<vmem>>, vector<16x16x16xf32>
    %57 = arith.maximumf %55, %56 : vector<16x16x16xf32>
    %c4_71 = arith.constant 4 : index
    %c2_72 = arith.constant 2 : index
    %c0_73 = arith.constant 0 : index
    %58 = vector.load %arg9[%c4_71, %c2_72, %c0_73] : memref<20x20x16xf32, #tpu.memory_space<vmem>>, vector<16x16x16xf32>
    %59 = arith.maximumf %57, %58 : vector<16x16x16xf32>
    %c2_74 = arith.constant 2 : index
    %c2_75 = arith.constant 2 : index
    %c0_76 = arith.constant 0 : index
    %60 = vector.load %arg9[%c2_74, %c2_75, %c0_76] : memref<20x20x16xf32, #tpu.memory_space<vmem>>, vector<16x16x16xf32>
    tpu.vector_store %arg9[%c2_74, %c2_75, %c0_76], %59 {strides = array<i32>} : memref<20x20x16xf32, #tpu.memory_space<vmem>>, vector<16x16x16xf32>,
    %c2_77 = arith.constant 2 : index
    %c0_78 = arith.constant 0 : index
    %c0_79 = arith.constant 0 : index
    %61 = vector.load %arg9[%c2_77, %c0_78, %c0_79] : memref<20x20x16xf32, #tpu.memory_space<vmem>>, vector<16x16x16xf32>
    %c2_80 = arith.constant 2 : index
    %c1_81 = arith.constant 1 : index
    %c0_82 = arith.constant 0 : index
    %62 = vector.load %arg9[%c2_80, %c1_81, %c0_82] : memref<20x20x16xf32, #tpu.memory_space<vmem>>, vector<16x16x16xf32>
    %63 = arith.maximumf %61, %62 : vector<16x16x16xf32>
    %c2_83 = arith.constant 2 : index
    %c2_84 = arith.constant 2 : index
    %c0_85 = arith.constant 0 : index
    %64 = vector.load %arg9[%c2_83, %c2_84, %c0_85] : memref<20x20x16xf32, #tpu.memory_space<vmem>>, vector<16x16x16xf32>
    %65 = arith.maximumf %63, %64 : vector<16x16x16xf32>
    %c2_86 = arith.constant 2 : index
    %c3_87 = arith.constant 3 : index
    %c0_88 = arith.constant 0 : index
    %66 = vector.load %arg9[%c2_86, %c3_87, %c0_88] : memref<20x20x16xf32, #tpu.memory_space<vmem>>, vector<16x16x16xf32>
    %67 = arith.maximumf %65, %66 : vector<16x16x16xf32>
    %c2_89 = arith.constant 2 : index
    %c4_90 = arith.constant 4 : index
    %c0_91 = arith.constant 0 : index
    %68 = vector.load %arg9[%c2_89, %c4_90, %c0_91] : memref<20x20x16xf32, #tpu.memory_space<vmem>>, vector<16x16x16xf32>
    %69 = arith.maximumf %67, %68 : vector<16x16x16xf32>
    %70 = vector.shape_cast %69 : vector<16x16x16xf32> to vector<256x16xf32>
    %c2_92 = arith.constant 2 : index
    %c0_93 = arith.constant 0 : index
    %c0_94 = arith.constant 0 : index
    %71 = vector.load %arg5[%c2_92, %c0_93, %c0_94] : memref<4x16x32xf32, #tpu.memory_space<vmem>>, vector<1x16x32xf32>
    %72 = vector.shape_cast %71 : vector<1x16x32xf32> to vector<16x32xf32>
    %cst_95 = arith.constant dense<0.000000e+00> : vector<256x32xf32>
    %73 = tpu.matmul %70, %72, %cst_95 {dimension_numbers = #tpu.dot_dimension_numbers<[1], [0], [0], [1], [0, 0, 1, 1], [], []>} : vector<256x16xf32>, vector<16x32xf32>, vector<256x32xf32> -> vector<256x32xf32>
    %74 = arith.addf %49, %73 : vector<256x32xf32>
    %c2_96 = arith.constant 2 : index
    %c2_97 = arith.constant 2 : index
    %c0_98 = arith.constant 0 : index
    %75 = vector.load %arg9[%c2_96, %c2_97, %c0_98] : memref<20x20x16xf32, #tpu.memory_space<vmem>>, vector<16x16x16xf32>
    tpu.vector_store %arg9[%c2_96, %c2_97, %c0_98], %69 {strides = array<i32>} : memref<20x20x16xf32, #tpu.memory_space<vmem>>, vector<16x16x16xf32>,
    %c0_99 = arith.constant 0 : index
    %c2_100 = arith.constant 2 : index
    %c0_101 = arith.constant 0 : index
    %76 = vector.load %arg9[%c0_99, %c2_100, %c0_101] : memref<20x20x16xf32, #tpu.memory_space<vmem>>, vector<16x16x16xf32>
    %c1_102 = arith.constant 1 : index
    %c2_103 = arith.constant 2 : index
    %c0_104 = arith.constant 0 : index
    %77 = vector.load %arg9[%c1_102, %c2_103, %c0_104] : memref<20x20x16xf32, #tpu.memory_space<vmem>>, vector<16x16x16xf32>
    %78 = arith.maximumf %76, %77 : vector<16x16x16xf32>
    %c2_105 = arith.constant 2 : index
    %c2_106 = arith.constant 2 : index
    %c0_107 = arith.constant 0 : index
    %79 = vector.load %arg9[%c2_105, %c2_106, %c0_107] : memref<20x20x16xf32, #tpu.memory_space<vmem>>, vector<16x16x16xf32>
    %80 = arith.maximumf %78, %79 : vector<16x16x16xf32>
    %c3_108 = arith.constant 3 : index
    %c2_109 = arith.constant 2 : index
    %c0_110 = arith.constant 0 : index
    %81 = vector.load %arg9[%c3_108, %c2_109, %c0_110] : memref<20x20x16xf32, #tpu.memory_space<vmem>>, vector<16x16x16xf32>
    %82 = arith.maximumf %80, %81 : vector<16x16x16xf32>
    %c4_111 = arith.constant 4 : index
    %c2_112 = arith.constant 2 : index
    %c0_113 = arith.constant 0 : index
    %83 = vector.load %arg9[%c4_111, %c2_112, %c0_113] : memref<20x20x16xf32, #tpu.memory_space<vmem>>, vector<16x16x16xf32>
    %84 = arith.maximumf %82, %83 : vector<16x16x16xf32>
    %c2_114 = arith.constant 2 : index
    %c2_115 = arith.constant 2 : index
    %c0_116 = arith.constant 0 : index
    %85 = vector.load %arg9[%c2_114, %c2_115, %c0_116] : memref<20x20x16xf32, #tpu.memory_space<vmem>>, vector<16x16x16xf32>
    tpu.vector_store %arg9[%c2_114, %c2_115, %c0_116], %84 {strides = array<i32>} : memref<20x20x16xf32, #tpu.memory_space<vmem>>, vector<16x16x16xf32>,
    %c2_117 = arith.constant 2 : index
    %c0_118 = arith.constant 0 : index
    %c0_119 = arith.constant 0 : index
    %86 = vector.load %arg9[%c2_117, %c0_118, %c0_119] : memref<20x20x16xf32, #tpu.memory_space<vmem>>, vector<16x16x16xf32>
    %c2_120 = arith.constant 2 : index
    %c1_121 = arith.constant 1 : index
    %c0_122 = arith.constant 0 : index
    %87 = vector.load %arg9[%c2_120, %c1_121, %c0_122] : memref<20x20x16xf32, #tpu.memory_space<vmem>>, vector<16x16x16xf32>
    %88 = arith.maximumf %86, %87 : vector<16x16x16xf32>
    %c2_123 = arith.constant 2 : index
    %c2_124 = arith.constant 2 : index
    %c0_125 = arith.constant 0 : index
    %89 = vector.load %arg9[%c2_123, %c2_124, %c0_125] : memref<20x20x16xf32, #tpu.memory_space<vmem>>, vector<16x16x16xf32>
    %90 = arith.maximumf %88, %89 : vector<16x16x16xf32>
    %c2_126 = arith.constant 2 : index
    %c3_127 = arith.constant 3 : index
    %c0_128 = arith.constant 0 : index
    %91 = vector.load %arg9[%c2_126, %c3_127, %c0_128] : memref<20x20x16xf32, #tpu.memory_space<vmem>>, vector<16x16x16xf32>
    %92 = arith.maximumf %90, %91 : vector<16x16x16xf32>
    %c2_129 = arith.constant 2 : index
    %c4_130 = arith.constant 4 : index
    %c0_131 = arith.constant 0 : index
    %93 = vector.load %arg9[%c2_129, %c4_130, %c0_131] : memref<20x20x16xf32, #tpu.memory_space<vmem>>, vector<16x16x16xf32>
    %94 = arith.maximumf %92, %93 : vector<16x16x16xf32>
    %95 = vector.shape_cast %94 : vector<16x16x16xf32> to vector<256x16xf32>
    %c3_132 = arith.constant 3 : index
    %c0_133 = arith.constant 0 : index
    %c0_134 = arith.constant 0 : index
    %96 = vector.load %arg5[%c3_132, %c0_133, %c0_134] : memref<4x16x32xf32, #tpu.memory_space<vmem>>, vector<1x16x32xf32>
    %97 = vector.shape_cast %96 : vector<1x16x32xf32> to vector<16x32xf32>
    %cst_135 = arith.constant dense<0.000000e+00> : vector<256x32xf32>
    %98 = tpu.matmul %95, %97, %cst_135 {dimension_numbers = #tpu.dot_dimension_numbers<[1], [0], [0], [1], [0, 0, 1, 1], [], []>} : vector<256x16xf32>, vector<16x32xf32>, vector<256x32xf32> -> vector<256x32xf32>
    %99 = arith.addf %74, %98 : vector<256x32xf32>
    %c0_136 = arith.constant 0 : index
    %c0_137 = arith.constant 0 : index
    %100 = vector.load %arg6[%c0_136, %c0_137] : memref<1x32xf32, #tpu.memory_space<vmem>>, vector<1x32xf32>
    %101 = vector.broadcast %100 : vector<1x32xf32> to vector<256x32xf32>
    %102 = arith.mulf %99, %101 : vector<256x32xf32>
    %c0_138 = arith.constant 0 : index
    %c0_139 = arith.constant 0 : index
    %103 = vector.load %arg7[%c0_138, %c0_139] : memref<1x32xf32, #tpu.memory_space<vmem>>, vector<1x32xf32>
    %104 = vector.broadcast %103 : vector<1x32xf32> to vector<256x32xf32>
    %105 = arith.addf %102, %104 : vector<256x32xf32>
    %cst_140 = arith.constant 0.000000e+00 : f32
    %106 = vector.broadcast %cst_140 : f32 to vector<256x32xf32>
    %107 = arith.subf %106, %105 : vector<256x32xf32>
    %108 = math.exp %107 : vector<256x32xf32>
    %cst_141 = arith.constant 1.000000e+00 : f32
    %109 = vector.broadcast %cst_141 : f32 to vector<256x32xf32>
    %110 = arith.addf %109, %108 : vector<256x32xf32>
    %cst_142 = arith.constant 1.000000e+00 : f32
    %111 = vector.broadcast %cst_142 : f32 to vector<256x32xf32>
    %112 = arith.divf %111, %110 : vector<256x32xf32>
    %113 = arith.mulf %105, %112 : vector<256x32xf32>
    %114 = vector.shape_cast %113 : vector<256x32xf32> to vector<16x16x32xf32>
    %c0_143 = arith.constant 0 : index
    %c0_144 = arith.constant 0 : index
    %c0_145 = arith.constant 0 : index
    %c0_146 = arith.constant 0 : index
    %115 = vector.load %arg8[%c0_143, %c0_144, %c0_145, %c0_146] : memref<1x16x16x32xf32, #tpu.memory_space<vmem>>, vector<1x16x16x32xf32>
    %116 = vector.shape_cast %115 : vector<1x16x16x32xf32> to vector<16x16x32xf32>
    %117 = vector.shape_cast %114 : vector<16x16x32xf32> to vector<1x16x16x32xf32>
    tpu.vector_store %arg8[%c0_143, %c0_144, %c0_145, %c0_146], %117 {strides = array<i32>} : memref<1x16x16x32xf32, #tpu.memory_space<vmem>>, vector<1x16x16x32xf32>,
    return
  }
  func.func @transform_0(%arg0: i32) -> (i32, i32, i32, i32) {
    %c0_i32 = arith.constant 0 : i32
    %c0_i32_0 = arith.constant 0 : i32
    %c0_i32_1 = arith.constant 0 : i32
    %c0_i32_2 = arith.constant 0 : i32
    return %arg0, %c0_i32, %c0_i32_0, %c0_i32_1 : i32, i32, i32, i32
  }
  func.func @transform_1(%arg0: i32) -> (i32, i32) {
    %c0_i32 = arith.constant 0 : i32
    %c0_i32_0 = arith.constant 0 : i32
    %c0_i32_1 = arith.constant 0 : i32
    return %c0_i32, %c0_i32_0 : i32, i32
  }
  func.func @transform_2(%arg0: i32) -> (i32, i32) {
    %c0_i32 = arith.constant 0 : i32
    %c0_i32_0 = arith.constant 0 : i32
    %c0_i32_1 = arith.constant 0 : i32
    return %c0_i32, %c0_i32_0 : i32, i32
  }
  func.func @transform_3(%arg0: i32) -> (i32, i32) {
    %c0_i32 = arith.constant 0 : i32
    %c0_i32_0 = arith.constant 0 : i32
    %c0_i32_1 = arith.constant 0 : i32
    return %c0_i32, %c0_i32_0 : i32, i32
  }
  func.func @transform_4(%arg0: i32) -> (i32, i32, i32) {
    %c0_i32 = arith.constant 0 : i32
    %c0_i32_0 = arith.constant 0 : i32
    %c0_i32_1 = arith.constant 0 : i32
    %c0_i32_2 = arith.constant 0 : i32
    return %c0_i32, %c0_i32_0, %c0_i32_1 : i32, i32, i32
  }
  func.func @transform_5(%arg0: i32) -> (i32, i32) {
    %c0_i32 = arith.constant 0 : i32
    %c0_i32_0 = arith.constant 0 : i32
    %c0_i32_1 = arith.constant 0 : i32
    return %c0_i32, %c0_i32_0 : i32, i32
  }
  func.func @transform_6(%arg0: i32) -> (i32, i32) {
    %c0_i32 = arith.constant 0 : i32
    %c0_i32_0 = arith.constant 0 : i32
    %c0_i32_1 = arith.constant 0 : i32
    return %c0_i32, %c0_i32_0 : i32, i32
  }
  func.func @transform_7(%arg0: i32) -> (i32, i32, i32, i32) {
    %c0_i32 = arith.constant 0 : i32
    %c0_i32_0 = arith.constant 0 : i32
    %c0_i32_1 = arith.constant 0 : i32
    %c0_i32_2 = arith.constant 0 : i32
    return %arg0, %c0_i32, %c0_i32_0, %c0_i32_1 : i32, i32, i32, i32
  }
}

</mosaic_0001>

<llo_original>
// kernel: tpu_custom_call.1
$region0: #{tpu_custom_call.1}
  #allocation0 [shape = 'u32[]', space=smem, size = 0x4, offset = 0x4, fixed_abs, tag = 'smem constant byte address 0x4 - core index']
  #allocation1 [shape = 'u32[144,128]{1,0:T(1,128)}', space=vmem, size = 0x12000, scoped, tag = 'internal scratch']
  #allocation2 [shape = 'f32[20,20,16]{2,1,0:T(8,128)}', space=vmem, size = 0x3c000, scoped, tag = 'scratch operand']
  %s0 = inlined_call_operand.hbm [shape: f32[2,16,16,32], index: 0, kind: input, shape index: {}]
  %s1 = inlined_call_operand.vmem [shape: f32[32,16], index: 1, kind: input, shape index: {}]
  %s2 = inlined_call_operand.vmem [shape: f32[1,16], index: 2, kind: input, shape index: {}]
  %s3 = inlined_call_operand.vmem [shape: f32[1,16], index: 3, kind: input, shape index: {}]
  %s4 = inlined_call_operand.hbm [shape: f32[4,16,32], index: 4, kind: input, shape index: {}]
  %s5 = inlined_call_operand.vmem [shape: f32[1,32], index: 5, kind: input, shape index: {}]
  %s6 = inlined_call_operand.vmem [shape: f32[1,32], index: 6, kind: input, shape index: {}]
  %s7 = inlined_call_operand.hbm [shape: f32[2,16,16,32], index: 7, kind: output, shape index: {}]
  %s8 = sld [smem:[#allocation0]]
  $region69: #{tpu_custom_call.1} parent=0
    _
  %s10 = ssub.s32 1, %s8
  %s11 = scalar_select 0, %s10, %s8
  $region1: #{tpu_custom_call.1} parent=0
    #allocation3 [shape = 'u8[262144]{0}', space=vmem, size = 0x40000, scoped, tag = 'input window, operand 0']
    #allocation4 [shape = 's32[2]{0}', space=sflag, size = 0x8, scoped, tag = 'scoped memory for tpu_custom_call.1']
    #allocation5 [shape = 's32[2]{0}', space=sflag, size = 0x8, scoped, tag = 'scoped memory for tpu_custom_call.1']
    #allocation6 [shape = 'u8[32768]{0}', space=vmem, size = 0x8000, scoped, tag = 'input window, operand 4, single buffered']
    #allocation7 [shape = 's32[1]{0}', space=sflag, size = 0x4, scoped, tag = 'scoped memory for tpu_custom_call.1']
    #allocation8 [shape = 'u8[262144]{0}', space=vmem, size = 0x40000, scoped, tag = 'output window, operand 0']
    %12 = vsyncpa [#allocation4], 0
    %s13 = scalar_lea.sflag [#allocation4], 1
    %14 = vsyncpa %s13, 0
    %15 = vsyncpa [#allocation7], 0
    %16 = vsyncpa [#allocation5], 0
    %s17 = scalar_lea.sflag [#allocation5], 1
    %18 = vsyncpa %s17, 0
    loop: start=0, step=1, limit=4
    $region2: #{tpu_custom_call.1} parent=1 // loop_pre_header
      _
    $region3: #{tpu_custom_call.1} parent=1 // loop_header
      %s20 = sphi 0, %s24
      %p21 = scmp.ge.s32.totalorder %s20, 4
      %s30 = sphi 0, %s32
      %s33 = sphi 0, %s30
      %s34 = sphi 0, %s33
      %s50 = sphi 0, %s34
      %s54 = sphi 0, %s54
      %s56 = sphi 0, %s54
      %s57 = sphi 0, %s56
      %s71 = sphi 0, %s57
      %s75 = sphi 0, %s75
      %s77 = sphi 0, %s75
      %s78 = sphi 0, %s77
      %s92 = sphi 0, %s78
      %s96 = sphi 0, %s96
      %s98 = sphi 0, %s96
      %s99 = sphi 0, %s98
      %s113 = sphi 0, %s99
      %s117 = sphi 0, %s117
      %s119 = sphi 0, %s117
      %s120 = sphi 0, %s119
      %s134 = sphi 0, %s120
      %s138 = sphi 0, %s138
      %s140 = sphi 0, %s138
      %s141 = sphi 0, %s140
      %s155 = sphi 0, %s141
      %s159 = sphi 0, %s159
      %s161 = sphi 0, %s159
      %s162 = sphi 0, %s161
      %s176 = sphi 0, %s162
      %s182 = sphi 0, %s184
      %s185 = sphi 0, %s182
      %s186 = sphi 0, %s185
      %s202 = sphi 0, %s186
    $region4: #{tpu_custom_call.1} parent=1 // loop_header_branch
      %23 = sbr.rel (%p21) target = $region8
    $region5: #{tpu_custom_call.1} parent=1 // loop_body
      %s25 = ssub.s32 %s20, 1
      %s26 = ssub.s32 %s20, 2
      %s27 = sadd.s32 %s20, 1
      %s28 = ssub.s32 %s20, %s27
      %p29 = scmp.eq.s32.totalorder %s28, 0
      %s31 = sadd.s32 %s30, 1
      %s32 = scalar_select %p29, %s30, %s31
      %p35 = pneg %p29
      %p36 = scmp.eq.s32.totalorder %s20, 1
      %p37 = por %p35, %p36
      %p38 = scmp.ne.s32.totalorder %s30, %s33
      %p39 = scmp.eq.s32.totalorder %s20, 0
      %p40 = por %p38, %p39
      %p41 = scmp.ne.s32.totalorder %s30, %s33
      %p42 = scmp.eq.s32.totalorder %s25, 1
      %p43 = por %p41, %p42
      %p44 = scmp.ne.s32.totalorder %s33, %s34
      %p45 = scmp.eq.s32.totalorder %s25, 0
      %p46 = por %p44, %p45
      %p47 = scmp.ne.s32.totalorder %s33, %s34
      %p48 = scmp.eq.s32.totalorder %s26, 1
      %p49 = por %p47, %p48
      %p51 = scmp.ne.s32.totalorder %s34, %s50
      %p52 = scmp.eq.s32.totalorder %s26, 0
      %p53 = por %p51, %p52
      %s55 = sadd.s32 %s54, 1
      %p58 = scmp.eq.s32.totalorder %s20, 1
      %p59 = scmp.ne.s32.totalorder %s54, %s56
      %p60 = scmp.eq.s32.totalorder %s20, 0
      %p61 = por %p59, %p60
      %p62 = scmp.ne.s32.totalorder %s54, %s56
      %p63 = scmp.eq.s32.totalorder %s25, 1
      %p64 = por %p62, %p63
      %p65 = scmp.ne.s32.totalorder %s56, %s57
      %p66 = scmp.eq.s32.totalorder %s25, 0
      %p67 = por %p65, %p66
      %p68 = scmp.ne.s32.totalorder %s56, %s57
      %p69 = scmp.eq.s32.totalorder %s26, 1
      %p70 = por %p68, %p69
      %p72 = scmp.ne.s32.totalorder %s57, %s71
      %p73 = scmp.eq.s32.totalorder %s26, 0
      %p74 = por %p72, %p73
      %s76 = sadd.s32 %s75, 1
      %p79 = scmp.eq.s32.totalorder %s20, 1
      %p80 = scmp.ne.s32.totalorder %s75, %s77
      %p81 = scmp.eq.s32.totalorder %s20, 0
      %p82 = por %p80, %p81
      %p83 = scmp.ne.s32.totalorder %s75, %s77
      %p84 = scmp.eq.s32.totalorder %s25, 1
      %p85 = por %p83, %p84
      %p86 = scmp.ne.s32.totalorder %s77, %s78
      %p87 = scmp.eq.s32.totalorder %s25, 0
      %p88 = por %p86, %p87
      %p89 = scmp.ne.s32.totalorder %s77, %s78
      %p90 = scmp.eq.s32.totalorder %s26, 1
      %p91 = por %p89, %p90
      %p93 = scmp.ne.s32.totalorder %s78, %s92
      %p94 = scmp.eq.s32.totalorder %s26, 0
      %p95 = por %p93, %p94
      %s97 = sadd.s32 %s96, 1
      %p100 = scmp.eq.s32.totalorder %s20, 1
      %p101 = scmp.ne.s32.totalorder %s96, %s98
      %p102 = scmp.eq.s32.totalorder %s20, 0
      %p103 = por %p101, %p102
      %p104 = scmp.ne.s32.totalorder %s96, %s98
      %p105 = scmp.eq.s32.totalorder %s25, 1
      %p106 = por %p104, %p105
      %p107 = scmp.ne.s32.totalorder %s98, %s99
      %p108 = scmp.eq.s32.totalorder %s25, 0
      %p109 = por %p107, %p108
      %p110 = scmp.ne.s32.totalorder %s98, %s99
      %p111 = scmp.eq.s32.totalorder %s26, 1
      %p112 = por %p110, %p111
      %p114 = scmp.ne.s32.totalorder %s99, %s113
      %p115 = scmp.eq.s32.totalorder %s26, 0
      %p116 = por %p114, %p115
      %s118 = sadd.s32 %s117, 1
      %p121 = scmp.eq.s32.totalorder %s20, 1
      %p122 = scmp.ne.s32.totalorder %s117, %s119
      %p123 = scmp.eq.s32.totalorder %s20, 0
      %p124 = por %p122, %p123
      %p125 = scmp.ne.s32.totalorder %s117, %s119
      %p126 = scmp.eq.s32.totalorder %s25, 1
      %p127 = por %p125, %p126
      %p128 = scmp.ne.s32.totalorder %s119, %s120
      %p129 = scmp.eq.s32.totalorder %s25, 0
      %p130 = por %p128, %p129
      %p131 = scmp.ne.s32.totalorder %s119, %s120
      %p132 = scmp.eq.s32.totalorder %s26, 1
      %p133 = por %p131, %p132
      %p135 = scmp.ne.s32.totalorder %s120, %s134
      %p136 = scmp.eq.s32.totalorder %s26, 0
      %p137 = por %p135, %p136
      %s139 = sadd.s32 %s138, 1
      %p142 = scmp.eq.s32.totalorder %s20, 1
      %p143 = scmp.ne.s32.totalorder %s138, %s140
      %p144 = scmp.eq.s32.totalorder %s20, 0
      %p145 = por %p143, %p144
      %p146 = scmp.ne.s32.totalorder %s138, %s140
      %p147 = scmp.eq.s32.totalorder %s25, 1
      %p148 = por %p146, %p147
      %p149 = scmp.ne.s32.totalorder %s140, %s141
      %p150 = scmp.eq.s32.totalorder %s25, 0
      %p151 = por %p149, %p150
      %p152 = scmp.ne.s32.totalorder %s140, %s141
      %p153 = scmp.eq.s32.totalorder %s26, 1
      %p154 = por %p152, %p153
      %p156 = scmp.ne.s32.totalorder %s141, %s155
      %p157 = scmp.eq.s32.totalorder %s26, 0
      %p158 = por %p156, %p157
      %s160 = sadd.s32 %s159, 1
      %p163 = scmp.eq.s32.totalorder %s20, 1
      %p164 = scmp.ne.s32.totalorder %s159, %s161
      %p165 = scmp.eq.s32.totalorder %s20, 0
      %p166 = por %p164, %p165
      %p167 = scmp.ne.s32.totalorder %s159, %s161
      %p168 = scmp.eq.s32.totalorder %s25, 1
      %p169 = por %p167, %p168
      %p170 = scmp.ne.s32.totalorder %s161, %s162
      %p171 = scmp.eq.s32.totalorder %s25, 0
      %p172 = por %p170, %p171
      %p173 = scmp.ne.s32.totalorder %s161, %s162
      %p174 = scmp.eq.s32.totalorder %s26, 1
      %p175 = por %p173, %p174
      %p177 = scmp.ne.s32.totalorder %s162, %s176
      %p178 = scmp.eq.s32.totalorder %s26, 0
      %p179 = por %p177, %p178
      %s180 = ssub.s32 %s20, %s27
      %p181 = scmp.eq.s32.totalorder %s180, 0
      %s183 = sadd.s32 %s182, 1
      %s184 = scalar_select %p181, %s182, %s183
      %p187 = pneg %p181
      %p188 = scmp.eq.s32.totalorder %s20, 1
      %p189 = por %p187, %p188
      %p190 = scmp.ne.s32.totalorder %s182, %s185
      %p191 = scmp.eq.s32.totalorder %s20, 0
      %p192 = por %p190, %p191
      %p193 = scmp.ne.s32.totalorder %s182, %s185
      %p194 = scmp.eq.s32.totalorder %s25, 1
      %p195 = por %p193, %p194
      %p196 = scmp.ne.s32.totalorder %s185, %s186
      %p197 = scmp.eq.s32.totalorder %s25, 0
      %p198 = por %p196, %p197
      %p199 = scmp.ne.s32.totalorder %s185, %s186
      %p200 = scmp.eq.s32.totalorder %s26, 1
      %p201 = por %p199, %p200
      %p203 = scmp.ne.s32.totalorder %s186, %s202
      %p204 = scmp.eq.s32.totalorder %s26, 0
      %p205 = por %p203, %p204
      %p206 = scmp.le.s32.totalorder 1, %s20
      %p207 = scmp.lt.s32.totalorder %s20, 3
      %p208 = pnand %p206, %p207
      %p209 = pneg %p208
      // Predicated region
      $region9: #{tpu_custom_call.1} parent=5 // pred_check
        _
      $region10: #{tpu_custom_call.1} parent=5 // pred_check_branch
        %211 = sbr.rel (%p208) target = $region12
      $region11: #{tpu_custom_call.1} parent=5 // pred_region
        %s212 = ssub.s32 %s20, 1
        // Predicated region
        $region13: #{tpu_custom_call.1} parent=11 // pred_check
          %p213 = pneg %p67
        $region14: #{tpu_custom_call.1} parent=11 // pred_check_branch
          %215 = sbr.rel (%p213) target = $region16
        $region15: #{tpu_custom_call.1} parent=11 // pred_region
          _
        $region16: #{tpu_custom_call.1} parent=11 // pred_fallthru
          _
        // Predicated region
        $region17: #{tpu_custom_call.1} parent=11 // pred_check
          %p216 = pneg %p88
        $region18: #{tpu_custom_call.1} parent=11 // pred_check_branch
          %218 = sbr.rel (%p216) target = $region20
        $region19: #{tpu_custom_call.1} parent=11 // pred_region
          _
        $region20: #{tpu_custom_call.1} parent=11 // pred_fallthru
          _
        // Predicated region
        $region21: #{tpu_custom_call.1} parent=11 // pred_check
          %p219 = pneg %p109
        $region22: #{tpu_custom_call.1} parent=11 // pred_check_branch
          %221 = sbr.rel (%p219) target = $region24
        $region23: #{tpu_custom_call.1} parent=11 // pred_region
          _
        $region24: #{tpu_custom_call.1} parent=11 // pred_fallthru
          _
        // Predicated region
        $region25: #{tpu_custom_call.1} parent=11 // pred_check
          %p222 = pneg %p130
        $region26: #{tpu_custom_call.1} parent=11 // pred_check_branch
          %224 = sbr.rel (%p222) target = $region28
        $region27: #{tpu_custom_call.1} parent=11 // pred_region
          %s226 = ssub.s32 1024, 1024
          %227 = vsyncadd [#allocation7], %s226
          %s228 = sshll.u32 [#allocation6], 4
          %s229 = int_to_ptr.vmem [resolvable:$true] %s228
          %234 = dma.hbm_to_vmem [thread:$0]  %s4, 1024, %s229, [#allocation7], 128, 128, 8
        $region28: #{tpu_custom_call.1} parent=11 // pred_fallthru
          _
        // Predicated region
        $region29: #{tpu_custom_call.1} parent=11 // pred_check
          %p235 = pneg %p151
        $region30: #{tpu_custom_call.1} parent=11 // pred_check_branch
          %237 = sbr.rel (%p235) target = $region32
        $region31: #{tpu_custom_call.1} parent=11 // pred_region
          _
        $region32: #{tpu_custom_call.1} parent=11 // pred_fallthru
          _
        // Predicated region
        $region33: #{tpu_custom_call.1} parent=11 // pred_check
          %p238 = pneg %p172
        $region34: #{tpu_custom_call.1} parent=11 // pred_check_branch
          %240 = sbr.rel (%p238) target = $region36
        $region35: #{tpu_custom_call.1} parent=11 // pred_region
          _
        $region36: #{tpu_custom_call.1} parent=11 // pred_fallthru
          _
      $region12: #{tpu_custom_call.1} parent=5 // pred_fallthru
        _
      %p241 = scmp.lt.s32.totalorder %s20, 2
      // Predicated region
      $region37: #{tpu_custom_call.1} parent=5 // pred_check
        %p242 = pneg %p241
      $region38: #{tpu_custom_call.1} parent=5 // pred_check_branch
        %244 = sbr.rel (%p242) target = $region40
      $region39: #{tpu_custom_call.1} parent=5 // pred_region
        // Predicated region
        $region41: #{tpu_custom_call.1} parent=39 // pred_check
          %p245 = pneg %p40
        $region42: #{tpu_custom_call.1} parent=39 // pred_check_branch
          %247 = sbr.rel (%p245) target = $region44
        $region43: #{tpu_custom_call.1} parent=39 // pred_region
          %s248 = sand.u32 %s30, 1
          %s249 = scalar_lea.sflag [#allocation4], %s248
          %s250 = sand.u32 %s30, 1
          %s251 = smul.addr %s250, 256
          %s252 = scalar_lea.vmem [#allocation3], %s251
          %s254 = ssub.s32 4096, 4096
          %255 = vsyncadd %s249, %s254
          %s256 = smul.addr %s20, 32
          %s257 = smul.addr %s256, 128
          %s258 = scalar_lea.hbm %s0, %s257
          %s259 = sshll.u32 %s252, 4
          %s260 = int_to_ptr.vmem [resolvable:$true] %s259
          %265 = dma.hbm_to_vmem [thread:$0]  %s258, 4096, %s260, %s249, 128, 128, 8
        $region44: #{tpu_custom_call.1} parent=39 // pred_fallthru
          _
      $region40: #{tpu_custom_call.1} parent=5 // pred_fallthru
        _
      %p266 = scmp.le.s32.totalorder 1, %s20
      %p267 = scmp.lt.s32.totalorder %s20, 3
      %p268 = pnand %p266, %p267
      %p269 = pneg %p268
      // Predicated region
      $region45: #{tpu_custom_call.1} parent=5 // pred_check
        _
      $region46: #{tpu_custom_call.1} parent=5 // pred_check_branch
        %271 = sbr.rel (%p268) target = $region48
      $region47: #{tpu_custom_call.1} parent=5 // pred_region
        %s272 = ssub.s32 %s20, 1
        %s273 = sand.u32 %s33, 1
        %s274 = scalar_lea.sflag [#allocation4], %s273
        %s275 = sand.u32 %s33, 1
        %s276 = smul.addr %s275, 256
        %s277 = scalar_lea.vmem [#allocation3], %s276
        // Predicated region
        $region49: #{tpu_custom_call.1} parent=47 // pred_check
          %p278 = pneg %p46
        $region50: #{tpu_custom_call.1} parent=47 // pred_check_branch
          %280 = sbr.rel (%p278) target = $region52
        $region51: #{tpu_custom_call.1} parent=47 // pred_region
          %281 = dma.done %s274, 4096
        $region52: #{tpu_custom_call.1} parent=47 // pred_fallthru
          _
        // Predicated region
        $region53: #{tpu_custom_call.1} parent=47 // pred_check
          %p282 = pneg %p130
        $region54: #{tpu_custom_call.1} parent=47 // pred_check_branch
          %284 = sbr.rel (%p282) target = $region56
        $region55: #{tpu_custom_call.1} parent=47 // pred_region
          %285 = dma.done [#allocation7], 1024
        $region56: #{tpu_custom_call.1} parent=47 // pred_fallthru
          _
        %s286 = sand.u32 %s33, 1
        %s287 = scalar_lea.sflag [#allocation4], %s286
        %s288 = sand.u32 %s33, 1
        %s289 = smul.addr %s288, 256
        %s290 = scalar_lea.vmem [#allocation3], %s289
        %p291 = pneg %p46
        %p292 = pneg %p43
        %p293 = pneg %p67
        %p294 = pneg %p64
        %p295 = pneg %p88
        %p296 = pneg %p85
        %p297 = pneg %p109
        %p298 = pneg %p106
        %p299 = pneg %p130
        %p300 = pneg %p127
        %p301 = pneg %p151
        %p302 = pneg %p148
        %p303 = pneg %p172
        %p304 = pneg %p169
        %p305 = pneg %p198
        %p306 = pneg %p195
        %s307 = sand.u32 %s185, 1
        %s308 = scalar_lea.sflag [#allocation5], %s307
        %s309 = sand.u32 %s185, 1
        %s310 = smul.addr %s309, 256
        %s311 = scalar_lea.vmem [#allocation8], %s310
        %v312 = vld [vmem:[%s277] sm:$0xff]
        %v313 = vld [vmem:[%s277 + $0x8] sm:$0xff]
        %v314 = vld [vmem:[%s277 + $0x10] sm:$0xff]
        %v315 = vld [vmem:[%s277 + $0x18] sm:$0xff]
        %v316 = vld [vmem:[%s277 + $0x20] sm:$0xff]
        %v317 = vld [vmem:[%s277 + $0x28] sm:$0xff]
        %v318 = vld [vmem:[%s277 + $0x30] sm:$0xff]
        %v319 = vld [vmem:[%s277 + $0x38] sm:$0xff]
        %v320 = vld [vmem:[%s277 + $0x40] sm:$0xff]
        %v321 = vld [vmem:[%s277 + $0x48] sm:$0xff]
        %v322 = vld [vmem:[%s277 + $0x50] sm:$0xff]
        %v323 = vld [vmem:[%s277 + $0x58] sm:$0xff]
        %v324 = vld [vmem:[%s277 + $0x60] sm:$0xff]
        %v325 = vld [vmem:[%s277 + $0x68] sm:$0xff]
        %v326 = vld [vmem:[%s277 + $0x70] sm:$0xff]
        %v327 = vld [vmem:[%s277 + $0x78] sm:$0xff]
        %v328 = vld [vmem:[%s277 + $0x80] sm:$0xff]
        %v329 = vld [vmem:[%s277 + $0x88] sm:$0xff]
        %v330 = vld [vmem:[%s277 + $0x90] sm:$0xff]
        %v331 = vld [vmem:[%s277 + $0x98] sm:$0xff]
        %v332 = vld [vmem:[%s277 + $0xa0] sm:$0xff]
        %v333 = vld [vmem:[%s277 + $0xa8] sm:$0xff]
        %v334 = vld [vmem:[%s277 + $0xb0] sm:$0xff]
        %v335 = vld [vmem:[%s277 + $0xb8] sm:$0xff]
        %v336 = vld [vmem:[%s277 + $0xc0] sm:$0xff]
        %v337 = vld [vmem:[%s277 + $0xc8] sm:$0xff]
        %v338 = vld [vmem:[%s277 + $0xd0] sm:$0xff]
        %v339 = vld [vmem:[%s277 + $0xd8] sm:$0xff]
        %v340 = vld [vmem:[%s277 + $0xe0] sm:$0xff]
        %v341 = vld [vmem:[%s277 + $0xe8] sm:$0xff]
        %v342 = vld [vmem:[%s277 + $0xf0] sm:$0xff]
        %v343 = vld [vmem:[%s277 + $0xf8] sm:$0xff]
        %v344 = vld [vmem:[%s1] sm:$0xff]
        %v345 = vld [vmem:[%s1 + $0x8] sm:$0xff]
        %v346 = vld [vmem:[%s1 + $0x10] sm:$0xff]
        %v347 = vld [vmem:[%s1 + $0x18] sm:$0xff]
        %vm348 = vcmask 261120
        %v350 = vsel %vm348, %v312, 0
        %v353 = vsel %vm348, %v313, 0
        %v356 = vsel %vm348, %v314, 0
        %v359 = vsel %vm348, %v315, 0
        %v362 = vsel %vm348, %v316, 0
        %v365 = vsel %vm348, %v317, 0
        %v368 = vsel %vm348, %v318, 0
        %v371 = vsel %vm348, %v319, 0
        %v374 = vsel %vm348, %v320, 0
        %v377 = vsel %vm348, %v321, 0
        %v380 = vsel %vm348, %v322, 0
        %v383 = vsel %vm348, %v323, 0
        %v386 = vsel %vm348, %v324, 0
        %v389 = vsel %vm348, %v325, 0
        %v392 = vsel %vm348, %v326, 0
        %v395 = vsel %vm348, %v327, 0
        %v398 = vsel %vm348, %v328, 0
        %v401 = vsel %vm348, %v329, 0
        %v404 = vsel %vm348, %v330, 0
        %v407 = vsel %vm348, %v331, 0
        %v410 = vsel %vm348, %v332, 0
        %v413 = vsel %vm348, %v333, 0
        %v416 = vsel %vm348, %v334, 0
        %v419 = vsel %vm348, %v335, 0
        %v422 = vsel %vm348, %v336, 0
        %v425 = vsel %vm348, %v337, 0
        %v428 = vsel %vm348, %v338, 0
        %v431 = vsel %vm348, %v339, 0
        %v434 = vsel %vm348, %v340, 0
        %v437 = vsel %vm348, %v341, 0
        %v440 = vsel %vm348, %v342, 0
        %v443 = vsel %vm348, %v343, 0
        %445 = vmatprep.subr.mxu0 0.0
        %446 = vmatpush1.msra.mxu0 %v344
        %447 = vmatprep.subr.mxu0 0.0
        %448 = vmatpush1.msra.mxu0 %v345
        %449 = vmatprep.subr.mxu0 0.0
        %450 = vmatpush1.msra.mxu0 %v346
        %451 = vmatprep.subr.mxu0 0.0
        %452 = vmatpush1.msra.mxu0 %v347
        %453 = vmatprep.subr.mxu0 0.0
        %454 = vmatpush1.msra.mxu0 0.0
        %455 = vmatprep.subr.mxu0 0.0
        %456 = vmatpush1.msra.mxu0 0.0
        %457 = vmatprep.subr.mxu0 0.0
        %458 = vmatpush1.msra.mxu0 0.0
        %459 = vmatprep.subr.mxu0 0.0
        %460 = vmatpush1.msra.mxu0 0.0
        %461 = vmatprep.subr.mxu0 0.0
        %462 = vmatpush1.msra.mxu0 0.0
        %463 = vmatprep.subr.mxu0 0.0
        %464 = vmatpush1.msra.mxu0 0.0
        %465 = vmatprep.subr.mxu0 0.0
        %466 = vmatpush1.msra.mxu0 0.0
        %467 = vmatprep.subr.mxu0 0.0
        %468 = vmatpush1.msra.mxu0 0.0
        %469 = vmatprep.subr.mxu0 0.0
        %470 = vmatpush1.msra.mxu0 0.0
        %471 = vmatprep.subr.mxu0 0.0
        %472 = vmatpush1.msra.mxu0 0.0
        %473 = vmatprep.subr.mxu0 0.0
        %474 = vmatpush1.msra.mxu0 0.0
        %475 = vmatprep.subr.mxu0 0.0
        %476 = vmatpush1.msra.mxu0 0.0
        %477 = vmatprep.subr.mxu0 0.0
        %478 = vmatpush1.msra.mxu0 0.0
        %479 = vmatprep.subr.mxu0 0.0
        %480 = vmatpush1.msra.mxu0 0.0
        %481 = vmatprep.subr.mxu0 0.0
        %482 = vmatpush1.msra.mxu0 0.0
        %483 = vmatprep.subr.mxu0 0.0
        %484 = vmatpush1.msra.mxu0 0.0
        %485 = vmatprep.subr.mxu0 0.0
        %486 = vmatpush1.msra.mxu0 0.0
        %487 = vmatprep.subr.mxu0 0.0
        %488 = vmatpush1.msra.mxu0 0.0
        %489 = vmatprep.subr.mxu0 0.0
        %490 = vmatpush1.msra.mxu0 0.0
        %491 = vmatprep.subr.mxu0 0.0
        %492 = vmatpush1.msra.mxu0 0.0
        %493 = vmatprep.subr.mxu0 0.0
        %494 = vmatpush1.msra.mxu0 0.0
        %495 = vmatprep.subr.mxu0 0.0
        %496 = vmatpush1.msra.mxu0 0.0
        %497 = vmatprep.subr.mxu0 0.0
        %498 = vmatpush1.msra.mxu0 0.0
        %499 = vmatprep.subr.mxu0 0.0
        %500 = vmatpush1.msra.mxu0 0.0
        %501 = vmatprep.subr.mxu0 0.0
        %502 = vmatpush1.msra.mxu0 0.0
        %503 = vmatprep.subr.mxu0 0.0
        %504 = vmatpush1.msra.mxu0 0.0
        %505 = vmatprep.subr.mxu0 0.0
        %506 = vmatpush1.msra.mxu0 0.0
        %507 = vmatprep.subr.mxu0 0.0
        %508 = vmatpush1.msra.mxu0 0.0
        %509 = vmatprep.mubr.f32.mxu0 0.0
        %510 = vmatmul.mubr.f32.gmra.mrb[0].mxu0 %v350
        %v511 = vpop.f32.mrb[0].mxu0
        %v512 = vadd.f32 0.0, %v511
        %v513 = vpop.f32.mrb[0].mxu0
        %514 = vmatprep.mubr.f32.mxu0 0.0
        %515 = vmatmul.mubr.f32.gmra.mrb[0].mxu0 %v353
        %v516 = vpop.f32.mrb[0].mxu0
        %v517 = vadd.f32 0.0, %v516
        %v518 = vpop.f32.mrb[0].mxu0
        %519 = vmatprep.mubr.f32.mxu0 0.0
        %520 = vmatmul.mubr.f32.gmra.mrb[0].mxu0 %v356
        %v521 = vpop.f32.mrb[0].mxu0
        %v522 = vadd.f32 0.0, %v521
        %v523 = vpop.f32.mrb[0].mxu0
        %524 = vmatprep.mubr.f32.mxu0 0.0
        %525 = vmatmul.mubr.f32.gmra.mrb[0].mxu0 %v359
        %v526 = vpop.f32.mrb[0].mxu0
        %v527 = vadd.f32 0.0, %v526
        %v528 = vpop.f32.mrb[0].mxu0
        %529 = vmatprep.mubr.f32.mxu0 0.0
        %530 = vmatmul.mubr.f32.gmra.mrb[0].mxu0 %v362
        %v531 = vpop.f32.mrb[0].mxu0
        %v532 = vadd.f32 0.0, %v531
        %v533 = vpop.f32.mrb[0].mxu0
        %534 = vmatprep.mubr.f32.mxu0 0.0
        %535 = vmatmul.mubr.f32.gmra.mrb[0].mxu0 %v365
        %v536 = vpop.f32.mrb[0].mxu0
        %v537 = vadd.f32 0.0, %v536
        %v538 = vpop.f32.mrb[0].mxu0
        %539 = vmatprep.mubr.f32.mxu0 0.0
        %540 = vmatmul.mubr.f32.gmra.mrb[0].mxu0 %v368
        %v541 = vpop.f32.mrb[0].mxu0
        %v542 = vadd.f32 0.0, %v541
        %v543 = vpop.f32.mrb[0].mxu0
        %544 = vmatprep.mubr.f32.mxu0 0.0
        %545 = vmatmul.mubr.f32.gmra.mrb[0].mxu0 %v371
        %v546 = vpop.f32.mrb[0].mxu0
        %v547 = vadd.f32 0.0, %v546
        %v548 = vpop.f32.mrb[0].mxu0
        %549 = vmatprep.mubr.f32.mxu0 0.0
        %550 = vmatmul.mubr.f32.gmra.mrb[0].mxu0 %v374
        %v551 = vpop.f32.mrb[0].mxu0
        %v552 = vadd.f32 0.0, %v551
        %v553 = vpop.f32.mrb[0].mxu0
        %554 = vmatprep.mubr.f32.mxu0 0.0
        %555 = vmatmul.mubr.f32.gmra.mrb[0].mxu0 %v377
        %v556 = vpop.f32.mrb[0].mxu0
        %v557 = vadd.f32 0.0, %v556
        %v558 = vpop.f32.mrb[0].mxu0
        %559 = vmatprep.mubr.f32.mxu0 0.0
        %560 = vmatmul.mubr.f32.gmra.mrb[0].mxu0 %v380
        %v561 = vpop.f32.mrb[0].mxu0
        %v562 = vadd.f32 0.0, %v561
        %v563 = vpop.f32.mrb[0].mxu0
        %564 = vmatprep.mubr.f32.mxu0 0.0
        %565 = vmatmul.mubr.f32.gmra.mrb[0].mxu0 %v383
        %v566 = vpop.f32.mrb[0].mxu0
        %v567 = vadd.f32 0.0, %v566
        %v568 = vpop.f32.mrb[0].mxu0
        %569 = vmatprep.mubr.f32.mxu0 0.0
        %570 = vmatmul.mubr.f32.gmra.mrb[0].mxu0 %v386
        %v571 = vpop.f32.mrb[0].mxu0
        %v572 = vadd.f32 0.0, %v571
        %v573 = vpop.f32.mrb[0].mxu0
        %574 = vmatprep.mubr.f32.mxu0 0.0
        %575 = vmatmul.mubr.f32.gmra.mrb[0].mxu0 %v389
        %v576 = vpop.f32.mrb[0].mxu0
        %v577 = vadd.f32 0.0, %v576
        %v578 = vpop.f32.mrb[0].mxu0
        %579 = vmatprep.mubr.f32.mxu0 0.0
        %580 = vmatmul.mubr.f32.gmra.mrb[0].mxu0 %v392
        %v581 = vpop.f32.mrb[0].mxu0
        %v582 = vadd.f32 0.0, %v581
        %v583 = vpop.f32.mrb[0].mxu0
        %584 = vmatprep.mubr.f32.mxu0 0.0
        %585 = vmatmul.mubr.f32.gmra.mrb[0].mxu0 %v395
        %v586 = vpop.f32.mrb[0].mxu0
        %v587 = vadd.f32 0.0, %v586
        %v588 = vpop.f32.mrb[0].mxu0
        %589 = vmatprep.mubr.f32.mxu0 0.0
        %590 = vmatmul.mubr.f32.gmra.mrb[0].mxu0 %v398
        %v591 = vpop.f32.mrb[0].mxu0
        %v592 = vadd.f32 0.0, %v591
        %v593 = vpop.f32.mrb[0].mxu0
        %594 = vmatprep.mubr.f32.mxu0 0.0
        %595 = vmatmul.mubr.f32.gmra.mrb[0].mxu0 %v401
        %v596 = vpop.f32.mrb[0].mxu0
        %v597 = vadd.f32 0.0, %v596
        %v598 = vpop.f32.mrb[0].mxu0
        %599 = vmatprep.mubr.f32.mxu0 0.0
        %600 = vmatmul.mubr.f32.gmra.mrb[0].mxu0 %v404
        %v601 = vpop.f32.mrb[0].mxu0
        %v602 = vadd.f32 0.0, %v601
        %v603 = vpop.f32.mrb[0].mxu0
        %604 = vmatprep.mubr.f32.mxu0 0.0
        %605 = vmatmul.mubr.f32.gmra.mrb[0].mxu0 %v407
        %v606 = vpop.f32.mrb[0].mxu0
        %v607 = vadd.f32 0.0, %v606
        %v608 = vpop.f32.mrb[0].mxu0
        %609 = vmatprep.mubr.f32.mxu0 0.0
        %610 = vmatmul.mubr.f32.gmra.mrb[0].mxu0 %v410
        %v611 = vpop.f32.mrb[0].mxu0
        %v612 = vadd.f32 0.0, %v611
        %v613 = vpop.f32.mrb[0].mxu0
        %614 = vmatprep.mubr.f32.mxu0 0.0
        %615 = vmatmul.mubr.f32.gmra.mrb[0].mxu0 %v413
        %v616 = vpop.f32.mrb[0].mxu0
        %v617 = vadd.f32 0.0, %v616
        %v618 = vpop.f32.mrb[0].mxu0
        %619 = vmatprep.mubr.f32.mxu0 0.0
        %620 = vmatmul.mubr.f32.gmra.mrb[0].mxu0 %v416
        %v621 = vpop.f32.mrb[0].mxu0
        %v622 = vadd.f32 0.0, %v621
        %v623 = vpop.f32.mrb[0].mxu0
        %624 = vmatprep.mubr.f32.mxu0 0.0
        %625 = vmatmul.mubr.f32.gmra.mrb[0].mxu0 %v419
        %v626 = vpop.f32.mrb[0].mxu0
        %v627 = vadd.f32 0.0, %v626
        %v628 = vpop.f32.mrb[0].mxu0
        %629 = vmatprep.mubr.f32.mxu0 0.0
        %630 = vmatmul.mubr.f32.gmra.mrb[0].mxu0 %v422
        %v631 = vpop.f32.mrb[0].mxu0
        %v632 = vadd.f32 0.0, %v631
        %v633 = vpop.f32.mrb[0].mxu0
        %634 = vmatprep.mubr.f32.mxu0 0.0
        %635 = vmatmul.mubr.f32.gmra.mrb[0].mxu0 %v425
        %v636 = vpop.f32.mrb[0].mxu0
        %v637 = vadd.f32 0.0, %v636
        %v638 = vpop.f32.mrb[0].mxu0
        %639 = vmatprep.mubr.f32.mxu0 0.0
        %640 = vmatmul.mubr.f32.gmra.mrb[0].mxu0 %v428
        %v641 = vpop.f32.mrb[0].mxu0
        %v642 = vadd.f32 0.0, %v641
        %v643 = vpop.f32.mrb[0].mxu0
        %644 = vmatprep.mubr.f32.mxu0 0.0
        %645 = vmatmul.mubr.f32.gmra.mrb[0].mxu0 %v431
        %v646 = vpop.f32.mrb[0].mxu0
        %v647 = vadd.f32 0.0, %v646
        %v648 = vpop.f32.mrb[0].mxu0
        %649 = vmatprep.mubr.f32.mxu0 0.0
        %650 = vmatmul.mubr.f32.gmra.mrb[0].mxu0 %v434
        %v651 = vpop.f32.mrb[0].mxu0
        %v652 = vadd.f32 0.0, %v651
        %v653 = vpop.f32.mrb[0].mxu0
        %654 = vmatprep.mubr.f32.mxu0 0.0
        %655 = vmatmul.mubr.f32.gmra.mrb[0].mxu0 %v437
        %v656 = vpop.f32.mrb[0].mxu0
        %v657 = vadd.f32 0.0, %v656
        %v658 = vpop.f32.mrb[0].mxu0
        %659 = vmatprep.mubr.f32.mxu0 0.0
        %660 = vmatmul.mubr.f32.gmra.mrb[0].mxu0 %v440
        %v661 = vpop.f32.mrb[0].mxu0
        %v662 = vadd.f32 0.0, %v661
        %v663 = vpop.f32.mrb[0].mxu0
        %664 = vmatprep.mubr.f32.mxu0 0.0
        %665 = vmatmul.mubr.f32.gmra.mrb[0].mxu0 %v443
        %v666 = vpop.f32.mrb[0].mxu0
        %v667 = vadd.f32 0.0, %v666
        %v668 = vpop.f32.mrb[0].mxu0
        %669 = vdwg.mxu0
        %v670 = vld [vmem:[%s2] sm:$0x1]
        %v672 = vlaneseq
        %v673 = vshrl.u32 %v672, 7
        %v674 = vsub.s32 0, %v673
        %v675 = vrot.slane %v670, %v674
        %v677 = vmul.f32 %v512, %v675
        %v678 = vmul.f32 %v517, %v675
        %v679 = vmul.f32 %v522, %v675
        %v680 = vmul.f32 %v527, %v675
        %v681 = vmul.f32 %v532, %v675
        %v682 = vmul.f32 %v537, %v675
        %v683 = vmul.f32 %v542, %v675
        %v684 = vmul.f32 %v547, %v675
        %v685 = vmul.f32 %v552, %v675
        %v686 = vmul.f32 %v557, %v675
        %v687 = vmul.f32 %v562, %v675
        %v688 = vmul.f32 %v567, %v675
        %v689 = vmul.f32 %v572, %v675
        %v690 = vmul.f32 %v577, %v675
        %v691 = vmul.f32 %v582, %v675
        %v692 = vmul.f32 %v587, %v675
        %v693 = vmul.f32 %v592, %v675
        %v694 = vmul.f32 %v597, %v675
        %v695 = vmul.f32 %v602, %v675
        %v696 = vmul.f32 %v607, %v675
        %v697 = vmul.f32 %v612, %v675
        %v698 = vmul.f32 %v617, %v675
        %v699 = vmul.f32 %v622, %v675
        %v700 = vmul.f32 %v627, %v675
        %v701 = vmul.f32 %v632, %v675
        %v702 = vmul.f32 %v637, %v675
        %v703 = vmul.f32 %v642, %v675
        %v704 = vmul.f32 %v647, %v675
        %v705 = vmul.f32 %v652, %v675
        %v706 = vmul.f32 %v657, %v675
        %v707 = vmul.f32 %v662, %v675
        %v708 = vmul.f32 %v667, %v675
        %v709 = vld [vmem:[%s3] sm:$0x1]
        %v711 = vlaneseq
        %v712 = vshrl.u32 %v711, 7
        %v713 = vsub.s32 0, %v712
        %v714 = vrot.slane %v709, %v713
        %v716 = vadd.f32 %v677, %v714
        %v717 = vadd.f32 %v678, %v714
        %v718 = vadd.f32 %v679, %v714
        %v719 = vadd.f32 %v680, %v714
        %v720 = vadd.f32 %v681, %v714
        %v721 = vadd.f32 %v682, %v714
        %v722 = vadd.f32 %v683, %v714
        %v723 = vadd.f32 %v684, %v714
        %v724 = vadd.f32 %v685, %v714
        %v725 = vadd.f32 %v686, %v714
        %v726 = vadd.f32 %v687, %v714
        %v727 = vadd.f32 %v688, %v714
        %v728 = vadd.f32 %v689, %v714
        %v729 = vadd.f32 %v690, %v714
        %v730 = vadd.f32 %v691, %v714
        %v731 = vadd.f32 %v692, %v714
        %v732 = vadd.f32 %v693, %v714
        %v733 = vadd.f32 %v694, %v714
        %v734 = vadd.f32 %v695, %v714
        %v735 = vadd.f32 %v696, %v714
        %v736 = vadd.f32 %v697, %v714
        %v737 = vadd.f32 %v698, %v714
        %v738 = vadd.f32 %v699, %v714
        %v739 = vadd.f32 %v700, %v714
        %v740 = vadd.f32 %v701, %v714
        %v741 = vadd.f32 %v702, %v714
        %v742 = vadd.f32 %v703, %v714
        %v743 = vadd.f32 %v704, %v714
        %v744 = vadd.f32 %v705, %v714
        %v745 = vadd.f32 %v706, %v714
        %v746 = vadd.f32 %v707, %v714
        %v747 = vadd.f32 %v708, %v714
        %v748 = vsub.f32 0.0, %v716
        %v749 = vsub.f32 0.0, %v717
        %v750 = vsub.f32 0.0, %v718
        %v751 = vsub.f32 0.0, %v719
        %v752 = vsub.f32 0.0, %v720
        %v753 = vsub.f32 0.0, %v721
        %v754 = vsub.f32 0.0, %v722
        %v755 = vsub.f32 0.0, %v723
        %v756 = vsub.f32 0.0, %v724
        %v757 = vsub.f32 0.0, %v725
        %v758 = vsub.f32 0.0, %v726
        %v759 = vsub.f32 0.0, %v727
        %v760 = vsub.f32 0.0, %v728
        %v761 = vsub.f32 0.0, %v729
        %v762 = vsub.f32 0.0, %v730
        %v763 = vsub.f32 0.0, %v731
        %v764 = vsub.f32 0.0, %v732
        %v765 = vsub.f32 0.0, %v733
        %v766 = vsub.f32 0.0, %v734
        %v767 = vsub.f32 0.0, %v735
        %v768 = vsub.f32 0.0, %v736
        %v769 = vsub.f32 0.0, %v737
        %v770 = vsub.f32 0.0, %v738
        %v771 = vsub.f32 0.0, %v739
        %v772 = vsub.f32 0.0, %v740
        %v773 = vsub.f32 0.0, %v741
        %v774 = vsub.f32 0.0, %v742
        %v775 = vsub.f32 0.0, %v743
        %v776 = vsub.f32 0.0, %v744
        %v777 = vsub.f32 0.0, %v745
        %v778 = vsub.f32 0.0, %v746
        %v779 = vsub.f32 0.0, %v747
        %v780 = vmul.f32 %v748, 1.442695
        %v781 = vpow.pop %v780
        %v782 = vmul.f32 %v749, 1.442695
        %v783 = vpow.pop %v782
        %v784 = vmul.f32 %v750, 1.442695
        %v785 = vpow.pop %v784
        %v786 = vmul.f32 %v751, 1.442695
        %v787 = vpow.pop %v786
        %v788 = vmul.f32 %v752, 1.442695
        %v789 = vpow.pop %v788
        %v790 = vmul.f32 %v753, 1.442695
        %v791 = vpow.pop %v790
        %v792 = vmul.f32 %v754, 1.442695
        %v793 = vpow.pop %v792
        %v794 = vmul.f32 %v755, 1.442695
        %v795 = vpow.pop %v794
        %v796 = vmul.f32 %v756, 1.442695
        %v797 = vpow.pop %v796
        %v798 = vmul.f32 %v757, 1.442695
        %v799 = vpow.pop %v798
        %v800 = vmul.f32 %v758, 1.442695
        %v801 = vpow.pop %v800
        %v802 = vmul.f32 %v759, 1.442695
        %v803 = vpow.pop %v802
        %v804 = vmul.f32 %v760, 1.442695
        %v805 = vpow.pop %v804
        %v806 = vmul.f32 %v761, 1.442695
        %v807 = vpow.pop %v806
        %v808 = vmul.f32 %v762, 1.442695
        %v809 = vpow.pop %v808
        %v810 = vmul.f32 %v763, 1.442695
        %v811 = vpow.pop %v810
        %v812 = vmul.f32 %v764, 1.442695
        %v813 = vpow.pop %v812
        %v814 = vmul.f32 %v765, 1.442695
        %v815 = vpow.pop %v814
        %v816 = vmul.f32 %v766, 1.442695
        %v817 = vpow.pop %v816
        %v818 = vmul.f32 %v767, 1.442695
        %v819 = vpow.pop %v818
        %v820 = vmul.f32 %v768, 1.442695
        %v821 = vpow.pop %v820
        %v822 = vmul.f32 %v769, 1.442695
        %v823 = vpow.pop %v822
        %v824 = vmul.f32 %v770, 1.442695
        %v825 = vpow.pop %v824
        %v826 = vmul.f32 %v771, 1.442695
        %v827 = vpow.pop %v826
        %v828 = vmul.f32 %v772, 1.442695
        %v829 = vpow.pop %v828
        %v830 = vmul.f32 %v773, 1.442695
        %v831 = vpow.pop %v830
        %v832 = vmul.f32 %v774, 1.442695
        %v833 = vpow.pop %v832
        %v834 = vmul.f32 %v775, 1.442695
        %v835 = vpow.pop %v834
        %v836 = vmul.f32 %v776, 1.442695
        %v837 = vpow.pop %v836
        %v838 = vmul.f32 %v777, 1.442695
        %v839 = vpow.pop %v838
        %v840 = vmul.f32 %v778, 1.442695
        %v841 = vpow.pop %v840
        %v842 = vmul.f32 %v779, 1.442695
        %v843 = vpow.pop %v842
        %v844 = vadd.f32 %v781, 1.0
        %v845 = vadd.f32 %v783, 1.0
        %v846 = vadd.f32 %v785, 1.0
        %v847 = vadd.f32 %v787, 1.0
        %v848 = vadd.f32 %v789, 1.0
        %v849 = vadd.f32 %v791, 1.0
        %v850 = vadd.f32 %v793, 1.0
        %v851 = vadd.f32 %v795, 1.0
        %v852 = vadd.f32 %v797, 1.0
        %v853 = vadd.f32 %v799, 1.0
        %v854 = vadd.f32 %v801, 1.0
        %v855 = vadd.f32 %v803, 1.0
        %v856 = vadd.f32 %v805, 1.0
        %v857 = vadd.f32 %v807, 1.0
        %v858 = vadd.f32 %v809, 1.0
        %v859 = vadd.f32 %v811, 1.0
        %v860 = vadd.f32 %v813, 1.0
        %v861 = vadd.f32 %v815, 1.0
        %v862 = vadd.f32 %v817, 1.0
        %v863 = vadd.f32 %v819, 1.0
        %v864 = vadd.f32 %v821, 1.0
        %v865 = vadd.f32 %v823, 1.0
        %v866 = vadd.f32 %v825, 1.0
        %v867 = vadd.f32 %v827, 1.0
        %v868 = vadd.f32 %v829, 1.0
        %v869 = vadd.f32 %v831, 1.0
        %v870 = vadd.f32 %v833, 1.0
        %v871 = vadd.f32 %v835, 1.0
        %v872 = vadd.f32 %v837, 1.0
        %v873 = vadd.f32 %v839, 1.0
        %v874 = vadd.f32 %v841, 1.0
        %v875 = vadd.f32 %v843, 1.0
        %v876 = vrcp.pop %v844
        %v877 = vmul.f32 1.0, %v876
        %v878 = vrcp.pop %v845
        %v879 = vmul.f32 1.0, %v878
        %v880 = vrcp.pop %v846
        %v881 = vmul.f32 1.0, %v880
        %v882 = vrcp.pop %v847
        %v883 = vmul.f32 1.0, %v882
        %v884 = vrcp.pop %v848
        %v885 = vmul.f32 1.0, %v884
        %v886 = vrcp.pop %v849
        %v887 = vmul.f32 1.0, %v886
        %v888 = vrcp.pop %v850
        %v889 = vmul.f32 1.0, %v888
        %v890 = vrcp.pop %v851
        %v891 = vmul.f32 1.0, %v890
        %v892 = vrcp.pop %v852
        %v893 = vmul.f32 1.0, %v892
        %v894 = vrcp.pop %v853
        %v895 = vmul.f32 1.0, %v894
        %v896 = vrcp.pop %v854
        %v897 = vmul.f32 1.0, %v896
        %v898 = vrcp.pop %v855
        %v899 = vmul.f32 1.0, %v898
        %v900 = vrcp.pop %v856
        %v901 = vmul.f32 1.0, %v900
        %v902 = vrcp.pop %v857
        %v903 = vmul.f32 1.0, %v902
        %v904 = vrcp.pop %v858
        %v905 = vmul.f32 1.0, %v904
        %v906 = vrcp.pop %v859
        %v907 = vmul.f32 1.0, %v906
        %v908 = vrcp.pop %v860
        %v909 = vmul.f32 1.0, %v908
        %v910 = vrcp.pop %v861
        %v911 = vmul.f32 1.0, %v910
        %v912 = vrcp.pop %v862
        %v913 = vmul.f32 1.0, %v912
        %v914 = vrcp.pop %v863
        %v915 = vmul.f32 1.0, %v914
        %v916 = vrcp.pop %v864
        %v917 = vmul.f32 1.0, %v916
        %v918 = vrcp.pop %v865
        %v919 = vmul.f32 1.0, %v918
        %v920 = vrcp.pop %v866
        %v921 = vmul.f32 1.0, %v920
        %v922 = vrcp.pop %v867
        %v923 = vmul.f32 1.0, %v922
        %v924 = vrcp.pop %v868
        %v925 = vmul.f32 1.0, %v924
        %v926 = vrcp.pop %v869
        %v927 = vmul.f32 1.0, %v926
        %v928 = vrcp.pop %v870
        %v929 = vmul.f32 1.0, %v928
        %v930 = vrcp.pop %v871
        %v931 = vmul.f32 1.0, %v930
        %v932 = vrcp.pop %v872
        %v933 = vmul.f32 1.0, %v932
        %v934 = vrcp.pop %v873
        %v935 = vmul.f32 1.0, %v934
        %v936 = vrcp.pop %v874
        %v937 = vmul.f32 1.0, %v936
        %v938 = vrcp.pop %v875
        %v939 = vmul.f32 1.0, %v938
        %v940 = vmul.f32 %v716, %v877
        %v941 = vmul.f32 %v717, %v879
        %v942 = vmul.f32 %v718, %v881
        %v943 = vmul.f32 %v719, %v883
        %v944 = vmul.f32 %v720, %v885
        %v945 = vmul.f32 %v721, %v887
        %v946 = vmul.f32 %v722, %v889
        %v947 = vmul.f32 %v723, %v891
        %v948 = vmul.f32 %v724, %v893
        %v949 = vmul.f32 %v725, %v895
        %v950 = vmul.f32 %v726, %v897
        %v951 = vmul.f32 %v727, %v899
        %v952 = vmul.f32 %v728, %v901
        %v953 = vmul.f32 %v729, %v903
        %v954 = vmul.f32 %v730, %v905
        %v955 = vmul.f32 %v731, %v907
        %v956 = vmul.f32 %v732, %v909
        %v957 = vmul.f32 %v733, %v911
        %v958 = vmul.f32 %v734, %v913
        %v959 = vmul.f32 %v735, %v915
        %v960 = vmul.f32 %v736, %v917
        %v961 = vmul.f32 %v737, %v919
        %v962 = vmul.f32 %v738, %v921
        %v963 = vmul.f32 %v739, %v923
        %v964 = vmul.f32 %v740, %v925
        %v965 = vmul.f32 %v741, %v927
        %v966 = vmul.f32 %v742, %v929
        %v967 = vmul.f32 %v743, %v931
        %v968 = vmul.f32 %v744, %v933
        %v969 = vmul.f32 %v745, %v935
        %v970 = vmul.f32 %v746, %v937
        %v971 = vmul.f32 %v747, %v939
        %v972 = vld [vmem:[#allocation6] sm:$0xff]
        %v973 = vld [vmem:[#allocation6 + $0x8] sm:$0xff]
        %vm974 = vcmask 130048
        %975 = vst.msk [vmem:[#allocation2] sm:$0xff] %vm974, -3.4028235e+38
        %976 = vst.msk [vmem:[#allocation2 + $0x8] sm:$0xff] %vm974, -3.4028235e+38
        %vm977 = vcmask 125952
        %978 = vst.msk [vmem:[#allocation2 + $0x10] sm:$0xf] %vm977, -3.4028235e+38
        %979 = vst.msk [vmem:[#allocation2 + $0x18] sm:$0xff] %vm974, -3.4028235e+38
        %980 = vst.msk [vmem:[#allocation2 + $0x20] sm:$0xff] %vm974, -3.4028235e+38
        %981 = vst.msk [vmem:[#allocation2 + $0x28] sm:$0xf] %vm977, -3.4028235e+38
        %982 = vst.msk [vmem:[#allocation2 + $0x30] sm:$0xff] %vm974, -3.4028235e+38
        %983 = vst.msk [vmem:[#allocation2 + $0x38] sm:$0xff] %vm974, -3.4028235e+38
        %984 = vst.msk [vmem:[#allocation2 + $0x40] sm:$0xf] %vm977, -3.4028235e+38
        %985 = vst.msk [vmem:[#allocation2 + $0x48] sm:$0xff] %vm974, -3.4028235e+38
        %986 = vst.msk [vmem:[#allocation2 + $0x50] sm:$0xff] %vm974, -3.4028235e+38
        %987 = vst.msk [vmem:[#allocation2 + $0x58] sm:$0xf] %vm977, -3.4028235e+38
        %988 = vst.msk [vmem:[#allocation2 + $0x60] sm:$0xff] %vm974, -3.4028235e+38
        %989 = vst.msk [vmem:[#allocation2 + $0x68] sm:$0xff] %vm974, -3.4028235e+38
        %990 = vst.msk [vmem:[#allocation2 + $0x70] sm:$0xf] %vm977, -3.4028235e+38
        %991 = vst.msk [vmem:[#allocation2 + $0x78] sm:$0xff] %vm974, -3.4028235e+38
        %992 = vst.msk [vmem:[#allocation2 + $0x80] sm:$0xff] %vm974, -3.4028235e+38
        %993 = vst.msk [vmem:[#allocation2 + $0x88] sm:$0xf] %vm977, -3.4028235e+38
        %994 = vst.msk [vmem:[#allocation2 + $0x90] sm:$0xff] %vm974, -3.4028235e+38
        %995 = vst.msk [vmem:[#allocation2 + $0x98] sm:$0xff] %vm974, -3.4028235e+38
        %996 = vst.msk [vmem:[#allocation2 + $0xa0] sm:$0xf] %vm977, -3.4028235e+38
        %997 = vst.msk [vmem:[#allocation2 + $0xa8] sm:$0xff] %vm974, -3.4028235e+38
        %998 = vst.msk [vmem:[#allocation2 + $0xb0] sm:$0xff] %vm974, -3.4028235e+38
        %999 = vst.msk [vmem:[#allocation2 + $0xb8] sm:$0xf] %vm977, -3.4028235e+38
        %1000 = vst.msk [vmem:[#allocation2 + $0xc0] sm:$0xff] %vm974, -3.4028235e+38
        %1001 = vst.msk [vmem:[#allocation2 + $0xc8] sm:$0xff] %vm974, -3.4028235e+38
        %1002 = vst.msk [vmem:[#allocation2 + $0xd0] sm:$0xf] %vm977, -3.4028235e+38
        %1003 = vst.msk [vmem:[#allocation2 + $0xd8] sm:$0xff] %vm974, -3.4028235e+38
        %1004 = vst.msk [vmem:[#allocation2 + $0xe0] sm:$0xff] %vm974, -3.4028235e+38
        %1005 = vst.msk [vmem:[#allocation2 + $0xe8] sm:$0xf] %vm977, -3.4028235e+38
        %1006 = vst.msk [vmem:[#allocation2 + $0xf0] sm:$0xff] %vm974, -3.4028235e+38
        %1007 = vst.msk [vmem:[#allocation2 + $0xf8] sm:$0xff] %vm974, -3.4028235e+38
        %1008 = vst.msk [vmem:[#allocation2 + $0x100] sm:$0xf] %vm977, -3.4028235e+38
        %1009 = vst.msk [vmem:[#allocation2 + $0x108] sm:$0xff] %vm974, -3.4028235e+38
        %1010 = vst.msk [vmem:[#allocation2 + $0x110] sm:$0xff] %vm974, -3.4028235e+38
        %1011 = vst.msk [vmem:[#allocation2 + $0x118] sm:$0xf] %vm977, -3.4028235e+38
        %1012 = vst.msk [vmem:[#allocation2 + $0x120] sm:$0xff] %vm974, -3.4028235e+38
        %1013 = vst.msk [vmem:[#allocation2 + $0x128] sm:$0xff] %vm974, -3.4028235e+38
        %1014 = vst.msk [vmem:[#allocation2 + $0x130] sm:$0xf] %vm977, -3.4028235e+38
        %1015 = vst.msk [vmem:[#allocation2 + $0x138] sm:$0xff] %vm974, -3.4028235e+38
        %1016 = vst.msk [vmem:[#allocation2 + $0x140] sm:$0xff] %vm974, -3.4028235e+38
        %1017 = vst.msk [vmem:[#allocation2 + $0x148] sm:$0xf] %vm977, -3.4028235e+38
        %1018 = vst.msk [vmem:[#allocation2 + $0x150] sm:$0xff] %vm974, -3.4028235e+38
        %1019 = vst.msk [vmem:[#allocation2 + $0x158] sm:$0xff] %vm974, -3.4028235e+38
        %1020 = vst.msk [vmem:[#allocation2 + $0x160] sm:$0xf] %vm977, -3.4028235e+38
        %1021 = vst.msk [vmem:[#allocation2 + $0x168] sm:$0xff] %vm974, -3.4028235e+38
        %1022 = vst.msk [vmem:[#allocation2 + $0x170] sm:$0xff] %vm974, -3.4028235e+38
        %1023 = vst.msk [vmem:[#allocation2 + $0x178] sm:$0xf] %vm977, -3.4028235e+38
        %1024 = vst.msk [vmem:[#allocation2 + $0x180] sm:$0xff] %vm974, -3.4028235e+38
        %1025 = vst.msk [vmem:[#allocation2 + $0x188] sm:$0xff] %vm974, -3.4028235e+38
        %1026 = vst.msk [vmem:[#allocation2 + $0x190] sm:$0xf] %vm977, -3.4028235e+38
        %1027 = vst.msk [vmem:[#allocation2 + $0x198] sm:$0xff] %vm974, -3.4028235e+38
        %1028 = vst.msk [vmem:[#allocation2 + $0x1a0] sm:$0xff] %vm974, -3.4028235e+38
        %1029 = vst.msk [vmem:[#allocation2 + $0x1a8] sm:$0xf] %vm977, -3.4028235e+38
        %1030 = vst.msk [vmem:[#allocation2 + $0x1b0] sm:$0xff] %vm974, -3.4028235e+38
        %1031 = vst.msk [vmem:[#allocation2 + $0x1b8] sm:$0xff] %vm974, -3.4028235e+38
        %1032 = vst.msk [vmem:[#allocation2 + $0x1c0] sm:$0xf] %vm977, -3.4028235e+38
        %1033 = vst.msk [vmem:[#allocation2 + $0x1c8] sm:$0xff] %vm974, -3.4028235e+38
        %1034 = vst.msk [vmem:[#allocation2 + $0x1d0] sm:$0xff] %vm974, -3.4028235e+38
        %1035 = vst.msk [vmem:[#allocation2 + $0x1d8] sm:$0xf] %vm977, -3.4028235e+38
        %s1036 = scalar_lea.vmem [#allocation2], 48
        %1037 = vst.msk [vmem:[%s1036 + $0x2] sm:$0xff] %vm974, %v940
        %1038 = vst.msk [vmem:[%s1036 + $0xa] sm:$0xff] %vm974, %v941
        %1039 = vst.msk [vmem:[%s1036 + $0x1a] sm:$0xff] %vm974, %v942
        %1040 = vst.msk [vmem:[%s1036 + $0x22] sm:$0xff] %vm974, %v943
        %1041 = vst.msk [vmem:[%s1036 + $0x32] sm:$0xff] %vm974, %v944
        %1042 = vst.msk [vmem:[%s1036 + $0x3a] sm:$0xff] %vm974, %v945
        %1043 = vst.msk [vmem:[%s1036 + $0x4a] sm:$0xff] %vm974, %v946
        %1044 = vst.msk [vmem:[%s1036 + $0x52] sm:$0xff] %vm974, %v947
        %1045 = vst.msk [vmem:[%s1036 + $0x62] sm:$0xff] %vm974, %v948
        %1046 = vst.msk [vmem:[%s1036 + $0x6a] sm:$0xff] %vm974, %v949
        %1047 = vst.msk [vmem:[%s1036 + $0x7a] sm:$0xff] %vm974, %v950
        %1048 = vst.msk [vmem:[%s1036 + $0x82] sm:$0xff] %vm974, %v951
        %1049 = vst.msk [vmem:[%s1036 + $0x92] sm:$0xff] %vm974, %v952
        %1050 = vst.msk [vmem:[%s1036 + $0x9a] sm:$0xff] %vm974, %v953
        %1051 = vst.msk [vmem:[%s1036 + $0xaa] sm:$0xff] %vm974, %v954
        %1052 = vst.msk [vmem:[%s1036 + $0xb2] sm:$0xff] %vm974, %v955
        %1053 = vst.msk [vmem:[%s1036 + $0xc2] sm:$0xff] %vm974, %v956
        %1054 = vst.msk [vmem:[%s1036 + $0xca] sm:$0xff] %vm974, %v957
        %1055 = vst.msk [vmem:[%s1036 + $0xda] sm:$0xff] %vm974, %v958
        %1056 = vst.msk [vmem:[%s1036 + $0xe2] sm:$0xff] %vm974, %v959
        %1057 = vst.msk [vmem:[%s1036 + $0xf2] sm:$0xff] %vm974, %v960
        %1058 = vst.msk [vmem:[%s1036 + $0xfa] sm:$0xff] %vm974, %v961
        %1059 = vst.msk [vmem:[%s1036 + $0x10a] sm:$0xff] %vm974, %v962
        %1060 = vst.msk [vmem:[%s1036 + $0x112] sm:$0xff] %vm974, %v963
        %1061 = vst.msk [vmem:[%s1036 + $0x122] sm:$0xff] %vm974, %v964
        %1062 = vst.msk [vmem:[%s1036 + $0x12a] sm:$0xff] %vm974, %v965
        %1063 = vst.msk [vmem:[%s1036 + $0x13a] sm:$0xff] %vm974, %v966
        %1064 = vst.msk [vmem:[%s1036 + $0x142] sm:$0xff] %vm974, %v967
        %1065 = vst.msk [vmem:[%s1036 + $0x152] sm:$0xff] %vm974, %v968
        %1066 = vst.msk [vmem:[%s1036 + $0x15a] sm:$0xff] %vm974, %v969
        %1067 = vst.msk [vmem:[%s1036 + $0x16a] sm:$0xff] %vm974, %v970
        %1068 = vst.msk [vmem:[%s1036 + $0x172] sm:$0xff] %vm974, %v971
        %v1069 = vld [vmem:[#allocation2 + $0x2] sm:$0xff]
        %v1070 = vld [vmem:[#allocation2 + $0xa] sm:$0xff]
        %v1071 = vld [vmem:[#allocation2 + $0x1a] sm:$0xff]
        %v1072 = vld [vmem:[#allocation2 + $0x22] sm:$0xff]
        %v1073 = vld [vmem:[#allocation2 + $0x32] sm:$0xff]
        %v1074 = vld [vmem:[#allocation2 + $0x3a] sm:$0xff]
        %v1075 = vld [vmem:[#allocation2 + $0x4a] sm:$0xff]
        %v1076 = vld [vmem:[#allocation2 + $0x52] sm:$0xff]
        %v1077 = vld [vmem:[#allocation2 + $0x62] sm:$0xff]
        %v1078 = vld [vmem:[#allocation2 + $0x6a] sm:$0xff]
        %v1079 = vld [vmem:[#allocation2 + $0x7a] sm:$0xff]
        %v1080 = vld [vmem:[#allocation2 + $0x82] sm:$0xff]
        %v1081 = vld [vmem:[#allocation2 + $0x92] sm:$0xff]
        %v1082 = vld [vmem:[#allocation2 + $0x9a] sm:$0xff]
        %v1083 = vld [vmem:[#allocation2 + $0xaa] sm:$0xff]
        %v1084 = vld [vmem:[#allocation2 + $0xb2] sm:$0xff]
        %v1085 = vld [vmem:[#allocation2 + $0xc2] sm:$0xff]
        %v1086 = vld [vmem:[#allocation2 + $0xca] sm:$0xff]
        %v1087 = vld [vmem:[#allocation2 + $0xda] sm:$0xff]
        %v1088 = vld [vmem:[#allocation2 + $0xe2] sm:$0xff]
        %v1089 = vld [vmem:[#allocation2 + $0xf2] sm:$0xff]
        %v1090 = vld [vmem:[#allocation2 + $0xfa] sm:$0xff]
        %v1091 = vld [vmem:[#allocation2 + $0x10a] sm:$0xff]
        %v1092 = vld [vmem:[#allocation2 + $0x112] sm:$0xff]
        %v1093 = vld [vmem:[#allocation2 + $0x122] sm:$0xff]
        %v1094 = vld [vmem:[#allocation2 + $0x12a] sm:$0xff]
        %v1095 = vld [vmem:[#allocation2 + $0x13a] sm:$0xff]
        %v1096 = vld [vmem:[#allocation2 + $0x142] sm:$0xff]
        %v1097 = vld [vmem:[#allocation2 + $0x152] sm:$0xff]
        %v1098 = vld [vmem:[#allocation2 + $0x15a] sm:$0xff]
        %v1099 = vld [vmem:[#allocation2 + $0x16a] sm:$0xff]
        %v1100 = vld [vmem:[#allocation2 + $0x172] sm:$0xff]
        %s1101 = scalar_lea.vmem [#allocation2], 24
        %v1102 = vld [vmem:[%s1101 + $0x2] sm:$0xff]
        %v1103 = vld [vmem:[%s1101 + $0xa] sm:$0xff]
        %v1104 = vld [vmem:[%s1101 + $0x1a] sm:$0xff]
        %v1105 = vld [vmem:[%s1101 + $0x22] sm:$0xff]
        %v1106 = vld [vmem:[%s1101 + $0x32] sm:$0xff]
        %v1107 = vld [vmem:[%s1101 + $0x3a] sm:$0xff]
        %v1108 = vld [vmem:[%s1101 + $0x4a] sm:$0xff]
        %v1109 = vld [vmem:[%s1101 + $0x52] sm:$0xff]
        %v1110 = vld [vmem:[%s1101 + $0x62] sm:$0xff]
        %v1111 = vld [vmem:[%s1101 + $0x6a] sm:$0xff]
        %v1112 = vld [vmem:[%s1101 + $0x7a] sm:$0xff]
        %v1113 = vld [vmem:[%s1101 + $0x82] sm:$0xff]
        %v1114 = vld [vmem:[%s1101 + $0x92] sm:$0xff]
        %v1115 = vld [vmem:[%s1101 + $0x9a] sm:$0xff]
        %v1116 = vld [vmem:[%s1101 + $0xaa] sm:$0xff]
        %v1117 = vld [vmem:[%s1101 + $0xb2] sm:$0xff]
        %v1118 = vld [vmem:[%s1101 + $0xc2] sm:$0xff]
        %v1119 = vld [vmem:[%s1101 + $0xca] sm:$0xff]
        %v1120 = vld [vmem:[%s1101 + $0xda] sm:$0xff]
        %v1121 = vld [vmem:[%s1101 + $0xe2] sm:$0xff]
        %v1122 = vld [vmem:[%s1101 + $0xf2] sm:$0xff]
        %v1123 = vld [vmem:[%s1101 + $0xfa] sm:$0xff]
        %v1124 = vld [vmem:[%s1101 + $0x10a] sm:$0xff]
        %v1125 = vld [vmem:[%s1101 + $0x112] sm:$0xff]
        %v1126 = vld [vmem:[%s1101 + $0x122] sm:$0xff]
        %v1127 = vld [vmem:[%s1101 + $0x12a] sm:$0xff]
        %v1128 = vld [vmem:[%s1101 + $0x13a] sm:$0xff]
        %v1129 = vld [vmem:[%s1101 + $0x142] sm:$0xff]
        %v1130 = vld [vmem:[%s1101 + $0x152] sm:$0xff]
        %v1131 = vld [vmem:[%s1101 + $0x15a] sm:$0xff]
        %v1132 = vld [vmem:[%s1101 + $0x16a] sm:$0xff]
        %v1133 = vld [vmem:[%s1101 + $0x172] sm:$0xff]
        %v1134 = vmax.f32 %v1069, %v1102
        %v1135 = vmax.f32 %v1070, %v1103
        %v1136 = vmax.f32 %v1071, %v1104
        %v1137 = vmax.f32 %v1072, %v1105
        %v1138 = vmax.f32 %v1073, %v1106
        %v1139 = vmax.f32 %v1074, %v1107
        %v1140 = vmax.f32 %v1075, %v1108
        %v1141 = vmax.f32 %v1076, %v1109
        %v1142 = vmax.f32 %v1077, %v1110
        %v1143 = vmax.f32 %v1078, %v1111
        %v1144 = vmax.f32 %v1079, %v1112
        %v1145 = vmax.f32 %v1080, %v1113
        %v1146 = vmax.f32 %v1081, %v1114
        %v1147 = vmax.f32 %v1082, %v1115
        %v1148 = vmax.f32 %v1083, %v1116
        %v1149 = vmax.f32 %v1084, %v1117
        %v1150 = vmax.f32 %v1085, %v1118
        %v1151 = vmax.f32 %v1086, %v1119
        %v1152 = vmax.f32 %v1087, %v1120
        %v1153 = vmax.f32 %v1088, %v1121
        %v1154 = vmax.f32 %v1089, %v1122
        %v1155 = vmax.f32 %v1090, %v1123
        %v1156 = vmax.f32 %v1091, %v1124
        %v1157 = vmax.f32 %v1092, %v1125
        %v1158 = vmax.f32 %v1093, %v1126
        %v1159 = vmax.f32 %v1094, %v1127
        %v1160 = vmax.f32 %v1095, %v1128
        %v1161 = vmax.f32 %v1096, %v1129
        %v1162 = vmax.f32 %v1097, %v1130
        %v1163 = vmax.f32 %v1098, %v1131
        %v1164 = vmax.f32 %v1099, %v1132
        %v1165 = vmax.f32 %v1100, %v1133
        %v1166 = vld [vmem:[%s1036 + $0x2] sm:$0xff]
        %v1167 = vld [vmem:[%s1036 + $0xa] sm:$0xff]
        %v1168 = vld [vmem:[%s1036 + $0x1a] sm:$0xff]
        %v1169 = vld [vmem:[%s1036 + $0x22] sm:$0xff]
        %v1170 = vld [vmem:[%s1036 + $0x32] sm:$0xff]
        %v1171 = vld [vmem:[%s1036 + $0x3a] sm:$0xff]
        %v1172 = vld [vmem:[%s1036 + $0x4a] sm:$0xff]
        %v1173 = vld [vmem:[%s1036 + $0x52] sm:$0xff]
        %v1174 = vld [vmem:[%s1036 + $0x62] sm:$0xff]
        %v1175 = vld [vmem:[%s1036 + $0x6a] sm:$0xff]
        %v1176 = vld [vmem:[%s1036 + $0x7a] sm:$0xff]
        %v1177 = vld [vmem:[%s1036 + $0x82] sm:$0xff]
        %v1178 = vld [vmem:[%s1036 + $0x92] sm:$0xff]
        %v1179 = vld [vmem:[%s1036 + $0x9a] sm:$0xff]
        %v1180 = vld [vmem:[%s1036 + $0xaa] sm:$0xff]
        %v1181 = vld [vmem:[%s1036 + $0xb2] sm:$0xff]
        %v1182 = vld [vmem:[%s1036 + $0xc2] sm:$0xff]
        %v1183 = vld [vmem:[%s1036 + $0xca] sm:$0xff]
        %v1184 = vld [vmem:[%s1036 + $0xda] sm:$0xff]
        %v1185 = vld [vmem:[%s1036 + $0xe2] sm:$0xff]
        %v1186 = vld [vmem:[%s1036 + $0xf2] sm:$0xff]
        %v1187 = vld [vmem:[%s1036 + $0xfa] sm:$0xff]
        %v1188 = vld [vmem:[%s1036 + $0x10a] sm:$0xff]
        %v1189 = vld [vmem:[%s1036 + $0x112] sm:$0xff]
        %v1190 = vld [vmem:[%s1036 + $0x122] sm:$0xff]
        %v1191 = vld [vmem:[%s1036 + $0x12a] sm:$0xff]
        %v1192 = vld [vmem:[%s1036 + $0x13a] sm:$0xff]
        %v1193 = vld [vmem:[%s1036 + $0x142] sm:$0xff]
        %v1194 = vld [vmem:[%s1036 + $0x152] sm:$0xff]
        %v1195 = vld [vmem:[%s1036 + $0x15a] sm:$0xff]
        %v1196 = vld [vmem:[%s1036 + $0x16a] sm:$0xff]
        %v1197 = vld [vmem:[%s1036 + $0x172] sm:$0xff]
        %v1198 = vmax.f32 %v1134, %v1166
        %v1199 = vmax.f32 %v1135, %v1167
        %v1200 = vmax.f32 %v1136, %v1168
        %v1201 = vmax.f32 %v1137, %v1169
        %v1202 = vmax.f32 %v1138, %v1170
        %v1203 = vmax.f32 %v1139, %v1171
        %v1204 = vmax.f32 %v1140, %v1172
        %v1205 = vmax.f32 %v1141, %v1173
        %v1206 = vmax.f32 %v1142, %v1174
        %v1207 = vmax.f32 %v1143, %v1175
        %v1208 = vmax.f32 %v1144, %v1176
        %v1209 = vmax.f32 %v1145, %v1177
        %v1210 = vmax.f32 %v1146, %v1178
        %v1211 = vmax.f32 %v1147, %v1179
        %v1212 = vmax.f32 %v1148, %v1180
        %v1213 = vmax.f32 %v1149, %v1181
        %v1214 = vmax.f32 %v1150, %v1182
        %v1215 = vmax.f32 %v1151, %v1183
        %v1216 = vmax.f32 %v1152, %v1184
        %v1217 = vmax.f32 %v1153, %v1185
        %v1218 = vmax.f32 %v1154, %v1186
        %v1219 = vmax.f32 %v1155, %v1187
        %v1220 = vmax.f32 %v1156, %v1188
        %v1221 = vmax.f32 %v1157, %v1189
        %v1222 = vmax.f32 %v1158, %v1190
        %v1223 = vmax.f32 %v1159, %v1191
        %v1224 = vmax.f32 %v1160, %v1192
        %v1225 = vmax.f32 %v1161, %v1193
        %v1226 = vmax.f32 %v1162, %v1194
        %v1227 = vmax.f32 %v1163, %v1195
        %v1228 = vmax.f32 %v1164, %v1196
        %v1229 = vmax.f32 %v1165, %v1197
        %s1230 = scalar_lea.vmem [#allocation2], 72
        %v1231 = vld [vmem:[%s1230 + $0x2] sm:$0xff]
        %v1232 = vld [vmem:[%s1230 + $0xa] sm:$0xff]
        %v1233 = vld [vmem:[%s1230 + $0x1a] sm:$0xff]
        %v1234 = vld [vmem:[%s1230 + $0x22] sm:$0xff]
        %v1235 = vld [vmem:[%s1230 + $0x32] sm:$0xff]
        %v1236 = vld [vmem:[%s1230 + $0x3a] sm:$0xff]
        %v1237 = vld [vmem:[%s1230 + $0x4a] sm:$0xff]
        %v1238 = vld [vmem:[%s1230 + $0x52] sm:$0xff]
        %v1239 = vld [vmem:[%s1230 + $0x62] sm:$0xff]
        %v1240 = vld [vmem:[%s1230 + $0x6a] sm:$0xff]
        %v1241 = vld [vmem:[%s1230 + $0x7a] sm:$0xff]
        %v1242 = vld [vmem:[%s1230 + $0x82] sm:$0xff]
        %v1243 = vld [vmem:[%s1230 + $0x92] sm:$0xff]
        %v1244 = vld [vmem:[%s1230 + $0x9a] sm:$0xff]
        %v1245 = vld [vmem:[%s1230 + $0xaa] sm:$0xff]
        %v1246 = vld [vmem:[%s1230 + $0xb2] sm:$0xff]
        %v1247 = vld [vmem:[%s1230 + $0xc2] sm:$0xff]
        %v1248 = vld [vmem:[%s1230 + $0xca] sm:$0xff]
        %v1249 = vld [vmem:[%s1230 + $0xda] sm:$0xff]
        %v1250 = vld [vmem:[%s1230 + $0xe2] sm:$0xff]
        %v1251 = vld [vmem:[%s1230 + $0xf2] sm:$0xff]
        %v1252 = vld [vmem:[%s1230 + $0xfa] sm:$0xff]
        %v1253 = vld [vmem:[%s1230 + $0x10a] sm:$0xff]
        %v1254 = vld [vmem:[%s1230 + $0x112] sm:$0xff]
        %v1255 = vld [vmem:[%s1230 + $0x122] sm:$0xff]
        %v1256 = vld [vmem:[%s1230 + $0x12a] sm:$0xff]
        %v1257 = vld [vmem:[%s1230 + $0x13a] sm:$0xff]
        %v1258 = vld [vmem:[%s1230 + $0x142] sm:$0xff]
        %v1259 = vld [vmem:[%s1230 + $0x152] sm:$0xff]
        %v1260 = vld [vmem:[%s1230 + $0x15a] sm:$0xff]
        %v1261 = vld [vmem:[%s1230 + $0x16a] sm:$0xff]
        %v1262 = vld [vmem:[%s1230 + $0x172] sm:$0xff]
        %v1263 = vmax.f32 %v1198, %v1231
        %v1264 = vmax.f32 %v1199, %v1232
        %v1265 = vmax.f32 %v1200, %v1233
        %v1266 = vmax.f32 %v1201, %v1234
        %v1267 = vmax.f32 %v1202, %v1235
        %v1268 = vmax.f32 %v1203, %v1236
        %v1269 = vmax.f32 %v1204, %v1237
        %v1270 = vmax.f32 %v1205, %v1238
        %v1271 = vmax.f32 %v1206, %v1239
        %v1272 = vmax.f32 %v1207, %v1240
        %v1273 = vmax.f32 %v1208, %v1241
        %v1274 = vmax.f32 %v1209, %v1242
        %v1275 = vmax.f32 %v1210, %v1243
        %v1276 = vmax.f32 %v1211, %v1244
        %v1277 = vmax.f32 %v1212, %v1245
        %v1278 = vmax.f32 %v1213, %v1246
        %v1279 = vmax.f32 %v1214, %v1247
        %v1280 = vmax.f32 %v1215, %v1248
        %v1281 = vmax.f32 %v1216, %v1249
        %v1282 = vmax.f32 %v1217, %v1250
        %v1283 = vmax.f32 %v1218, %v1251
        %v1284 = vmax.f32 %v1219, %v1252
        %v1285 = vmax.f32 %v1220, %v1253
        %v1286 = vmax.f32 %v1221, %v1254
        %v1287 = vmax.f32 %v1222, %v1255
        %v1288 = vmax.f32 %v1223, %v1256
        %v1289 = vmax.f32 %v1224, %v1257
        %v1290 = vmax.f32 %v1225, %v1258
        %v1291 = vmax.f32 %v1226, %v1259
        %v1292 = vmax.f32 %v1227, %v1260
        %v1293 = vmax.f32 %v1228, %v1261
        %v1294 = vmax.f32 %v1229, %v1262
        %s1295 = scalar_lea.vmem [#allocation2], 96
        %v1296 = vld [vmem:[%s1295 + $0x2] sm:$0xff]
        %v1297 = vld [vmem:[%s1295 + $0xa] sm:$0xff]
        %v1298 = vld [vmem:[%s1295 + $0x1a] sm:$0xff]
        %v1299 = vld [vmem:[%s1295 + $0x22] sm:$0xff]
        %v1300 = vld [vmem:[%s1295 + $0x32] sm:$0xff]
        %v1301 = vld [vmem:[%s1295 + $0x3a] sm:$0xff]
        %v1302 = vld [vmem:[%s1295 + $0x4a] sm:$0xff]
        %v1303 = vld [vmem:[%s1295 + $0x52] sm:$0xff]
        %v1304 = vld [vmem:[%s1295 + $0x62] sm:$0xff]
        %v1305 = vld [vmem:[%s1295 + $0x6a] sm:$0xff]
        %v1306 = vld [vmem:[%s1295 + $0x7a] sm:$0xff]
        %v1307 = vld [vmem:[%s1295 + $0x82] sm:$0xff]
        %v1308 = vld [vmem:[%s1295 + $0x92] sm:$0xff]
        %v1309 = vld [vmem:[%s1295 + $0x9a] sm:$0xff]
        %v1310 = vld [vmem:[%s1295 + $0xaa] sm:$0xff]
        %v1311 = vld [vmem:[%s1295 + $0xb2] sm:$0xff]
        %v1312 = vld [vmem:[%s1295 + $0xc2] sm:$0xff]
        %v1313 = vld [vmem:[%s1295 + $0xca] sm:$0xff]
        %v1314 = vld [vmem:[%s1295 + $0xda] sm:$0xff]
        %v1315 = vld [vmem:[%s1295 + $0xe2] sm:$0xff]
        %v1316 = vld [vmem:[%s1295 + $0xf2] sm:$0xff]
        %v1317 = vld [vmem:[%s1295 + $0xfa] sm:$0xff]
        %v1318 = vld [vmem:[%s1295 + $0x10a] sm:$0xff]
        %v1319 = vld [vmem:[%s1295 + $0x112] sm:$0xff]
        %v1320 = vld [vmem:[%s1295 + $0x122] sm:$0xff]
        %v1321 = vld [vmem:[%s1295 + $0x12a] sm:$0xff]
        %v1322 = vld [vmem:[%s1295 + $0x13a] sm:$0xff]
        %v1323 = vld [vmem:[%s1295 + $0x142] sm:$0xff]
        %v1324 = vld [vmem:[%s1295 + $0x152] sm:$0xff]
        %v1325 = vld [vmem:[%s1295 + $0x15a] sm:$0xff]
        %v1326 = vld [vmem:[%s1295 + $0x16a] sm:$0xff]
        %v1327 = vld [vmem:[%s1295 + $0x172] sm:$0xff]
        %v1328 = vmax.f32 %v1263, %v1296
        %v1329 = vmax.f32 %v1264, %v1297
        %v1330 = vmax.f32 %v1265, %v1298
        %v1331 = vmax.f32 %v1266, %v1299
        %v1332 = vmax.f32 %v1267, %v1300
        %v1333 = vmax.f32 %v1268, %v1301
        %v1334 = vmax.f32 %v1269, %v1302
        %v1335 = vmax.f32 %v1270, %v1303
        %v1336 = vmax.f32 %v1271, %v1304
        %v1337 = vmax.f32 %v1272, %v1305
        %v1338 = vmax.f32 %v1273, %v1306
        %v1339 = vmax.f32 %v1274, %v1307
        %v1340 = vmax.f32 %v1275, %v1308
        %v1341 = vmax.f32 %v1276, %v1309
        %v1342 = vmax.f32 %v1277, %v1310
        %v1343 = vmax.f32 %v1278, %v1311
        %v1344 = vmax.f32 %v1279, %v1312
        %v1345 = vmax.f32 %v1280, %v1313
        %v1346 = vmax.f32 %v1281, %v1314
        %v1347 = vmax.f32 %v1282, %v1315
        %v1348 = vmax.f32 %v1283, %v1316
        %v1349 = vmax.f32 %v1284, %v1317
        %v1350 = vmax.f32 %v1285, %v1318
        %v1351 = vmax.f32 %v1286, %v1319
        %v1352 = vmax.f32 %v1287, %v1320
        %v1353 = vmax.f32 %v1288, %v1321
        %v1354 = vmax.f32 %v1289, %v1322
        %v1355 = vmax.f32 %v1290, %v1323
        %v1356 = vmax.f32 %v1291, %v1324
        %v1357 = vmax.f32 %v1292, %v1325
        %v1358 = vmax.f32 %v1293, %v1326
        %v1359 = vmax.f32 %v1294, %v1327
        %1360 = vst.msk [vmem:[%s1036 + $0x2] sm:$0xff] %vm974, %v1328
        %1361 = vst.msk [vmem:[%s1036 + $0xa] sm:$0xff] %vm974, %v1329
        %1362 = vst.msk [vmem:[%s1036 + $0x1a] sm:$0xff] %vm974, %v1330
        %1363 = vst.msk [vmem:[%s1036 + $0x22] sm:$0xff] %vm974, %v1331
        %1364 = vst.msk [vmem:[%s1036 + $0x32] sm:$0xff] %vm974, %v1332
        %1365 = vst.msk [vmem:[%s1036 + $0x3a] sm:$0xff] %vm974, %v1333
        %1366 = vst.msk [vmem:[%s1036 + $0x4a] sm:$0xff] %vm974, %v1334
        %1367 = vst.msk [vmem:[%s1036 + $0x52] sm:$0xff] %vm974, %v1335
        %1368 = vst.msk [vmem:[%s1036 + $0x62] sm:$0xff] %vm974, %v1336
        %1369 = vst.msk [vmem:[%s1036 + $0x6a] sm:$0xff] %vm974, %v1337
        %1370 = vst.msk [vmem:[%s1036 + $0x7a] sm:$0xff] %vm974, %v1338
        %1371 = vst.msk [vmem:[%s1036 + $0x82] sm:$0xff] %vm974, %v1339
        %1372 = vst.msk [vmem:[%s1036 + $0x92] sm:$0xff] %vm974, %v1340
        %1373 = vst.msk [vmem:[%s1036 + $0x9a] sm:$0xff] %vm974, %v1341
        %1374 = vst.msk [vmem:[%s1036 + $0xaa] sm:$0xff] %vm974, %v1342
        %1375 = vst.msk [vmem:[%s1036 + $0xb2] sm:$0xff] %vm974, %v1343
        %1376 = vst.msk [vmem:[%s1036 + $0xc2] sm:$0xff] %vm974, %v1344
        %1377 = vst.msk [vmem:[%s1036 + $0xca] sm:$0xff] %vm974, %v1345
        %1378 = vst.msk [vmem:[%s1036 + $0xda] sm:$0xff] %vm974, %v1346
        %1379 = vst.msk [vmem:[%s1036 + $0xe2] sm:$0xff] %vm974, %v1347
        %1380 = vst.msk [vmem:[%s1036 + $0xf2] sm:$0xff] %vm974, %v1348
        %1381 = vst.msk [vmem:[%s1036 + $0xfa] sm:$0xff] %vm974, %v1349
        %1382 = vst.msk [vmem:[%s1036 + $0x10a] sm:$0xff] %vm974, %v1350
        %1383 = vst.msk [vmem:[%s1036 + $0x112] sm:$0xff] %vm974, %v1351
        %1384 = vst.msk [vmem:[%s1036 + $0x122] sm:$0xff] %vm974, %v1352
        %1385 = vst.msk [vmem:[%s1036 + $0x12a] sm:$0xff] %vm974, %v1353
        %1386 = vst.msk [vmem:[%s1036 + $0x13a] sm:$0xff] %vm974, %v1354
        %1387 = vst.msk [vmem:[%s1036 + $0x142] sm:$0xff] %vm974, %v1355
        %1388 = vst.msk [vmem:[%s1036 + $0x152] sm:$0xff] %vm974, %v1356
        %1389 = vst.msk [vmem:[%s1036 + $0x15a] sm:$0xff] %vm974, %v1357
        %1390 = vst.msk [vmem:[%s1036 + $0x16a] sm:$0xff] %vm974, %v1358
        %1391 = vst.msk [vmem:[%s1036 + $0x172] sm:$0xff] %vm974, %v1359
        %v1392 = vld [vmem:[%s1036] sm:$0xff]
        %v1393 = vld [vmem:[%s1036 + $0x8] sm:$0xff]
        %v1394 = vld [vmem:[%s1036 + $0x18] sm:$0xff]
        %v1395 = vld [vmem:[%s1036 + $0x20] sm:$0xff]
        %v1396 = vld [vmem:[%s1036 + $0x30] sm:$0xff]
        %v1397 = vld [vmem:[%s1036 + $0x38] sm:$0xff]
        %v1398 = vld [vmem:[%s1036 + $0x48] sm:$0xff]
        %v1399 = vld [vmem:[%s1036 + $0x50] sm:$0xff]
        %v1400 = vld [vmem:[%s1036 + $0x60] sm:$0xff]
        %v1401 = vld [vmem:[%s1036 + $0x68] sm:$0xff]
        %v1402 = vld [vmem:[%s1036 + $0x78] sm:$0xff]
        %v1403 = vld [vmem:[%s1036 + $0x80] sm:$0xff]
        %v1404 = vld [vmem:[%s1036 + $0x90] sm:$0xff]
        %v1405 = vld [vmem:[%s1036 + $0x98] sm:$0xff]
        %v1406 = vld [vmem:[%s1036 + $0xa8] sm:$0xff]
        %v1407 = vld [vmem:[%s1036 + $0xb0] sm:$0xff]
        %v1408 = vld [vmem:[%s1036 + $0xc0] sm:$0xff]
        %v1409 = vld [vmem:[%s1036 + $0xc8] sm:$0xff]
        %v1410 = vld [vmem:[%s1036 + $0xd8] sm:$0xff]
        %v1411 = vld [vmem:[%s1036 + $0xe0] sm:$0xff]
        %v1412 = vld [vmem:[%s1036 + $0xf0] sm:$0xff]
        %v1413 = vld [vmem:[%s1036 + $0xf8] sm:$0xff]
        %v1414 = vld [vmem:[%s1036 + $0x108] sm:$0xff]
        %v1415 = vld [vmem:[%s1036 + $0x110] sm:$0xff]
        %v1416 = vld [vmem:[%s1036 + $0x120] sm:$0xff]
        %v1417 = vld [vmem:[%s1036 + $0x128] sm:$0xff]
        %v1418 = vld [vmem:[%s1036 + $0x138] sm:$0xff]
        %v1419 = vld [vmem:[%s1036 + $0x140] sm:$0xff]
        %v1420 = vld [vmem:[%s1036 + $0x150] sm:$0xff]
        %v1421 = vld [vmem:[%s1036 + $0x158] sm:$0xff]
        %v1422 = vld [vmem:[%s1036 + $0x168] sm:$0xff]
        %v1423 = vld [vmem:[%s1036 + $0x170] sm:$0xff]
        %v1424 = vld [vmem:[%s1036 + $0x1] sm:$0xff]
        %v1425 = vld [vmem:[%s1036 + $0x9] sm:$0xff]
        %v1426 = vld [vmem:[%s1036 + $0x19] sm:$0xff]
        %v1427 = vld [vmem:[%s1036 + $0x21] sm:$0xff]
        %v1428 = vld [vmem:[%s1036 + $0x31] sm:$0xff]
        %v1429 = vld [vmem:[%s1036 + $0x39] sm:$0xff]
        %v1430 = vld [vmem:[%s1036 + $0x49] sm:$0xff]
        %v1431 = vld [vmem:[%s1036 + $0x51] sm:$0xff]
        %v1432 = vld [vmem:[%s1036 + $0x61] sm:$0xff]
        %v1433 = vld [vmem:[%s1036 + $0x69] sm:$0xff]
        %v1434 = vld [vmem:[%s1036 + $0x79] sm:$0xff]
        %v1435 = vld [vmem:[%s1036 + $0x81] sm:$0xff]
        %v1436 = vld [vmem:[%s1036 + $0x91] sm:$0xff]
        %v1437 = vld [vmem:[%s1036 + $0x99] sm:$0xff]
        %v1438 = vld [vmem:[%s1036 + $0xa9] sm:$0xff]
        %v1439 = vld [vmem:[%s1036 + $0xb1] sm:$0xff]
        %v1440 = vld [vmem:[%s1036 + $0xc1] sm:$0xff]
        %v1441 = vld [vmem:[%s1036 + $0xc9] sm:$0xff]
        %v1442 = vld [vmem:[%s1036 + $0xd9] sm:$0xff]
        %v1443 = vld [vmem:[%s1036 + $0xe1] sm:$0xff]
        %v1444 = vld [vmem:[%s1036 + $0xf1] sm:$0xff]
        %v1445 = vld [vmem:[%s1036 + $0xf9] sm:$0xff]
        %v1446 = vld [vmem:[%s1036 + $0x109] sm:$0xff]
        %v1447 = vld [vmem:[%s1036 + $0x111] sm:$0xff]
        %v1448 = vld [vmem:[%s1036 + $0x121] sm:$0xff]
        %v1449 = vld [vmem:[%s1036 + $0x129] sm:$0xff]
        %v1450 = vld [vmem:[%s1036 + $0x139] sm:$0xff]
        %v1451 = vld [vmem:[%s1036 + $0x141] sm:$0xff]
        %v1452 = vld [vmem:[%s1036 + $0x151] sm:$0xff]
        %v1453 = vld [vmem:[%s1036 + $0x159] sm:$0xff]
        %v1454 = vld [vmem:[%s1036 + $0x169] sm:$0xff]
        %v1455 = vld [vmem:[%s1036 + $0x171] sm:$0xff]
        %v1456 = vmax.f32 %v1392, %v1424
        %v1457 = vmax.f32 %v1393, %v1425
        %v1458 = vmax.f32 %v1394, %v1426
        %v1459 = vmax.f32 %v1395, %v1427
        %v1460 = vmax.f32 %v1396, %v1428
        %v1461 = vmax.f32 %v1397, %v1429
        %v1462 = vmax.f32 %v1398, %v1430
        %v1463 = vmax.f32 %v1399, %v1431
        %v1464 = vmax.f32 %v1400, %v1432
        %v1465 = vmax.f32 %v1401, %v1433
        %v1466 = vmax.f32 %v1402, %v1434
        %v1467 = vmax.f32 %v1403, %v1435
        %v1468 = vmax.f32 %v1404, %v1436
        %v1469 = vmax.f32 %v1405, %v1437
        %v1470 = vmax.f32 %v1406, %v1438
        %v1471 = vmax.f32 %v1407, %v1439
        %v1472 = vmax.f32 %v1408, %v1440
        %v1473 = vmax.f32 %v1409, %v1441
        %v1474 = vmax.f32 %v1410, %v1442
        %v1475 = vmax.f32 %v1411, %v1443
        %v1476 = vmax.f32 %v1412, %v1444
        %v1477 = vmax.f32 %v1413, %v1445
        %v1478 = vmax.f32 %v1414, %v1446
        %v1479 = vmax.f32 %v1415, %v1447
        %v1480 = vmax.f32 %v1416, %v1448
        %v1481 = vmax.f32 %v1417, %v1449
        %v1482 = vmax.f32 %v1418, %v1450
        %v1483 = vmax.f32 %v1419, %v1451
        %v1484 = vmax.f32 %v1420, %v1452
        %v1485 = vmax.f32 %v1421, %v1453
        %v1486 = vmax.f32 %v1422, %v1454
        %v1487 = vmax.f32 %v1423, %v1455
        %v1488 = vld [vmem:[%s1036 + $0x2] sm:$0xff]
        %v1489 = vld [vmem:[%s1036 + $0xa] sm:$0xff]
        %v1490 = vld [vmem:[%s1036 + $0x1a] sm:$0xff]
        %v1491 = vld [vmem:[%s1036 + $0x22] sm:$0xff]
        %v1492 = vld [vmem:[%s1036 + $0x32] sm:$0xff]
        %v1493 = vld [vmem:[%s1036 + $0x3a] sm:$0xff]
        %v1494 = vld [vmem:[%s1036 + $0x4a] sm:$0xff]
        %v1495 = vld [vmem:[%s1036 + $0x52] sm:$0xff]
        %v1496 = vld [vmem:[%s1036 + $0x62] sm:$0xff]
        %v1497 = vld [vmem:[%s1036 + $0x6a] sm:$0xff]
        %v1498 = vld [vmem:[%s1036 + $0x7a] sm:$0xff]
        %v1499 = vld [vmem:[%s1036 + $0x82] sm:$0xff]
        %v1500 = vld [vmem:[%s1036 + $0x92] sm:$0xff]
        %v1501 = vld [vmem:[%s1036 + $0x9a] sm:$0xff]
        %v1502 = vld [vmem:[%s1036 + $0xaa] sm:$0xff]
        %v1503 = vld [vmem:[%s1036 + $0xb2] sm:$0xff]
        %v1504 = vld [vmem:[%s1036 + $0xc2] sm:$0xff]
        %v1505 = vld [vmem:[%s1036 + $0xca] sm:$0xff]
        %v1506 = vld [vmem:[%s1036 + $0xda] sm:$0xff]
        %v1507 = vld [vmem:[%s1036 + $0xe2] sm:$0xff]
        %v1508 = vld [vmem:[%s1036 + $0xf2] sm:$0xff]
        %v1509 = vld [vmem:[%s1036 + $0xfa] sm:$0xff]
        %v1510 = vld [vmem:[%s1036 + $0x10a] sm:$0xff]
        %v1511 = vld [vmem:[%s1036 + $0x112] sm:$0xff]
        %v1512 = vld [vmem:[%s1036 + $0x122] sm:$0xff]
        %v1513 = vld [vmem:[%s1036 + $0x12a] sm:$0xff]
        %v1514 = vld [vmem:[%s1036 + $0x13a] sm:$0xff]
        %v1515 = vld [vmem:[%s1036 + $0x142] sm:$0xff]
        %v1516 = vld [vmem:[%s1036 + $0x152] sm:$0xff]
        %v1517 = vld [vmem:[%s1036 + $0x15a] sm:$0xff]
        %v1518 = vld [vmem:[%s1036 + $0x16a] sm:$0xff]
        %v1519 = vld [vmem:[%s1036 + $0x172] sm:$0xff]
        %v1520 = vmax.f32 %v1456, %v1488
        %v1521 = vmax.f32 %v1457, %v1489
        %v1522 = vmax.f32 %v1458, %v1490
        %v1523 = vmax.f32 %v1459, %v1491
        %v1524 = vmax.f32 %v1460, %v1492
        %v1525 = vmax.f32 %v1461, %v1493
        %v1526 = vmax.f32 %v1462, %v1494
        %v1527 = vmax.f32 %v1463, %v1495
        %v1528 = vmax.f32 %v1464, %v1496
        %v1529 = vmax.f32 %v1465, %v1497
        %v1530 = vmax.f32 %v1466, %v1498
        %v1531 = vmax.f32 %v1467, %v1499
        %v1532 = vmax.f32 %v1468, %v1500
        %v1533 = vmax.f32 %v1469, %v1501
        %v1534 = vmax.f32 %v1470, %v1502
        %v1535 = vmax.f32 %v1471, %v1503
        %v1536 = vmax.f32 %v1472, %v1504
        %v1537 = vmax.f32 %v1473, %v1505
        %v1538 = vmax.f32 %v1474, %v1506
        %v1539 = vmax.f32 %v1475, %v1507
        %v1540 = vmax.f32 %v1476, %v1508
        %v1541 = vmax.f32 %v1477, %v1509
        %v1542 = vmax.f32 %v1478, %v1510
        %v1543 = vmax.f32 %v1479, %v1511
        %v1544 = vmax.f32 %v1480, %v1512
        %v1545 = vmax.f32 %v1481, %v1513
        %v1546 = vmax.f32 %v1482, %v1514
        %v1547 = vmax.f32 %v1483, %v1515
        %v1548 = vmax.f32 %v1484, %v1516
        %v1549 = vmax.f32 %v1485, %v1517
        %v1550 = vmax.f32 %v1486, %v1518
        %v1551 = vmax.f32 %v1487, %v1519
        %v1552 = vld [vmem:[%s1036 + $0x3] sm:$0xff]
        %v1553 = vld [vmem:[%s1036 + $0xb] sm:$0xff]
        %v1554 = vld [vmem:[%s1036 + $0x1b] sm:$0xff]
        %v1555 = vld [vmem:[%s1036 + $0x23] sm:$0xff]
        %v1556 = vld [vmem:[%s1036 + $0x33] sm:$0xff]
        %v1557 = vld [vmem:[%s1036 + $0x3b] sm:$0xff]
        %v1558 = vld [vmem:[%s1036 + $0x4b] sm:$0xff]
        %v1559 = vld [vmem:[%s1036 + $0x53] sm:$0xff]
        %v1560 = vld [vmem:[%s1036 + $0x63] sm:$0xff]
        %v1561 = vld [vmem:[%s1036 + $0x6b] sm:$0xff]
        %v1562 = vld [vmem:[%s1036 + $0x7b] sm:$0xff]
        %v1563 = vld [vmem:[%s1036 + $0x83] sm:$0xff]
        %v1564 = vld [vmem:[%s1036 + $0x93] sm:$0xff]
        %v1565 = vld [vmem:[%s1036 + $0x9b] sm:$0xff]
        %v1566 = vld [vmem:[%s1036 + $0xab] sm:$0xff]
        %v1567 = vld [vmem:[%s1036 + $0xb3] sm:$0xff]
        %v1568 = vld [vmem:[%s1036 + $0xc3] sm:$0xff]
        %v1569 = vld [vmem:[%s1036 + $0xcb] sm:$0xff]
        %v1570 = vld [vmem:[%s1036 + $0xdb] sm:$0xff]
        %v1571 = vld [vmem:[%s1036 + $0xe3] sm:$0xff]
        %v1572 = vld [vmem:[%s1036 + $0xf3] sm:$0xff]
        %v1573 = vld [vmem:[%s1036 + $0xfb] sm:$0xff]
        %v1574 = vld [vmem:[%s1036 + $0x10b] sm:$0xff]
        %v1575 = vld [vmem:[%s1036 + $0x113] sm:$0xff]
        %v1576 = vld [vmem:[%s1036 + $0x123] sm:$0xff]
        %v1577 = vld [vmem:[%s1036 + $0x12b] sm:$0xff]
        %v1578 = vld [vmem:[%s1036 + $0x13b] sm:$0xff]
        %v1579 = vld [vmem:[%s1036 + $0x143] sm:$0xff]
        %v1580 = vld [vmem:[%s1036 + $0x153] sm:$0xff]
        %v1581 = vld [vmem:[%s1036 + $0x15b] sm:$0xff]
        %v1582 = vld [vmem:[%s1036 + $0x16b] sm:$0xff]
        %v1583 = vld [vmem:[%s1036 + $0x173] sm:$0xff]
        %v1584 = vmax.f32 %v1520, %v1552
        %v1585 = vmax.f32 %v1521, %v1553
        %v1586 = vmax.f32 %v1522, %v1554
        %v1587 = vmax.f32 %v1523, %v1555
        %v1588 = vmax.f32 %v1524, %v1556
        %v1589 = vmax.f32 %v1525, %v1557
        %v1590 = vmax.f32 %v1526, %v1558
        %v1591 = vmax.f32 %v1527, %v1559
        %v1592 = vmax.f32 %v1528, %v1560
        %v1593 = vmax.f32 %v1529, %v1561
        %v1594 = vmax.f32 %v1530, %v1562
        %v1595 = vmax.f32 %v1531, %v1563
        %v1596 = vmax.f32 %v1532, %v1564
        %v1597 = vmax.f32 %v1533, %v1565
        %v1598 = vmax.f32 %v1534, %v1566
        %v1599 = vmax.f32 %v1535, %v1567
        %v1600 = vmax.f32 %v1536, %v1568
        %v1601 = vmax.f32 %v1537, %v1569
        %v1602 = vmax.f32 %v1538, %v1570
        %v1603 = vmax.f32 %v1539, %v1571
        %v1604 = vmax.f32 %v1540, %v1572
        %v1605 = vmax.f32 %v1541, %v1573
        %v1606 = vmax.f32 %v1542, %v1574
        %v1607 = vmax.f32 %v1543, %v1575
        %v1608 = vmax.f32 %v1544, %v1576
        %v1609 = vmax.f32 %v1545, %v1577
        %v1610 = vmax.f32 %v1546, %v1578
        %v1611 = vmax.f32 %v1547, %v1579
        %v1612 = vmax.f32 %v1548, %v1580
        %v1613 = vmax.f32 %v1549, %v1581
        %v1614 = vmax.f32 %v1550, %v1582
        %v1615 = vmax.f32 %v1551, %v1583
        %v1616 = vld [vmem:[%s1036 + $0x4] sm:$0xff]
        %v1617 = vld [vmem:[%s1036 + $0xc] sm:$0xff]
        %v1618 = vld [vmem:[%s1036 + $0x1c] sm:$0xff]
        %v1619 = vld [vmem:[%s1036 + $0x24] sm:$0xff]
        %v1620 = vld [vmem:[%s1036 + $0x34] sm:$0xff]
        %v1621 = vld [vmem:[%s1036 + $0x3c] sm:$0xff]
        %v1622 = vld [vmem:[%s1036 + $0x4c] sm:$0xff]
        %v1623 = vld [vmem:[%s1036 + $0x54] sm:$0xff]
        %v1624 = vld [vmem:[%s1036 + $0x64] sm:$0xff]
        %v1625 = vld [vmem:[%s1036 + $0x6c] sm:$0xff]
        %v1626 = vld [vmem:[%s1036 + $0x7c] sm:$0xff]
        %v1627 = vld [vmem:[%s1036 + $0x84] sm:$0xff]
        %v1628 = vld [vmem:[%s1036 + $0x94] sm:$0xff]
        %v1629 = vld [vmem:[%s1036 + $0x9c] sm:$0xff]
        %v1630 = vld [vmem:[%s1036 + $0xac] sm:$0xff]
        %v1631 = vld [vmem:[%s1036 + $0xb4] sm:$0xff]
        %v1632 = vld [vmem:[%s1036 + $0xc4] sm:$0xff]
        %v1633 = vld [vmem:[%s1036 + $0xcc] sm:$0xff]
        %v1634 = vld [vmem:[%s1036 + $0xdc] sm:$0xff]
        %v1635 = vld [vmem:[%s1036 + $0xe4] sm:$0xff]
        %v1636 = vld [vmem:[%s1036 + $0xf4] sm:$0xff]
        %v1637 = vld [vmem:[%s1036 + $0xfc] sm:$0xff]
        %v1638 = vld [vmem:[%s1036 + $0x10c] sm:$0xff]
        %v1639 = vld [vmem:[%s1036 + $0x114] sm:$0xff]
        %v1640 = vld [vmem:[%s1036 + $0x124] sm:$0xff]
        %v1641 = vld [vmem:[%s1036 + $0x12c] sm:$0xff]
        %v1642 = vld [vmem:[%s1036 + $0x13c] sm:$0xff]
        %v1643 = vld [vmem:[%s1036 + $0x144] sm:$0xff]
        %v1644 = vld [vmem:[%s1036 + $0x154] sm:$0xff]
        %v1645 = vld [vmem:[%s1036 + $0x15c] sm:$0xff]
        %v1646 = vld [vmem:[%s1036 + $0x16c] sm:$0xff]
        %v1647 = vld [vmem:[%s1036 + $0x174] sm:$0xff]
        %v1648 = vmax.f32 %v1584, %v1616
        %v1649 = vmax.f32 %v1585, %v1617
        %v1650 = vmax.f32 %v1586, %v1618
        %v1651 = vmax.f32 %v1587, %v1619
        %v1652 = vmax.f32 %v1588, %v1620
        %v1653 = vmax.f32 %v1589, %v1621
        %v1654 = vmax.f32 %v1590, %v1622
        %v1655 = vmax.f32 %v1591, %v1623
        %v1656 = vmax.f32 %v1592, %v1624
        %v1657 = vmax.f32 %v1593, %v1625
        %v1658 = vmax.f32 %v1594, %v1626
        %v1659 = vmax.f32 %v1595, %v1627
        %v1660 = vmax.f32 %v1596, %v1628
        %v1661 = vmax.f32 %v1597, %v1629
        %v1662 = vmax.f32 %v1598, %v1630
        %v1663 = vmax.f32 %v1599, %v1631
        %v1664 = vmax.f32 %v1600, %v1632
        %v1665 = vmax.f32 %v1601, %v1633
        %v1666 = vmax.f32 %v1602, %v1634
        %v1667 = vmax.f32 %v1603, %v1635
        %v1668 = vmax.f32 %v1604, %v1636
        %v1669 = vmax.f32 %v1605, %v1637
        %v1670 = vmax.f32 %v1606, %v1638
        %v1671 = vmax.f32 %v1607, %v1639
        %v1672 = vmax.f32 %v1608, %v1640
        %v1673 = vmax.f32 %v1609, %v1641
        %v1674 = vmax.f32 %v1610, %v1642
        %v1675 = vmax.f32 %v1611, %v1643
        %v1676 = vmax.f32 %v1612, %v1644
        %v1677 = vmax.f32 %v1613, %v1645
        %v1678 = vmax.f32 %v1614, %v1646
        %v1679 = vmax.f32 %v1615, %v1647
        %s1680 = scalar_lea.vmem [#allocation6], 16
        %v1681 = vld [vmem:[%s1680] sm:$0xff]
        %v1682 = vld [vmem:[%s1680 + $0x8] sm:$0xff]
        %v1684 = vsel %vm974, %v1648, 0
        %v1687 = vsel %vm974, %v1649, 0
        %v1690 = vsel %vm974, %v1650, 0
        %v1693 = vsel %vm974, %v1651, 0
        %v1696 = vsel %vm974, %v1652, 0
        %v1699 = vsel %vm974, %v1653, 0
        %v1702 = vsel %vm974, %v1654, 0
        %v1705 = vsel %vm974, %v1655, 0
        %v1708 = vsel %vm974, %v1656, 0
        %v1711 = vsel %vm974, %v1657, 0
        %v1714 = vsel %vm974, %v1658, 0
        %v1717 = vsel %vm974, %v1659, 0
        %v1720 = vsel %vm974, %v1660, 0
        %v1723 = vsel %vm974, %v1661, 0
        %v1726 = vsel %vm974, %v1662, 0
        %v1729 = vsel %vm974, %v1663, 0
        %v1732 = vsel %vm974, %v1664, 0
        %v1735 = vsel %vm974, %v1665, 0
        %v1738 = vsel %vm974, %v1666, 0
        %v1741 = vsel %vm974, %v1667, 0
        %v1744 = vsel %vm974, %v1668, 0
        %v1747 = vsel %vm974, %v1669, 0
        %v1750 = vsel %vm974, %v1670, 0
        %v1753 = vsel %vm974, %v1671, 0
        %v1756 = vsel %vm974, %v1672, 0
        %v1759 = vsel %vm974, %v1673, 0
        %v1762 = vsel %vm974, %v1674, 0
        %v1765 = vsel %vm974, %v1675, 0
        %v1768 = vsel %vm974, %v1676, 0
        %v1771 = vsel %vm974, %v1677, 0
        %v1774 = vsel %vm974, %v1678, 0
        %v1777 = vsel %vm974, %v1679, 0
        %1779 = vmatprep.subr.mxu0 0.0
        %1780 = vmatpush1.msra.mxu0 %v1681
        %1781 = vmatprep.subr.mxu0 0.0
        %1782 = vmatpush1.msra.mxu0 %v1682
        %1783 = vmatprep.subr.mxu0 0.0
        %1784 = vmatpush1.msra.mxu0 0.0
        %1785 = vmatprep.subr.mxu0 0.0
        %1786 = vmatpush1.msra.mxu0 0.0
        %1787 = vmatprep.subr.mxu0 0.0
        %1788 = vmatpush1.msra.mxu0 0.0
        %1789 = vmatprep.subr.mxu0 0.0
        %1790 = vmatpush1.msra.mxu0 0.0
        %1791 = vmatprep.subr.mxu0 0.0
        %1792 = vmatpush1.msra.mxu0 0.0
        %1793 = vmatprep.subr.mxu0 0.0
        %1794 = vmatpush1.msra.mxu0 0.0
        %1795 = vmatprep.subr.mxu0 0.0
        %1796 = vmatpush1.msra.mxu0 0.0
        %1797 = vmatprep.subr.mxu0 0.0
        %1798 = vmatpush1.msra.mxu0 0.0
        %1799 = vmatprep.subr.mxu0 0.0
        %1800 = vmatpush1.msra.mxu0 0.0
        %1801 = vmatprep.subr.mxu0 0.0
        %1802 = vmatpush1.msra.mxu0 0.0
        %1803 = vmatprep.subr.mxu0 0.0
        %1804 = vmatpush1.msra.mxu0 0.0
        %1805 = vmatprep.subr.mxu0 0.0
        %1806 = vmatpush1.msra.mxu0 0.0
        %1807 = vmatprep.subr.mxu0 0.0
        %1808 = vmatpush1.msra.mxu0 0.0
        %1809 = vmatprep.subr.mxu0 0.0
        %1810 = vmatpush1.msra.mxu0 0.0
        %1811 = vmatprep.subr.mxu0 0.0
        %1812 = vmatpush1.msra.mxu0 0.0
        %1813 = vmatprep.subr.mxu0 0.0
        %1814 = vmatpush1.msra.mxu0 0.0
        %1815 = vmatprep.subr.mxu0 0.0
        %1816 = vmatpush1.msra.mxu0 0.0
        %1817 = vmatprep.subr.mxu0 0.0
        %1818 = vmatpush1.msra.mxu0 0.0
        %1819 = vmatprep.subr.mxu0 0.0
        %1820 = vmatpush1.msra.mxu0 0.0
        %1821 = vmatprep.subr.mxu0 0.0
        %1822 = vmatpush1.msra.mxu0 0.0
        %1823 = vmatprep.subr.mxu0 0.0
        %1824 = vmatpush1.msra.mxu0 0.0
        %1825 = vmatprep.subr.mxu0 0.0
        %1826 = vmatpush1.msra.mxu0 0.0
        %1827 = vmatprep.subr.mxu0 0.0
        %1828 = vmatpush1.msra.mxu0 0.0
        %1829 = vmatprep.subr.mxu0 0.0
        %1830 = vmatpush1.msra.mxu0 0.0
        %1831 = vmatprep.subr.mxu0 0.0
        %1832 = vmatpush1.msra.mxu0 0.0
        %1833 = vmatprep.subr.mxu0 0.0
        %1834 = vmatpush1.msra.mxu0 0.0
        %1835 = vmatprep.subr.mxu0 0.0
        %1836 = vmatpush1.msra.mxu0 0.0
        %1837 = vmatprep.subr.mxu0 0.0
        %1838 = vmatpush1.msra.mxu0 0.0
        %1839 = vmatprep.subr.mxu0 0.0
        %1840 = vmatpush1.msra.mxu0 0.0
        %1841 = vmatprep.subr.mxu0 0.0
        %1842 = vmatpush1.msra.mxu0 0.0
        %1843 = vmatprep.mubr.f32.mxu0 0.0
        %1844 = vmatmul.mubr.f32.gmra.mrb[0].mxu0 %v1684
        %v1845 = vpop.f32.mrb[0].mxu0
        %v1846 = vadd.f32 0.0, %v1845
        %v1847 = vpop.f32.mrb[0].mxu0
        %1848 = vmatprep.mubr.f32.mxu0 0.0
        %1849 = vmatmul.mubr.f32.gmra.mrb[0].mxu0 %v1687
        %v1850 = vpop.f32.mrb[0].mxu0
        %v1851 = vadd.f32 0.0, %v1850
        %v1852 = vpop.f32.mrb[0].mxu0
        %1853 = vmatprep.mubr.f32.mxu0 0.0
        %1854 = vmatmul.mubr.f32.gmra.mrb[0].mxu0 %v1690
        %v1855 = vpop.f32.mrb[0].mxu0
        %v1856 = vadd.f32 0.0, %v1855
        %v1857 = vpop.f32.mrb[0].mxu0
        %1858 = vmatprep.mubr.f32.mxu0 0.0
        %1859 = vmatmul.mubr.f32.gmra.mrb[0].mxu0 %v1693
        %v1860 = vpop.f32.mrb[0].mxu0
        %v1861 = vadd.f32 0.0, %v1860
        %v1862 = vpop.f32.mrb[0].mxu0
        %1863 = vmatprep.mubr.f32.mxu0 0.0
        %1864 = vmatmul.mubr.f32.gmra.mrb[0].mxu0 %v1696
        %v1865 = vpop.f32.mrb[0].mxu0
        %v1866 = vadd.f32 0.0, %v1865
        %v1867 = vpop.f32.mrb[0].mxu0
        %1868 = vmatprep.mubr.f32.mxu0 0.0
        %1869 = vmatmul.mubr.f32.gmra.mrb[0].mxu0 %v1699
        %v1870 = vpop.f32.mrb[0].mxu0
        %v1871 = vadd.f32 0.0, %v1870
        %v1872 = vpop.f32.mrb[0].mxu0
        %1873 = vmatprep.mubr.f32.mxu0 0.0
        %1874 = vmatmul.mubr.f32.gmra.mrb[0].mxu0 %v1702
        %v1875 = vpop.f32.mrb[0].mxu0
        %v1876 = vadd.f32 0.0, %v1875
        %v1877 = vpop.f32.mrb[0].mxu0
        %1878 = vmatprep.mubr.f32.mxu0 0.0
        %1879 = vmatmul.mubr.f32.gmra.mrb[0].mxu0 %v1705
        %v1880 = vpop.f32.mrb[0].mxu0
        %v1881 = vadd.f32 0.0, %v1880
        %v1882 = vpop.f32.mrb[0].mxu0
        %1883 = vmatprep.mubr.f32.mxu0 0.0
        %1884 = vmatmul.mubr.f32.gmra.mrb[0].mxu0 %v1708
        %v1885 = vpop.f32.mrb[0].mxu0
        %v1886 = vadd.f32 0.0, %v1885
        %v1887 = vpop.f32.mrb[0].mxu0
        %1888 = vmatprep.mubr.f32.mxu0 0.0
        %1889 = vmatmul.mubr.f32.gmra.mrb[0].mxu0 %v1711
        %v1890 = vpop.f32.mrb[0].mxu0
        %v1891 = vadd.f32 0.0, %v1890
        %v1892 = vpop.f32.mrb[0].mxu0
        %1893 = vmatprep.mubr.f32.mxu0 0.0
        %1894 = vmatmul.mubr.f32.gmra.mrb[0].mxu0 %v1714
        %v1895 = vpop.f32.mrb[0].mxu0
        %v1896 = vadd.f32 0.0, %v1895
        %v1897 = vpop.f32.mrb[0].mxu0
        %1898 = vmatprep.mubr.f32.mxu0 0.0
        %1899 = vmatmul.mubr.f32.gmra.mrb[0].mxu0 %v1717
        %v1900 = vpop.f32.mrb[0].mxu0
        %v1901 = vadd.f32 0.0, %v1900
        %v1902 = vpop.f32.mrb[0].mxu0
        %1903 = vmatprep.mubr.f32.mxu0 0.0
        %1904 = vmatmul.mubr.f32.gmra.mrb[0].mxu0 %v1720
        %v1905 = vpop.f32.mrb[0].mxu0
        %v1906 = vadd.f32 0.0, %v1905
        %v1907 = vpop.f32.mrb[0].mxu0
        %1908 = vmatprep.mubr.f32.mxu0 0.0
        %1909 = vmatmul.mubr.f32.gmra.mrb[0].mxu0 %v1723
        %v1910 = vpop.f32.mrb[0].mxu0
        %v1911 = vadd.f32 0.0, %v1910
        %v1912 = vpop.f32.mrb[0].mxu0
        %1913 = vmatprep.mubr.f32.mxu0 0.0
        %1914 = vmatmul.mubr.f32.gmra.mrb[0].mxu0 %v1726
        %v1915 = vpop.f32.mrb[0].mxu0
        %v1916 = vadd.f32 0.0, %v1915
        %v1917 = vpop.f32.mrb[0].mxu0
        %1918 = vmatprep.mubr.f32.mxu0 0.0
        %1919 = vmatmul.mubr.f32.gmra.mrb[0].mxu0 %v1729
        %v1920 = vpop.f32.mrb[0].mxu0
        %v1921 = vadd.f32 0.0, %v1920
        %v1922 = vpop.f32.mrb[0].mxu0
        %1923 = vmatprep.mubr.f32.mxu0 0.0
        %1924 = vmatmul.mubr.f32.gmra.mrb[0].mxu0 %v1732
        %v1925 = vpop.f32.mrb[0].mxu0
        %v1926 = vadd.f32 0.0, %v1925
        %v1927 = vpop.f32.mrb[0].mxu0
        %1928 = vmatprep.mubr.f32.mxu0 0.0
        %1929 = vmatmul.mubr.f32.gmra.mrb[0].mxu0 %v1735
        %v1930 = vpop.f32.mrb[0].mxu0
        %v1931 = vadd.f32 0.0, %v1930
        %v1932 = vpop.f32.mrb[0].mxu0
        %1933 = vmatprep.mubr.f32.mxu0 0.0
        %1934 = vmatmul.mubr.f32.gmra.mrb[0].mxu0 %v1738
        %v1935 = vpop.f32.mrb[0].mxu0
        %v1936 = vadd.f32 0.0, %v1935
        %v1937 = vpop.f32.mrb[0].mxu0
        %1938 = vmatprep.mubr.f32.mxu0 0.0
        %1939 = vmatmul.mubr.f32.gmra.mrb[0].mxu0 %v1741
        %v1940 = vpop.f32.mrb[0].mxu0
        %v1941 = vadd.f32 0.0, %v1940
        %v1942 = vpop.f32.mrb[0].mxu0
        %1943 = vmatprep.mubr.f32.mxu0 0.0
        %1944 = vmatmul.mubr.f32.gmra.mrb[0].mxu0 %v1744
        %v1945 = vpop.f32.mrb[0].mxu0
        %v1946 = vadd.f32 0.0, %v1945
        %v1947 = vpop.f32.mrb[0].mxu0
        %1948 = vmatprep.mubr.f32.mxu0 0.0
        %1949 = vmatmul.mubr.f32.gmra.mrb[0].mxu0 %v1747
        %v1950 = vpop.f32.mrb[0].mxu0
        %v1951 = vadd.f32 0.0, %v1950
        %v1952 = vpop.f32.mrb[0].mxu0
        %1953 = vmatprep.mubr.f32.mxu0 0.0
        %1954 = vmatmul.mubr.f32.gmra.mrb[0].mxu0 %v1750
        %v1955 = vpop.f32.mrb[0].mxu0
        %v1956 = vadd.f32 0.0, %v1955
        %v1957 = vpop.f32.mrb[0].mxu0
        %1958 = vmatprep.mubr.f32.mxu0 0.0
        %1959 = vmatmul.mubr.f32.gmra.mrb[0].mxu0 %v1753
        %v1960 = vpop.f32.mrb[0].mxu0
        %v1961 = vadd.f32 0.0, %v1960
        %v1962 = vpop.f32.mrb[0].mxu0
        %1963 = vmatprep.mubr.f32.mxu0 0.0
        %1964 = vmatmul.mubr.f32.gmra.mrb[0].mxu0 %v1756
        %v1965 = vpop.f32.mrb[0].mxu0
        %v1966 = vadd.f32 0.0, %v1965
        %v1967 = vpop.f32.mrb[0].mxu0
        %1968 = vmatprep.mubr.f32.mxu0 0.0
        %1969 = vmatmul.mubr.f32.gmra.mrb[0].mxu0 %v1759
        %v1970 = vpop.f32.mrb[0].mxu0
        %v1971 = vadd.f32 0.0, %v1970
        %v1972 = vpop.f32.mrb[0].mxu0
        %1973 = vmatprep.mubr.f32.mxu0 0.0
        %1974 = vmatmul.mubr.f32.gmra.mrb[0].mxu0 %v1762
        %v1975 = vpop.f32.mrb[0].mxu0
        %v1976 = vadd.f32 0.0, %v1975
        %v1977 = vpop.f32.mrb[0].mxu0
        %1978 = vmatprep.mubr.f32.mxu0 0.0
        %1979 = vmatmul.mubr.f32.gmra.mrb[0].mxu0 %v1765
        %v1980 = vpop.f32.mrb[0].mxu0
        %v1981 = vadd.f32 0.0, %v1980
        %v1982 = vpop.f32.mrb[0].mxu0
        %1983 = vmatprep.mubr.f32.mxu0 0.0
        %1984 = vmatmul.mubr.f32.gmra.mrb[0].mxu0 %v1768
        %v1985 = vpop.f32.mrb[0].mxu0
        %v1986 = vadd.f32 0.0, %v1985
        %v1987 = vpop.f32.mrb[0].mxu0
        %1988 = vmatprep.mubr.f32.mxu0 0.0
        %1989 = vmatmul.mubr.f32.gmra.mrb[0].mxu0 %v1771
        %v1990 = vpop.f32.mrb[0].mxu0
        %v1991 = vadd.f32 0.0, %v1990
        %v1992 = vpop.f32.mrb[0].mxu0
        %1993 = vmatprep.mubr.f32.mxu0 0.0
        %1994 = vmatmul.mubr.f32.gmra.mrb[0].mxu0 %v1774
        %v1995 = vpop.f32.mrb[0].mxu0
        %v1996 = vadd.f32 0.0, %v1995
        %v1997 = vpop.f32.mrb[0].mxu0
        %1998 = vmatprep.mubr.f32.mxu0 0.0
        %1999 = vmatmul.mubr.f32.gmra.mrb[0].mxu0 %v1777
        %v2000 = vpop.f32.mrb[0].mxu0
        %v2001 = vadd.f32 0.0, %v2000
        %v2002 = vpop.f32.mrb[0].mxu0
        %2003 = vdwg.mxu0
        %v2005 = vsel %vm974, %v940, 0
        %v2008 = vsel %vm974, %v941, 0
        %v2011 = vsel %vm974, %v942, 0
        %v2014 = vsel %vm974, %v943, 0
        %v2017 = vsel %vm974, %v944, 0
        %v2020 = vsel %vm974, %v945, 0
        %v2023 = vsel %vm974, %v946, 0
        %v2026 = vsel %vm974, %v947, 0
        %v2029 = vsel %vm974, %v948, 0
        %v2032 = vsel %vm974, %v949, 0
        %v2035 = vsel %vm974, %v950, 0
        %v2038 = vsel %vm974, %v951, 0
        %v2041 = vsel %vm974, %v952, 0
        %v2044 = vsel %vm974, %v953, 0
        %v2047 = vsel %vm974, %v954, 0
        %v2050 = vsel %vm974, %v955, 0
        %v2053 = vsel %vm974, %v956, 0
        %v2056 = vsel %vm974, %v957, 0
        %v2059 = vsel %vm974, %v958, 0
        %v2062 = vsel %vm974, %v959, 0
        %v2065 = vsel %vm974, %v960, 0
        %v2068 = vsel %vm974, %v961, 0
        %v2071 = vsel %vm974, %v962, 0
        %v2074 = vsel %vm974, %v963, 0
        %v2077 = vsel %vm974, %v964, 0
        %v2080 = vsel %vm974, %v965, 0
        %v2083 = vsel %vm974, %v966, 0
        %v2086 = vsel %vm974, %v967, 0
        %v2089 = vsel %vm974, %v968, 0
        %v2092 = vsel %vm974, %v969, 0
        %v2095 = vsel %vm974, %v970, 0
        %v2098 = vsel %vm974, %v971, 0
        %2100 = vmatprep.subr.mxu0 0.0
        %2101 = vmatpush1.msra.mxu0 %v972
        %2102 = vmatprep.subr.mxu0 0.0
        %2103 = vmatpush1.msra.mxu0 %v973
        %2104 = vmatprep.subr.mxu0 0.0
        %2105 = vmatpush1.msra.mxu0 0.0
        %2106 = vmatprep.subr.mxu0 0.0
        %2107 = vmatpush1.msra.mxu0 0.0
        %2108 = vmatprep.subr.mxu0 0.0
        %2109 = vmatpush1.msra.mxu0 0.0
        %2110 = vmatprep.subr.mxu0 0.0
        %2111 = vmatpush1.msra.mxu0 0.0
        %2112 = vmatprep.subr.mxu0 0.0
        %2113 = vmatpush1.msra.mxu0 0.0
        %2114 = vmatprep.subr.mxu0 0.0
        %2115 = vmatpush1.msra.mxu0 0.0
        %2116 = vmatprep.subr.mxu0 0.0
        %2117 = vmatpush1.msra.mxu0 0.0
        %2118 = vmatprep.subr.mxu0 0.0
        %2119 = vmatpush1.msra.mxu0 0.0
        %2120 = vmatprep.subr.mxu0 0.0
        %2121 = vmatpush1.msra.mxu0 0.0
        %2122 = vmatprep.subr.mxu0 0.0
        %2123 = vmatpush1.msra.mxu0 0.0
        %2124 = vmatprep.subr.mxu0 0.0
        %2125 = vmatpush1.msra.mxu0 0.0
        %2126 = vmatprep.subr.mxu0 0.0
        %2127 = vmatpush1.msra.mxu0 0.0
        %2128 = vmatprep.subr.mxu0 0.0
        %2129 = vmatpush1.msra.mxu0 0.0
        %2130 = vmatprep.subr.mxu0 0.0
        %2131 = vmatpush1.msra.mxu0 0.0
        %2132 = vmatprep.subr.mxu0 0.0
        %2133 = vmatpush1.msra.mxu0 0.0
        %2134 = vmatprep.subr.mxu0 0.0
        %2135 = vmatpush1.msra.mxu0 0.0
        %2136 = vmatprep.subr.mxu0 0.0
        %2137 = vmatpush1.msra.mxu0 0.0
        %2138 = vmatprep.subr.mxu0 0.0
        %2139 = vmatpush1.msra.mxu0 0.0
        %2140 = vmatprep.subr.mxu0 0.0
        %2141 = vmatpush1.msra.mxu0 0.0
        %2142 = vmatprep.subr.mxu0 0.0
        %2143 = vmatpush1.msra.mxu0 0.0
        %2144 = vmatprep.subr.mxu0 0.0
        %2145 = vmatpush1.msra.mxu0 0.0
        %2146 = vmatprep.subr.mxu0 0.0
        %2147 = vmatpush1.msra.mxu0 0.0
        %2148 = vmatprep.subr.mxu0 0.0
        %2149 = vmatpush1.msra.mxu0 0.0
        %2150 = vmatprep.subr.mxu0 0.0
        %2151 = vmatpush1.msra.mxu0 0.0
        %2152 = vmatprep.subr.mxu0 0.0
        %2153 = vmatpush1.msra.mxu0 0.0
        %2154 = vmatprep.subr.mxu0 0.0
        %2155 = vmatpush1.msra.mxu0 0.0
        %2156 = vmatprep.subr.mxu0 0.0
        %2157 = vmatpush1.msra.mxu0 0.0
        %2158 = vmatprep.subr.mxu0 0.0
        %2159 = vmatpush1.msra.mxu0 0.0
        %2160 = vmatprep.subr.mxu0 0.0
        %2161 = vmatpush1.msra.mxu0 0.0
        %2162 = vmatprep.subr.mxu0 0.0
        %2163 = vmatpush1.msra.mxu0 0.0
        %2164 = vmatprep.mubr.f32.mxu0 0.0
        %2165 = vmatmul.mubr.f32.gmra.mrb[0].mxu0 %v2005
        %v2166 = vpop.f32.mrb[0].mxu0
        %v2167 = vadd.f32 %v1846, %v2166
        %v2168 = vpop.f32.mrb[0].mxu0
        %2169 = vmatprep.mubr.f32.mxu0 0.0
        %2170 = vmatmul.mubr.f32.gmra.mrb[0].mxu0 %v2008
        %v2171 = vpop.f32.mrb[0].mxu0
        %v2172 = vadd.f32 %v1851, %v2171
        %v2173 = vpop.f32.mrb[0].mxu0
        %2174 = vmatprep.mubr.f32.mxu0 0.0
        %2175 = vmatmul.mubr.f32.gmra.mrb[0].mxu0 %v2011
        %v2176 = vpop.f32.mrb[0].mxu0
        %v2177 = vadd.f32 %v1856, %v2176
        %v2178 = vpop.f32.mrb[0].mxu0
        %2179 = vmatprep.mubr.f32.mxu0 0.0
        %2180 = vmatmul.mubr.f32.gmra.mrb[0].mxu0 %v2014
        %v2181 = vpop.f32.mrb[0].mxu0
        %v2182 = vadd.f32 %v1861, %v2181
        %v2183 = vpop.f32.mrb[0].mxu0
        %2184 = vmatprep.mubr.f32.mxu0 0.0
        %2185 = vmatmul.mubr.f32.gmra.mrb[0].mxu0 %v2017
        %v2186 = vpop.f32.mrb[0].mxu0
        %v2187 = vadd.f32 %v1866, %v2186
        %v2188 = vpop.f32.mrb[0].mxu0
        %2189 = vmatprep.mubr.f32.mxu0 0.0
        %2190 = vmatmul.mubr.f32.gmra.mrb[0].mxu0 %v2020
        %v2191 = vpop.f32.mrb[0].mxu0
        %v2192 = vadd.f32 %v1871, %v2191
        %v2193 = vpop.f32.mrb[0].mxu0
        %2194 = vmatprep.mubr.f32.mxu0 0.0
        %2195 = vmatmul.mubr.f32.gmra.mrb[0].mxu0 %v2023
        %v2196 = vpop.f32.mrb[0].mxu0
        %v2197 = vadd.f32 %v1876, %v2196
        %v2198 = vpop.f32.mrb[0].mxu0
        %2199 = vmatprep.mubr.f32.mxu0 0.0
        %2200 = vmatmul.mubr.f32.gmra.mrb[0].mxu0 %v2026
        %v2201 = vpop.f32.mrb[0].mxu0
        %v2202 = vadd.f32 %v1881, %v2201
        %v2203 = vpop.f32.mrb[0].mxu0
        %2204 = vmatprep.mubr.f32.mxu0 0.0
        %2205 = vmatmul.mubr.f32.gmra.mrb[0].mxu0 %v2029
        %v2206 = vpop.f32.mrb[0].mxu0
        %v2207 = vadd.f32 %v1886, %v2206
        %v2208 = vpop.f32.mrb[0].mxu0
        %2209 = vmatprep.mubr.f32.mxu0 0.0
        %2210 = vmatmul.mubr.f32.gmra.mrb[0].mxu0 %v2032
        %v2211 = vpop.f32.mrb[0].mxu0
        %v2212 = vadd.f32 %v1891, %v2211
        %v2213 = vpop.f32.mrb[0].mxu0
        %2214 = vmatprep.mubr.f32.mxu0 0.0
        %2215 = vmatmul.mubr.f32.gmra.mrb[0].mxu0 %v2035
        %v2216 = vpop.f32.mrb[0].mxu0
        %v2217 = vadd.f32 %v1896, %v2216
        %v2218 = vpop.f32.mrb[0].mxu0
        %2219 = vmatprep.mubr.f32.mxu0 0.0
        %2220 = vmatmul.mubr.f32.gmra.mrb[0].mxu0 %v2038
        %v2221 = vpop.f32.mrb[0].mxu0
        %v2222 = vadd.f32 %v1901, %v2221
        %v2223 = vpop.f32.mrb[0].mxu0
        %2224 = vmatprep.mubr.f32.mxu0 0.0
        %2225 = vmatmul.mubr.f32.gmra.mrb[0].mxu0 %v2041
        %v2226 = vpop.f32.mrb[0].mxu0
        %v2227 = vadd.f32 %v1906, %v2226
        %v2228 = vpop.f32.mrb[0].mxu0
        %2229 = vmatprep.mubr.f32.mxu0 0.0
        %2230 = vmatmul.mubr.f32.gmra.mrb[0].mxu0 %v2044
        %v2231 = vpop.f32.mrb[0].mxu0
        %v2232 = vadd.f32 %v1911, %v2231
        %v2233 = vpop.f32.mrb[0].mxu0
        %2234 = vmatprep.mubr.f32.mxu0 0.0
        %2235 = vmatmul.mubr.f32.gmra.mrb[0].mxu0 %v2047
        %v2236 = vpop.f32.mrb[0].mxu0
        %v2237 = vadd.f32 %v1916, %v2236
        %v2238 = vpop.f32.mrb[0].mxu0
        %2239 = vmatprep.mubr.f32.mxu0 0.0
        %2240 = vmatmul.mubr.f32.gmra.mrb[0].mxu0 %v2050
        %v2241 = vpop.f32.mrb[0].mxu0
        %v2242 = vadd.f32 %v1921, %v2241
        %v2243 = vpop.f32.mrb[0].mxu0
        %2244 = vmatprep.mubr.f32.mxu0 0.0
        %2245 = vmatmul.mubr.f32.gmra.mrb[0].mxu0 %v2053
        %v2246 = vpop.f32.mrb[0].mxu0
        %v2247 = vadd.f32 %v1926, %v2246
        %v2248 = vpop.f32.mrb[0].mxu0
        %2249 = vmatprep.mubr.f32.mxu0 0.0
        %2250 = vmatmul.mubr.f32.gmra.mrb[0].mxu0 %v2056
        %v2251 = vpop.f32.mrb[0].mxu0
        %v2252 = vadd.f32 %v1931, %v2251
        %v2253 = vpop.f32.mrb[0].mxu0
        %2254 = vmatprep.mubr.f32.mxu0 0.0
        %2255 = vmatmul.mubr.f32.gmra.mrb[0].mxu0 %v2059
        %v2256 = vpop.f32.mrb[0].mxu0
        %v2257 = vadd.f32 %v1936, %v2256
        %v2258 = vpop.f32.mrb[0].mxu0
        %2259 = vmatprep.mubr.f32.mxu0 0.0
        %2260 = vmatmul.mubr.f32.gmra.mrb[0].mxu0 %v2062
        %v2261 = vpop.f32.mrb[0].mxu0
        %v2262 = vadd.f32 %v1941, %v2261
        %v2263 = vpop.f32.mrb[0].mxu0
        %2264 = vmatprep.mubr.f32.mxu0 0.0
        %2265 = vmatmul.mubr.f32.gmra.mrb[0].mxu0 %v2065
        %v2266 = vpop.f32.mrb[0].mxu0
        %v2267 = vadd.f32 %v1946, %v2266
        %v2268 = vpop.f32.mrb[0].mxu0
        %2269 = vmatprep.mubr.f32.mxu0 0.0
        %2270 = vmatmul.mubr.f32.gmra.mrb[0].mxu0 %v2068
        %v2271 = vpop.f32.mrb[0].mxu0
        %v2272 = vadd.f32 %v1951, %v2271
        %v2273 = vpop.f32.mrb[0].mxu0
        %2274 = vmatprep.mubr.f32.mxu0 0.0
        %2275 = vmatmul.mubr.f32.gmra.mrb[0].mxu0 %v2071
        %v2276 = vpop.f32.mrb[0].mxu0
        %v2277 = vadd.f32 %v1956, %v2276
        %v2278 = vpop.f32.mrb[0].mxu0
        %2279 = vmatprep.mubr.f32.mxu0 0.0
        %2280 = vmatmul.mubr.f32.gmra.mrb[0].mxu0 %v2074
        %v2281 = vpop.f32.mrb[0].mxu0
        %v2282 = vadd.f32 %v1961, %v2281
        %v2283 = vpop.f32.mrb[0].mxu0
        %2284 = vmatprep.mubr.f32.mxu0 0.0
        %2285 = vmatmul.mubr.f32.gmra.mrb[0].mxu0 %v2077
        %v2286 = vpop.f32.mrb[0].mxu0
        %v2287 = vadd.f32 %v1966, %v2286
        %v2288 = vpop.f32.mrb[0].mxu0
        %2289 = vmatprep.mubr.f32.mxu0 0.0
        %2290 = vmatmul.mubr.f32.gmra.mrb[0].mxu0 %v2080
        %v2291 = vpop.f32.mrb[0].mxu0
        %v2292 = vadd.f32 %v1971, %v2291
        %v2293 = vpop.f32.mrb[0].mxu0
        %2294 = vmatprep.mubr.f32.mxu0 0.0
        %2295 = vmatmul.mubr.f32.gmra.mrb[0].mxu0 %v2083
        %v2296 = vpop.f32.mrb[0].mxu0
        %v2297 = vadd.f32 %v1976, %v2296
        %v2298 = vpop.f32.mrb[0].mxu0
        %2299 = vmatprep.mubr.f32.mxu0 0.0
        %2300 = vmatmul.mubr.f32.gmra.mrb[0].mxu0 %v2086
        %v2301 = vpop.f32.mrb[0].mxu0
        %v2302 = vadd.f32 %v1981, %v2301
        %v2303 = vpop.f32.mrb[0].mxu0
        %2304 = vmatprep.mubr.f32.mxu0 0.0
        %2305 = vmatmul.mubr.f32.gmra.mrb[0].mxu0 %v2089
        %v2306 = vpop.f32.mrb[0].mxu0
        %v2307 = vadd.f32 %v1986, %v2306
        %v2308 = vpop.f32.mrb[0].mxu0
        %2309 = vmatprep.mubr.f32.mxu0 0.0
        %2310 = vmatmul.mubr.f32.gmra.mrb[0].mxu0 %v2092
        %v2311 = vpop.f32.mrb[0].mxu0
        %v2312 = vadd.f32 %v1991, %v2311
        %v2313 = vpop.f32.mrb[0].mxu0
        %2314 = vmatprep.mubr.f32.mxu0 0.0
        %2315 = vmatmul.mubr.f32.gmra.mrb[0].mxu0 %v2095
        %v2316 = vpop.f32.mrb[0].mxu0
        %v2317 = vadd.f32 %v1996, %v2316
        %v2318 = vpop.f32.mrb[0].mxu0
        %2319 = vmatprep.mubr.f32.mxu0 0.0
        %2320 = vmatmul.mubr.f32.gmra.mrb[0].mxu0 %v2098
        %v2321 = vpop.f32.mrb[0].mxu0
        %v2322 = vadd.f32 %v2001, %v2321
        %v2323 = vpop.f32.mrb[0].mxu0
        %2324 = vdwg.mxu0
        %2325 = vst.msk [vmem:[%s1036 + $0x2] sm:$0xff] %vm974, %v1648
        %2326 = vst.msk [vmem:[%s1036 + $0xa] sm:$0xff] %vm974, %v1649
        %2327 = vst.msk [vmem:[%s1036 + $0x1a] sm:$0xff] %vm974, %v1650
        %2328 = vst.msk [vmem:[%s1036 + $0x22] sm:$0xff] %vm974, %v1651
        %2329 = vst.msk [vmem:[%s1036 + $0x32] sm:$0xff] %vm974, %v1652
        %2330 = vst.msk [vmem:[%s1036 + $0x3a] sm:$0xff] %vm974, %v1653
        %2331 = vst.msk [vmem:[%s1036 + $0x4a] sm:$0xff] %vm974, %v1654
        %2332 = vst.msk [vmem:[%s1036 + $0x52] sm:$0xff] %vm974, %v1655
        %2333 = vst.msk [vmem:[%s1036 + $0x62] sm:$0xff] %vm974, %v1656
        %2334 = vst.msk [vmem:[%s1036 + $0x6a] sm:$0xff] %vm974, %v1657
        %2335 = vst.msk [vmem:[%s1036 + $0x7a] sm:$0xff] %vm974, %v1658
        %2336 = vst.msk [vmem:[%s1036 + $0x82] sm:$0xff] %vm974, %v1659
        %2337 = vst.msk [vmem:[%s1036 + $0x92] sm:$0xff] %vm974, %v1660
        %2338 = vst.msk [vmem:[%s1036 + $0x9a] sm:$0xff] %vm974, %v1661
        %2339 = vst.msk [vmem:[%s1036 + $0xaa] sm:$0xff] %vm974, %v1662
        %2340 = vst.msk [vmem:[%s1036 + $0xb2] sm:$0xff] %vm974, %v1663
        %2341 = vst.msk [vmem:[%s1036 + $0xc2] sm:$0xff] %vm974, %v1664
        %2342 = vst.msk [vmem:[%s1036 + $0xca] sm:$0xff] %vm974, %v1665
        %2343 = vst.msk [vmem:[%s1036 + $0xda] sm:$0xff] %vm974, %v1666
        %2344 = vst.msk [vmem:[%s1036 + $0xe2] sm:$0xff] %vm974, %v1667
        %2345 = vst.msk [vmem:[%s1036 + $0xf2] sm:$0xff] %vm974, %v1668
        %2346 = vst.msk [vmem:[%s1036 + $0xfa] sm:$0xff] %vm974, %v1669
        %2347 = vst.msk [vmem:[%s1036 + $0x10a] sm:$0xff] %vm974, %v1670
        %2348 = vst.msk [vmem:[%s1036 + $0x112] sm:$0xff] %vm974, %v1671
        %2349 = vst.msk [vmem:[%s1036 + $0x122] sm:$0xff] %vm974, %v1672
        %2350 = vst.msk [vmem:[%s1036 + $0x12a] sm:$0xff] %vm974, %v1673
        %2351 = vst.msk [vmem:[%s1036 + $0x13a] sm:$0xff] %vm974, %v1674
        %2352 = vst.msk [vmem:[%s1036 + $0x142] sm:$0xff] %vm974, %v1675
        %2353 = vst.msk [vmem:[%s1036 + $0x152] sm:$0xff] %vm974, %v1676
        %2354 = vst.msk [vmem:[%s1036 + $0x15a] sm:$0xff] %vm974, %v1677
        %2355 = vst.msk [vmem:[%s1036 + $0x16a] sm:$0xff] %vm974, %v1678
        %2356 = vst.msk [vmem:[%s1036 + $0x172] sm:$0xff] %vm974, %v1679
        %v2357 = vld [vmem:[#allocation2 + $0x2] sm:$0xff]
        %v2358 = vld [vmem:[#allocation2 + $0xa] sm:$0xff]
        %v2359 = vld [vmem:[#allocation2 + $0x1a] sm:$0xff]
        %v2360 = vld [vmem:[#allocation2 + $0x22] sm:$0xff]
        %v2361 = vld [vmem:[#allocation2 + $0x32] sm:$0xff]
        %v2362 = vld [vmem:[#allocation2 + $0x3a] sm:$0xff]
        %v2363 = vld [vmem:[#allocation2 + $0x4a] sm:$0xff]
        %v2364 = vld [vmem:[#allocation2 + $0x52] sm:$0xff]
        %v2365 = vld [vmem:[#allocation2 + $0x62] sm:$0xff]
        %v2366 = vld [vmem:[#allocation2 + $0x6a] sm:$0xff]
        %v2367 = vld [vmem:[#allocation2 + $0x7a] sm:$0xff]
        %v2368 = vld [vmem:[#allocation2 + $0x82] sm:$0xff]
        %v2369 = vld [vmem:[#allocation2 + $0x92] sm:$0xff]
        %v2370 = vld [vmem:[#allocation2 + $0x9a] sm:$0xff]
        %v2371 = vld [vmem:[#allocation2 + $0xaa] sm:$0xff]
        %v2372 = vld [vmem:[#allocation2 + $0xb2] sm:$0xff]
        %v2373 = vld [vmem:[#allocation2 + $0xc2] sm:$0xff]
        %v2374 = vld [vmem:[#allocation2 + $0xca] sm:$0xff]
        %v2375 = vld [vmem:[#allocation2 + $0xda] sm:$0xff]
        %v2376 = vld [vmem:[#allocation2 + $0xe2] sm:$0xff]
        %v2377 = vld [vmem:[#allocation2 + $0xf2] sm:$0xff]
        %v2378 = vld [vmem:[#allocation2 + $0xfa] sm:$0xff]
        %v2379 = vld [vmem:[#allocation2 + $0x10a] sm:$0xff]
        %v2380 = vld [vmem:[#allocation2 + $0x112] sm:$0xff]
        %v2381 = vld [vmem:[#allocation2 + $0x122] sm:$0xff]
        %v2382 = vld [vmem:[#allocation2 + $0x12a] sm:$0xff]
        %v2383 = vld [vmem:[#allocation2 + $0x13a] sm:$0xff]
        %v2384 = vld [vmem:[#allocation2 + $0x142] sm:$0xff]
        %v2385 = vld [vmem:[#allocation2 + $0x152] sm:$0xff]
        %v2386 = vld [vmem:[#allocation2 + $0x15a] sm:$0xff]
        %v2387 = vld [vmem:[#allocation2 + $0x16a] sm:$0xff]
        %v2388 = vld [vmem:[#allocation2 + $0x172] sm:$0xff]
        %v2389 = vld [vmem:[%s1101 + $0x2] sm:$0xff]
        %v2390 = vld [vmem:[%s1101 + $0xa] sm:$0xff]
        %v2391 = vld [vmem:[%s1101 + $0x1a] sm:$0xff]
        %v2392 = vld [vmem:[%s1101 + $0x22] sm:$0xff]
        %v2393 = vld [vmem:[%s1101 + $0x32] sm:$0xff]
        %v2394 = vld [vmem:[%s1101 + $0x3a] sm:$0xff]
        %v2395 = vld [vmem:[%s1101 + $0x4a] sm:$0xff]
        %v2396 = vld [vmem:[%s1101 + $0x52] sm:$0xff]
        %v2397 = vld [vmem:[%s1101 + $0x62] sm:$0xff]
        %v2398 = vld [vmem:[%s1101 + $0x6a] sm:$0xff]
        %v2399 = vld [vmem:[%s1101 + $0x7a] sm:$0xff]
        %v2400 = vld [vmem:[%s1101 + $0x82] sm:$0xff]
        %v2401 = vld [vmem:[%s1101 + $0x92] sm:$0xff]
        %v2402 = vld [vmem:[%s1101 + $0x9a] sm:$0xff]
        %v2403 = vld [vmem:[%s1101 + $0xaa] sm:$0xff]
        %v2404 = vld [vmem:[%s1101 + $0xb2] sm:$0xff]
        %v2405 = vld [vmem:[%s1101 + $0xc2] sm:$0xff]
        %v2406 = vld [vmem:[%s1101 + $0xca] sm:$0xff]
        %v2407 = vld [vmem:[%s1101 + $0xda] sm:$0xff]
        %v2408 = vld [vmem:[%s1101 + $0xe2] sm:$0xff]
        %v2409 = vld [vmem:[%s1101 + $0xf2] sm:$0xff]
        %v2410 = vld [vmem:[%s1101 + $0xfa] sm:$0xff]
        %v2411 = vld [vmem:[%s1101 + $0x10a] sm:$0xff]
        %v2412 = vld [vmem:[%s1101 + $0x112] sm:$0xff]
        %v2413 = vld [vmem:[%s1101 + $0x122] sm:$0xff]
        %v2414 = vld [vmem:[%s1101 + $0x12a] sm:$0xff]
        %v2415 = vld [vmem:[%s1101 + $0x13a] sm:$0xff]
        %v2416 = vld [vmem:[%s1101 + $0x142] sm:$0xff]
        %v2417 = vld [vmem:[%s1101 + $0x152] sm:$0xff]
        %v2418 = vld [vmem:[%s1101 + $0x15a] sm:$0xff]
        %v2419 = vld [vmem:[%s1101 + $0x16a] sm:$0xff]
        %v2420 = vld [vmem:[%s1101 + $0x172] sm:$0xff]
        %v2421 = vmax.f32 %v2357, %v2389
        %v2422 = vmax.f32 %v2358, %v2390
        %v2423 = vmax.f32 %v2359, %v2391
        %v2424 = vmax.f32 %v2360, %v2392
        %v2425 = vmax.f32 %v2361, %v2393
        %v2426 = vmax.f32 %v2362, %v2394
        %v2427 = vmax.f32 %v2363, %v2395
        %v2428 = vmax.f32 %v2364, %v2396
        %v2429 = vmax.f32 %v2365, %v2397
        %v2430 = vmax.f32 %v2366, %v2398
        %v2431 = vmax.f32 %v2367, %v2399
        %v2432 = vmax.f32 %v2368, %v2400
        %v2433 = vmax.f32 %v2369, %v2401
        %v2434 = vmax.f32 %v2370, %v2402
        %v2435 = vmax.f32 %v2371, %v2403
        %v2436 = vmax.f32 %v2372, %v2404
        %v2437 = vmax.f32 %v2373, %v2405
        %v2438 = vmax.f32 %v2374, %v2406
        %v2439 = vmax.f32 %v2375, %v2407
        %v2440 = vmax.f32 %v2376, %v2408
        %v2441 = vmax.f32 %v2377, %v2409
        %v2442 = vmax.f32 %v2378, %v2410
        %v2443 = vmax.f32 %v2379, %v2411
        %v2444 = vmax.f32 %v2380, %v2412
        %v2445 = vmax.f32 %v2381, %v2413
        %v2446 = vmax.f32 %v2382, %v2414
        %v2447 = vmax.f32 %v2383, %v2415
        %v2448 = vmax.f32 %v2384, %v2416
        %v2449 = vmax.f32 %v2385, %v2417
        %v2450 = vmax.f32 %v2386, %v2418
        %v2451 = vmax.f32 %v2387, %v2419
        %v2452 = vmax.f32 %v2388, %v2420
        %v2453 = vld [vmem:[%s1036 + $0x2] sm:$0xff]
        %v2454 = vld [vmem:[%s1036 + $0xa] sm:$0xff]
        %v2455 = vld [vmem:[%s1036 + $0x1a] sm:$0xff]
        %v2456 = vld [vmem:[%s1036 + $0x22] sm:$0xff]
        %v2457 = vld [vmem:[%s1036 + $0x32] sm:$0xff]
        %v2458 = vld [vmem:[%s1036 + $0x3a] sm:$0xff]
        %v2459 = vld [vmem:[%s1036 + $0x4a] sm:$0xff]
        %v2460 = vld [vmem:[%s1036 + $0x52] sm:$0xff]
        %v2461 = vld [vmem:[%s1036 + $0x62] sm:$0xff]
        %v2462 = vld [vmem:[%s1036 + $0x6a] sm:$0xff]
        %v2463 = vld [vmem:[%s1036 + $0x7a] sm:$0xff]
        %v2464 = vld [vmem:[%s1036 + $0x82] sm:$0xff]
        %v2465 = vld [vmem:[%s1036 + $0x92] sm:$0xff]
        %v2466 = vld [vmem:[%s1036 + $0x9a] sm:$0xff]
        %v2467 = vld [vmem:[%s1036 + $0xaa] sm:$0xff]
        %v2468 = vld [vmem:[%s1036 + $0xb2] sm:$0xff]
        %v2469 = vld [vmem:[%s1036 + $0xc2] sm:$0xff]
        %v2470 = vld [vmem:[%s1036 + $0xca] sm:$0xff]
        %v2471 = vld [vmem:[%s1036 + $0xda] sm:$0xff]
        %v2472 = vld [vmem:[%s1036 + $0xe2] sm:$0xff]
        %v2473 = vld [vmem:[%s1036 + $0xf2] sm:$0xff]
        %v2474 = vld [vmem:[%s1036 + $0xfa] sm:$0xff]
        %v2475 = vld [vmem:[%s1036 + $0x10a] sm:$0xff]
        %v2476 = vld [vmem:[%s1036 + $0x112] sm:$0xff]
        %v2477 = vld [vmem:[%s1036 + $0x122] sm:$0xff]
        %v2478 = vld [vmem:[%s1036 + $0x12a] sm:$0xff]
        %v2479 = vld [vmem:[%s1036 + $0x13a] sm:$0xff]
        %v2480 = vld [vmem:[%s1036 + $0x142] sm:$0xff]
        %v2481 = vld [vmem:[%s1036 + $0x152] sm:$0xff]
        %v2482 = vld [vmem:[%s1036 + $0x15a] sm:$0xff]
        %v2483 = vld [vmem:[%s1036 + $0x16a] sm:$0xff]
        %v2484 = vld [vmem:[%s1036 + $0x172] sm:$0xff]
        %v2485 = vmax.f32 %v2421, %v2453
        %v2486 = vmax.f32 %v2422, %v2454
        %v2487 = vmax.f32 %v2423, %v2455
        %v2488 = vmax.f32 %v2424, %v2456
        %v2489 = vmax.f32 %v2425, %v2457
        %v2490 = vmax.f32 %v2426, %v2458
        %v2491 = vmax.f32 %v2427, %v2459
        %v2492 = vmax.f32 %v2428, %v2460
        %v2493 = vmax.f32 %v2429, %v2461
        %v2494 = vmax.f32 %v2430, %v2462
        %v2495 = vmax.f32 %v2431, %v2463
        %v2496 = vmax.f32 %v2432, %v2464
        %v2497 = vmax.f32 %v2433, %v2465
        %v2498 = vmax.f32 %v2434, %v2466
        %v2499 = vmax.f32 %v2435, %v2467
        %v2500 = vmax.f32 %v2436, %v2468
        %v2501 = vmax.f32 %v2437, %v2469
        %v2502 = vmax.f32 %v2438, %v2470
        %v2503 = vmax.f32 %v2439, %v2471
        %v2504 = vmax.f32 %v2440, %v2472
        %v2505 = vmax.f32 %v2441, %v2473
        %v2506 = vmax.f32 %v2442, %v2474
        %v2507 = vmax.f32 %v2443, %v2475
        %v2508 = vmax.f32 %v2444, %v2476
        %v2509 = vmax.f32 %v2445, %v2477
        %v2510 = vmax.f32 %v2446, %v2478
        %v2511 = vmax.f32 %v2447, %v2479
        %v2512 = vmax.f32 %v2448, %v2480
        %v2513 = vmax.f32 %v2449, %v2481
        %v2514 = vmax.f32 %v2450, %v2482
        %v2515 = vmax.f32 %v2451, %v2483
        %v2516 = vmax.f32 %v2452, %v2484
        %v2517 = vld [vmem:[%s1230 + $0x2] sm:$0xff]
        %v2518 = vld [vmem:[%s1230 + $0xa] sm:$0xff]
        %v2519 = vld [vmem:[%s1230 + $0x1a] sm:$0xff]
        %v2520 = vld [vmem:[%s1230 + $0x22] sm:$0xff]
        %v2521 = vld [vmem:[%s1230 + $0x32] sm:$0xff]
        %v2522 = vld [vmem:[%s1230 + $0x3a] sm:$0xff]
        %v2523 = vld [vmem:[%s1230 + $0x4a] sm:$0xff]
        %v2524 = vld [vmem:[%s1230 + $0x52] sm:$0xff]
        %v2525 = vld [vmem:[%s1230 + $0x62] sm:$0xff]
        %v2526 = vld [vmem:[%s1230 + $0x6a] sm:$0xff]
        %v2527 = vld [vmem:[%s1230 + $0x7a] sm:$0xff]
        %v2528 = vld [vmem:[%s1230 + $0x82] sm:$0xff]
        %v2529 = vld [vmem:[%s1230 + $0x92] sm:$0xff]
        %v2530 = vld [vmem:[%s1230 + $0x9a] sm:$0xff]
        %v2531 = vld [vmem:[%s1230 + $0xaa] sm:$0xff]
        %v2532 = vld [vmem:[%s1230 + $0xb2] sm:$0xff]
        %v2533 = vld [vmem:[%s1230 + $0xc2] sm:$0xff]
        %v2534 = vld [vmem:[%s1230 + $0xca] sm:$0xff]
        %v2535 = vld [vmem:[%s1230 + $0xda] sm:$0xff]
        %v2536 = vld [vmem:[%s1230 + $0xe2] sm:$0xff]
        %v2537 = vld [vmem:[%s1230 + $0xf2] sm:$0xff]
        %v2538 = vld [vmem:[%s1230 + $0xfa] sm:$0xff]
        %v2539 = vld [vmem:[%s1230 + $0x10a] sm:$0xff]
        %v2540 = vld [vmem:[%s1230 + $0x112] sm:$0xff]
        %v2541 = vld [vmem:[%s1230 + $0x122] sm:$0xff]
        %v2542 = vld [vmem:[%s1230 + $0x12a] sm:$0xff]
        %v2543 = vld [vmem:[%s1230 + $0x13a] sm:$0xff]
        %v2544 = vld [vmem:[%s1230 + $0x142] sm:$0xff]
        %v2545 = vld [vmem:[%s1230 + $0x152] sm:$0xff]
        %v2546 = vld [vmem:[%s1230 + $0x15a] sm:$0xff]
        %v2547 = vld [vmem:[%s1230 + $0x16a] sm:$0xff]
        %v2548 = vld [vmem:[%s1230 + $0x172] sm:$0xff]
        %v2549 = vmax.f32 %v2485, %v2517
        %v2550 = vmax.f32 %v2486, %v2518
        %v2551 = vmax.f32 %v2487, %v2519
        %v2552 = vmax.f32 %v2488, %v2520
        %v2553 = vmax.f32 %v2489, %v2521
        %v2554 = vmax.f32 %v2490, %v2522
        %v2555 = vmax.f32 %v2491, %v2523
        %v2556 = vmax.f32 %v2492, %v2524
        %v2557 = vmax.f32 %v2493, %v2525
        %v2558 = vmax.f32 %v2494, %v2526
        %v2559 = vmax.f32 %v2495, %v2527
        %v2560 = vmax.f32 %v2496, %v2528
        %v2561 = vmax.f32 %v2497, %v2529
        %v2562 = vmax.f32 %v2498, %v2530
        %v2563 = vmax.f32 %v2499, %v2531
        %v2564 = vmax.f32 %v2500, %v2532
        %v2565 = vmax.f32 %v2501, %v2533
        %v2566 = vmax.f32 %v2502, %v2534
        %v2567 = vmax.f32 %v2503, %v2535
        %v2568 = vmax.f32 %v2504, %v2536
        %v2569 = vmax.f32 %v2505, %v2537
        %v2570 = vmax.f32 %v2506, %v2538
        %v2571 = vmax.f32 %v2507, %v2539
        %v2572 = vmax.f32 %v2508, %v2540
        %v2573 = vmax.f32 %v2509, %v2541
        %v2574 = vmax.f32 %v2510, %v2542
        %v2575 = vmax.f32 %v2511, %v2543
        %v2576 = vmax.f32 %v2512, %v2544
        %v2577 = vmax.f32 %v2513, %v2545
        %v2578 = vmax.f32 %v2514, %v2546
        %v2579 = vmax.f32 %v2515, %v2547
        %v2580 = vmax.f32 %v2516, %v2548
        %v2581 = vld [vmem:[%s1295 + $0x2] sm:$0xff]
        %v2582 = vld [vmem:[%s1295 + $0xa] sm:$0xff]
        %v2583 = vld [vmem:[%s1295 + $0x1a] sm:$0xff]
        %v2584 = vld [vmem:[%s1295 + $0x22] sm:$0xff]
        %v2585 = vld [vmem:[%s1295 + $0x32] sm:$0xff]
        %v2586 = vld [vmem:[%s1295 + $0x3a] sm:$0xff]
        %v2587 = vld [vmem:[%s1295 + $0x4a] sm:$0xff]
        %v2588 = vld [vmem:[%s1295 + $0x52] sm:$0xff]
        %v2589 = vld [vmem:[%s1295 + $0x62] sm:$0xff]
        %v2590 = vld [vmem:[%s1295 + $0x6a] sm:$0xff]
        %v2591 = vld [vmem:[%s1295 + $0x7a] sm:$0xff]
        %v2592 = vld [vmem:[%s1295 + $0x82] sm:$0xff]
        %v2593 = vld [vmem:[%s1295 + $0x92] sm:$0xff]
        %v2594 = vld [vmem:[%s1295 + $0x9a] sm:$0xff]
        %v2595 = vld [vmem:[%s1295 + $0xaa] sm:$0xff]
        %v2596 = vld [vmem:[%s1295 + $0xb2] sm:$0xff]
        %v2597 = vld [vmem:[%s1295 + $0xc2] sm:$0xff]
        %v2598 = vld [vmem:[%s1295 + $0xca] sm:$0xff]
        %v2599 = vld [vmem:[%s1295 + $0xda] sm:$0xff]
        %v2600 = vld [vmem:[%s1295 + $0xe2] sm:$0xff]
        %v2601 = vld [vmem:[%s1295 + $0xf2] sm:$0xff]
        %v2602 = vld [vmem:[%s1295 + $0xfa] sm:$0xff]
        %v2603 = vld [vmem:[%s1295 + $0x10a] sm:$0xff]
        %v2604 = vld [vmem:[%s1295 + $0x112] sm:$0xff]
        %v2605 = vld [vmem:[%s1295 + $0x122] sm:$0xff]
        %v2606 = vld [vmem:[%s1295 + $0x12a] sm:$0xff]
        %v2607 = vld [vmem:[%s1295 + $0x13a] sm:$0xff]
        %v2608 = vld [vmem:[%s1295 + $0x142] sm:$0xff]
        %v2609 = vld [vmem:[%s1295 + $0x152] sm:$0xff]
        %v2610 = vld [vmem:[%s1295 + $0x15a] sm:$0xff]
        %v2611 = vld [vmem:[%s1295 + $0x16a] sm:$0xff]
        %v2612 = vld [vmem:[%s1295 + $0x172] sm:$0xff]
        %v2613 = vmax.f32 %v2549, %v2581
        %v2614 = vmax.f32 %v2550, %v2582
        %v2615 = vmax.f32 %v2551, %v2583
        %v2616 = vmax.f32 %v2552, %v2584
        %v2617 = vmax.f32 %v2553, %v2585
        %v2618 = vmax.f32 %v2554, %v2586
        %v2619 = vmax.f32 %v2555, %v2587
        %v2620 = vmax.f32 %v2556, %v2588
        %v2621 = vmax.f32 %v2557, %v2589
        %v2622 = vmax.f32 %v2558, %v2590
        %v2623 = vmax.f32 %v2559, %v2591
        %v2624 = vmax.f32 %v2560, %v2592
        %v2625 = vmax.f32 %v2561, %v2593
        %v2626 = vmax.f32 %v2562, %v2594
        %v2627 = vmax.f32 %v2563, %v2595
        %v2628 = vmax.f32 %v2564, %v2596
        %v2629 = vmax.f32 %v2565, %v2597
        %v2630 = vmax.f32 %v2566, %v2598
        %v2631 = vmax.f32 %v2567, %v2599
        %v2632 = vmax.f32 %v2568, %v2600
        %v2633 = vmax.f32 %v2569, %v2601
        %v2634 = vmax.f32 %v2570, %v2602
        %v2635 = vmax.f32 %v2571, %v2603
        %v2636 = vmax.f32 %v2572, %v2604
        %v2637 = vmax.f32 %v2573, %v2605
        %v2638 = vmax.f32 %v2574, %v2606
        %v2639 = vmax.f32 %v2575, %v2607
        %v2640 = vmax.f32 %v2576, %v2608
        %v2641 = vmax.f32 %v2577, %v2609
        %v2642 = vmax.f32 %v2578, %v2610
        %v2643 = vmax.f32 %v2579, %v2611
        %v2644 = vmax.f32 %v2580, %v2612
        %2645 = vst.msk [vmem:[%s1036 + $0x2] sm:$0xff] %vm974, %v2613
        %2646 = vst.msk [vmem:[%s1036 + $0xa] sm:$0xff] %vm974, %v2614
        %2647 = vst.msk [vmem:[%s1036 + $0x1a] sm:$0xff] %vm974, %v2615
        %2648 = vst.msk [vmem:[%s1036 + $0x22] sm:$0xff] %vm974, %v2616
        %2649 = vst.msk [vmem:[%s1036 + $0x32] sm:$0xff] %vm974, %v2617
        %2650 = vst.msk [vmem:[%s1036 + $0x3a] sm:$0xff] %vm974, %v2618
        %2651 = vst.msk [vmem:[%s1036 + $0x4a] sm:$0xff] %vm974, %v2619
        %2652 = vst.msk [vmem:[%s1036 + $0x52] sm:$0xff] %vm974, %v2620
        %2653 = vst.msk [vmem:[%s1036 + $0x62] sm:$0xff] %vm974, %v2621
        %2654 = vst.msk [vmem:[%s1036 + $0x6a] sm:$0xff] %vm974, %v2622
        %2655 = vst.msk [vmem:[%s1036 + $0x7a] sm:$0xff] %vm974, %v2623
        %2656 = vst.msk [vmem:[%s1036 + $0x82] sm:$0xff] %vm974, %v2624
        %2657 = vst.msk [vmem:[%s1036 + $0x92] sm:$0xff] %vm974, %v2625
        %2658 = vst.msk [vmem:[%s1036 + $0x9a] sm:$0xff] %vm974, %v2626
        %2659 = vst.msk [vmem:[%s1036 + $0xaa] sm:$0xff] %vm974, %v2627
        %2660 = vst.msk [vmem:[%s1036 + $0xb2] sm:$0xff] %vm974, %v2628
        %2661 = vst.msk [vmem:[%s1036 + $0xc2] sm:$0xff] %vm974, %v2629
        %2662 = vst.msk [vmem:[%s1036 + $0xca] sm:$0xff] %vm974, %v2630
        %2663 = vst.msk [vmem:[%s1036 + $0xda] sm:$0xff] %vm974, %v2631
        %2664 = vst.msk [vmem:[%s1036 + $0xe2] sm:$0xff] %vm974, %v2632
        %2665 = vst.msk [vmem:[%s1036 + $0xf2] sm:$0xff] %vm974, %v2633
        %2666 = vst.msk [vmem:[%s1036 + $0xfa] sm:$0xff] %vm974, %v2634
        %2667 = vst.msk [vmem:[%s1036 + $0x10a] sm:$0xff] %vm974, %v2635
        %2668 = vst.msk [vmem:[%s1036 + $0x112] sm:$0xff] %vm974, %v2636
        %2669 = vst.msk [vmem:[%s1036 + $0x122] sm:$0xff] %vm974, %v2637
        %2670 = vst.msk [vmem:[%s1036 + $0x12a] sm:$0xff] %vm974, %v2638
        %2671 = vst.msk [vmem:[%s1036 + $0x13a] sm:$0xff] %vm974, %v2639
        %2672 = vst.msk [vmem:[%s1036 + $0x142] sm:$0xff] %vm974, %v2640
        %2673 = vst.msk [vmem:[%s1036 + $0x152] sm:$0xff] %vm974, %v2641
        %2674 = vst.msk [vmem:[%s1036 + $0x15a] sm:$0xff] %vm974, %v2642
        %2675 = vst.msk [vmem:[%s1036 + $0x16a] sm:$0xff] %vm974, %v2643
        %2676 = vst.msk [vmem:[%s1036 + $0x172] sm:$0xff] %vm974, %v2644
        %v2677 = vld [vmem:[%s1036] sm:$0xff]
        %v2678 = vld [vmem:[%s1036 + $0x8] sm:$0xff]
        %v2679 = vld [vmem:[%s1036 + $0x18] sm:$0xff]
        %v2680 = vld [vmem:[%s1036 + $0x20] sm:$0xff]
        %v2681 = vld [vmem:[%s1036 + $0x30] sm:$0xff]
        %v2682 = vld [vmem:[%s1036 + $0x38] sm:$0xff]
        %v2683 = vld [vmem:[%s1036 + $0x48] sm:$0xff]
        %v2684 = vld [vmem:[%s1036 + $0x50] sm:$0xff]
        %v2685 = vld [vmem:[%s1036 + $0x60] sm:$0xff]
        %v2686 = vld [vmem:[%s1036 + $0x68] sm:$0xff]
        %v2687 = vld [vmem:[%s1036 + $0x78] sm:$0xff]
        %v2688 = vld [vmem:[%s1036 + $0x80] sm:$0xff]
        %v2689 = vld [vmem:[%s1036 + $0x90] sm:$0xff]
        %v2690 = vld [vmem:[%s1036 + $0x98] sm:$0xff]
        %v2691 = vld [vmem:[%s1036 + $0xa8] sm:$0xff]
        %v2692 = vld [vmem:[%s1036 + $0xb0] sm:$0xff]
        %v2693 = vld [vmem:[%s1036 + $0xc0] sm:$0xff]
        %v2694 = vld [vmem:[%s1036 + $0xc8] sm:$0xff]
        %v2695 = vld [vmem:[%s1036 + $0xd8] sm:$0xff]
        %v2696 = vld [vmem:[%s1036 + $0xe0] sm:$0xff]
        %v2697 = vld [vmem:[%s1036 + $0xf0] sm:$0xff]
        %v2698 = vld [vmem:[%s1036 + $0xf8] sm:$0xff]
        %v2699 = vld [vmem:[%s1036 + $0x108] sm:$0xff]
        %v2700 = vld [vmem:[%s1036 + $0x110] sm:$0xff]
        %v2701 = vld [vmem:[%s1036 + $0x120] sm:$0xff]
        %v2702 = vld [vmem:[%s1036 + $0x128] sm:$0xff]
        %v2703 = vld [vmem:[%s1036 + $0x138] sm:$0xff]
        %v2704 = vld [vmem:[%s1036 + $0x140] sm:$0xff]
        %v2705 = vld [vmem:[%s1036 + $0x150] sm:$0xff]
        %v2706 = vld [vmem:[%s1036 + $0x158] sm:$0xff]
        %v2707 = vld [vmem:[%s1036 + $0x168] sm:$0xff]
        %v2708 = vld [vmem:[%s1036 + $0x170] sm:$0xff]
        %v2709 = vld [vmem:[%s1036 + $0x1] sm:$0xff]
        %v2710 = vld [vmem:[%s1036 + $0x9] sm:$0xff]
        %v2711 = vld [vmem:[%s1036 + $0x19] sm:$0xff]
        %v2712 = vld [vmem:[%s1036 + $0x21] sm:$0xff]
        %v2713 = vld [vmem:[%s1036 + $0x31] sm:$0xff]
        %v2714 = vld [vmem:[%s1036 + $0x39] sm:$0xff]
        %v2715 = vld [vmem:[%s1036 + $0x49] sm:$0xff]
        %v2716 = vld [vmem:[%s1036 + $0x51] sm:$0xff]
        %v2717 = vld [vmem:[%s1036 + $0x61] sm:$0xff]
        %v2718 = vld [vmem:[%s1036 + $0x69] sm:$0xff]
        %v2719 = vld [vmem:[%s1036 + $0x79] sm:$0xff]
        %v2720 = vld [vmem:[%s1036 + $0x81] sm:$0xff]
        %v2721 = vld [vmem:[%s1036 + $0x91] sm:$0xff]
        %v2722 = vld [vmem:[%s1036 + $0x99] sm:$0xff]
        %v2723 = vld [vmem:[%s1036 + $0xa9] sm:$0xff]
        %v2724 = vld [vmem:[%s1036 + $0xb1] sm:$0xff]
        %v2725 = vld [vmem:[%s1036 + $0xc1] sm:$0xff]
        %v2726 = vld [vmem:[%s1036 + $0xc9] sm:$0xff]
        %v2727 = vld [vmem:[%s1036 + $0xd9] sm:$0xff]
        %v2728 = vld [vmem:[%s1036 + $0xe1] sm:$0xff]
        %v2729 = vld [vmem:[%s1036 + $0xf1] sm:$0xff]
        %v2730 = vld [vmem:[%s1036 + $0xf9] sm:$0xff]
        %v2731 = vld [vmem:[%s1036 + $0x109] sm:$0xff]
        %v2732 = vld [vmem:[%s1036 + $0x111] sm:$0xff]
        %v2733 = vld [vmem:[%s1036 + $0x121] sm:$0xff]
        %v2734 = vld [vmem:[%s1036 + $0x129] sm:$0xff]
        %v2735 = vld [vmem:[%s1036 + $0x139] sm:$0xff]
        %v2736 = vld [vmem:[%s1036 + $0x141] sm:$0xff]
        %v2737 = vld [vmem:[%s1036 + $0x151] sm:$0xff]
        %v2738 = vld [vmem:[%s1036 + $0x159] sm:$0xff]
        %v2739 = vld [vmem:[%s1036 + $0x169] sm:$0xff]
        %v2740 = vld [vmem:[%s1036 + $0x171] sm:$0xff]
        %v2741 = vmax.f32 %v2677, %v2709
        %v2742 = vmax.f32 %v2678, %v2710
        %v2743 = vmax.f32 %v2679, %v2711
        %v2744 = vmax.f32 %v2680, %v2712
        %v2745 = vmax.f32 %v2681, %v2713
        %v2746 = vmax.f32 %v2682, %v2714
        %v2747 = vmax.f32 %v2683, %v2715
        %v2748 = vmax.f32 %v2684, %v2716
        %v2749 = vmax.f32 %v2685, %v2717
        %v2750 = vmax.f32 %v2686, %v2718
        %v2751 = vmax.f32 %v2687, %v2719
        %v2752 = vmax.f32 %v2688, %v2720
        %v2753 = vmax.f32 %v2689, %v2721
        %v2754 = vmax.f32 %v2690, %v2722
        %v2755 = vmax.f32 %v2691, %v2723
        %v2756 = vmax.f32 %v2692, %v2724
        %v2757 = vmax.f32 %v2693, %v2725
        %v2758 = vmax.f32 %v2694, %v2726
        %v2759 = vmax.f32 %v2695, %v2727
        %v2760 = vmax.f32 %v2696, %v2728
        %v2761 = vmax.f32 %v2697, %v2729
        %v2762 = vmax.f32 %v2698, %v2730
        %v2763 = vmax.f32 %v2699, %v2731
        %v2764 = vmax.f32 %v2700, %v2732
        %v2765 = vmax.f32 %v2701, %v2733
        %v2766 = vmax.f32 %v2702, %v2734
        %v2767 = vmax.f32 %v2703, %v2735
        %v2768 = vmax.f32 %v2704, %v2736
        %v2769 = vmax.f32 %v2705, %v2737
        %v2770 = vmax.f32 %v2706, %v2738
        %v2771 = vmax.f32 %v2707, %v2739
        %v2772 = vmax.f32 %v2708, %v2740
        %v2773 = vld [vmem:[%s1036 + $0x2] sm:$0xff]
        %v2774 = vld [vmem:[%s1036 + $0xa] sm:$0xff]
        %v2775 = vld [vmem:[%s1036 + $0x1a] sm:$0xff]
        %v2776 = vld [vmem:[%s1036 + $0x22] sm:$0xff]
        %v2777 = vld [vmem:[%s1036 + $0x32] sm:$0xff]
        %v2778 = vld [vmem:[%s1036 + $0x3a] sm:$0xff]
        %v2779 = vld [vmem:[%s1036 + $0x4a] sm:$0xff]
        %v2780 = vld [vmem:[%s1036 + $0x52] sm:$0xff]
        %v2781 = vld [vmem:[%s1036 + $0x62] sm:$0xff]
        %v2782 = vld [vmem:[%s1036 + $0x6a] sm:$0xff]
        %v2783 = vld [vmem:[%s1036 + $0x7a] sm:$0xff]
        %v2784 = vld [vmem:[%s1036 + $0x82] sm:$0xff]
        %v2785 = vld [vmem:[%s1036 + $0x92] sm:$0xff]
        %v2786 = vld [vmem:[%s1036 + $0x9a] sm:$0xff]
        %v2787 = vld [vmem:[%s1036 + $0xaa] sm:$0xff]
        %v2788 = vld [vmem:[%s1036 + $0xb2] sm:$0xff]
        %v2789 = vld [vmem:[%s1036 + $0xc2] sm:$0xff]
        %v2790 = vld [vmem:[%s1036 + $0xca] sm:$0xff]
        %v2791 = vld [vmem:[%s1036 + $0xda] sm:$0xff]
        %v2792 = vld [vmem:[%s1036 + $0xe2] sm:$0xff]
        %v2793 = vld [vmem:[%s1036 + $0xf2] sm:$0xff]
        %v2794 = vld [vmem:[%s1036 + $0xfa] sm:$0xff]
        %v2795 = vld [vmem:[%s1036 + $0x10a] sm:$0xff]
        %v2796 = vld [vmem:[%s1036 + $0x112] sm:$0xff]
        %v2797 = vld [vmem:[%s1036 + $0x122] sm:$0xff]
        %v2798 = vld [vmem:[%s1036 + $0x12a] sm:$0xff]
        %v2799 = vld [vmem:[%s1036 + $0x13a] sm:$0xff]
        %v2800 = vld [vmem:[%s1036 + $0x142] sm:$0xff]
        %v2801 = vld [vmem:[%s1036 + $0x152] sm:$0xff]
        %v2802 = vld [vmem:[%s1036 + $0x15a] sm:$0xff]
        %v2803 = vld [vmem:[%s1036 + $0x16a] sm:$0xff]
        %v2804 = vld [vmem:[%s1036 + $0x172] sm:$0xff]
        %v2805 = vmax.f32 %v2741, %v2773
        %v2806 = vmax.f32 %v2742, %v2774
        %v2807 = vmax.f32 %v2743, %v2775
        %v2808 = vmax.f32 %v2744, %v2776
        %v2809 = vmax.f32 %v2745, %v2777
        %v2810 = vmax.f32 %v2746, %v2778
        %v2811 = vmax.f32 %v2747, %v2779
        %v2812 = vmax.f32 %v2748, %v2780
        %v2813 = vmax.f32 %v2749, %v2781
        %v2814 = vmax.f32 %v2750, %v2782
        %v2815 = vmax.f32 %v2751, %v2783
        %v2816 = vmax.f32 %v2752, %v2784
        %v2817 = vmax.f32 %v2753, %v2785
        %v2818 = vmax.f32 %v2754, %v2786
        %v2819 = vmax.f32 %v2755, %v2787
        %v2820 = vmax.f32 %v2756, %v2788
        %v2821 = vmax.f32 %v2757, %v2789
        %v2822 = vmax.f32 %v2758, %v2790
        %v2823 = vmax.f32 %v2759, %v2791
        %v2824 = vmax.f32 %v2760, %v2792
        %v2825 = vmax.f32 %v2761, %v2793
        %v2826 = vmax.f32 %v2762, %v2794
        %v2827 = vmax.f32 %v2763, %v2795
        %v2828 = vmax.f32 %v2764, %v2796
        %v2829 = vmax.f32 %v2765, %v2797
        %v2830 = vmax.f32 %v2766, %v2798
        %v2831 = vmax.f32 %v2767, %v2799
        %v2832 = vmax.f32 %v2768, %v2800
        %v2833 = vmax.f32 %v2769, %v2801
        %v2834 = vmax.f32 %v2770, %v2802
        %v2835 = vmax.f32 %v2771, %v2803
        %v2836 = vmax.f32 %v2772, %v2804
        %v2837 = vld [vmem:[%s1036 + $0x3] sm:$0xff]
        %v2838 = vld [vmem:[%s1036 + $0xb] sm:$0xff]
        %v2839 = vld [vmem:[%s1036 + $0x1b] sm:$0xff]
        %v2840 = vld [vmem:[%s1036 + $0x23] sm:$0xff]
        %v2841 = vld [vmem:[%s1036 + $0x33] sm:$0xff]
        %v2842 = vld [vmem:[%s1036 + $0x3b] sm:$0xff]
        %v2843 = vld [vmem:[%s1036 + $0x4b] sm:$0xff]
        %v2844 = vld [vmem:[%s1036 + $0x53] sm:$0xff]
        %v2845 = vld [vmem:[%s1036 + $0x63] sm:$0xff]
        %v2846 = vld [vmem:[%s1036 + $0x6b] sm:$0xff]
        %v2847 = vld [vmem:[%s1036 + $0x7b] sm:$0xff]
        %v2848 = vld [vmem:[%s1036 + $0x83] sm:$0xff]
        %v2849 = vld [vmem:[%s1036 + $0x93] sm:$0xff]
        %v2850 = vld [vmem:[%s1036 + $0x9b] sm:$0xff]
        %v2851 = vld [vmem:[%s1036 + $0xab] sm:$0xff]
        %v2852 = vld [vmem:[%s1036 + $0xb3] sm:$0xff]
        %v2853 = vld [vmem:[%s1036 + $0xc3] sm:$0xff]
        %v2854 = vld [vmem:[%s1036 + $0xcb] sm:$0xff]
        %v2855 = vld [vmem:[%s1036 + $0xdb] sm:$0xff]
        %v2856 = vld [vmem:[%s1036 + $0xe3] sm:$0xff]
        %v2857 = vld [vmem:[%s1036 + $0xf3] sm:$0xff]
        %v2858 = vld [vmem:[%s1036 + $0xfb] sm:$0xff]
        %v2859 = vld [vmem:[%s1036 + $0x10b] sm:$0xff]
        %v2860 = vld [vmem:[%s1036 + $0x113] sm:$0xff]
        %v2861 = vld [vmem:[%s1036 + $0x123] sm:$0xff]
        %v2862 = vld [vmem:[%s1036 + $0x12b] sm:$0xff]
        %v2863 = vld [vmem:[%s1036 + $0x13b] sm:$0xff]
        %v2864 = vld [vmem:[%s1036 + $0x143] sm:$0xff]
        %v2865 = vld [vmem:[%s1036 + $0x153] sm:$0xff]
        %v2866 = vld [vmem:[%s1036 + $0x15b] sm:$0xff]
        %v2867 = vld [vmem:[%s1036 + $0x16b] sm:$0xff]
        %v2868 = vld [vmem:[%s1036 + $0x173] sm:$0xff]
        %v2869 = vmax.f32 %v2805, %v2837
        %v2870 = vmax.f32 %v2806, %v2838
        %v2871 = vmax.f32 %v2807, %v2839
        %v2872 = vmax.f32 %v2808, %v2840
        %v2873 = vmax.f32 %v2809, %v2841
        %v2874 = vmax.f32 %v2810, %v2842
        %v2875 = vmax.f32 %v2811, %v2843
        %v2876 = vmax.f32 %v2812, %v2844
        %v2877 = vmax.f32 %v2813, %v2845
        %v2878 = vmax.f32 %v2814, %v2846
        %v2879 = vmax.f32 %v2815, %v2847
        %v2880 = vmax.f32 %v2816, %v2848
        %v2881 = vmax.f32 %v2817, %v2849
        %v2882 = vmax.f32 %v2818, %v2850
        %v2883 = vmax.f32 %v2819, %v2851
        %v2884 = vmax.f32 %v2820, %v2852
        %v2885 = vmax.f32 %v2821, %v2853
        %v2886 = vmax.f32 %v2822, %v2854
        %v2887 = vmax.f32 %v2823, %v2855
        %v2888 = vmax.f32 %v2824, %v2856
        %v2889 = vmax.f32 %v2825, %v2857
        %v2890 = vmax.f32 %v2826, %v2858
        %v2891 = vmax.f32 %v2827, %v2859
        %v2892 = vmax.f32 %v2828, %v2860
        %v2893 = vmax.f32 %v2829, %v2861
        %v2894 = vmax.f32 %v2830, %v2862
        %v2895 = vmax.f32 %v2831, %v2863
        %v2896 = vmax.f32 %v2832, %v2864
        %v2897 = vmax.f32 %v2833, %v2865
        %v2898 = vmax.f32 %v2834, %v2866
        %v2899 = vmax.f32 %v2835, %v2867
        %v2900 = vmax.f32 %v2836, %v2868
        %v2901 = vld [vmem:[%s1036 + $0x4] sm:$0xff]
        %v2902 = vld [vmem:[%s1036 + $0xc] sm:$0xff]
        %v2903 = vld [vmem:[%s1036 + $0x1c] sm:$0xff]
        %v2904 = vld [vmem:[%s1036 + $0x24] sm:$0xff]
        %v2905 = vld [vmem:[%s1036 + $0x34] sm:$0xff]
        %v2906 = vld [vmem:[%s1036 + $0x3c] sm:$0xff]
        %v2907 = vld [vmem:[%s1036 + $0x4c] sm:$0xff]
        %v2908 = vld [vmem:[%s1036 + $0x54] sm:$0xff]
        %v2909 = vld [vmem:[%s1036 + $0x64] sm:$0xff]
        %v2910 = vld [vmem:[%s1036 + $0x6c] sm:$0xff]
        %v2911 = vld [vmem:[%s1036 + $0x7c] sm:$0xff]
        %v2912 = vld [vmem:[%s1036 + $0x84] sm:$0xff]
        %v2913 = vld [vmem:[%s1036 + $0x94] sm:$0xff]
        %v2914 = vld [vmem:[%s1036 + $0x9c] sm:$0xff]
        %v2915 = vld [vmem:[%s1036 + $0xac] sm:$0xff]
        %v2916 = vld [vmem:[%s1036 + $0xb4] sm:$0xff]
        %v2917 = vld [vmem:[%s1036 + $0xc4] sm:$0xff]
        %v2918 = vld [vmem:[%s1036 + $0xcc] sm:$0xff]
        %v2919 = vld [vmem:[%s1036 + $0xdc] sm:$0xff]
        %v2920 = vld [vmem:[%s1036 + $0xe4] sm:$0xff]
        %v2921 = vld [vmem:[%s1036 + $0xf4] sm:$0xff]
        %v2922 = vld [vmem:[%s1036 + $0xfc] sm:$0xff]
        %v2923 = vld [vmem:[%s1036 + $0x10c] sm:$0xff]
        %v2924 = vld [vmem:[%s1036 + $0x114] sm:$0xff]
        %v2925 = vld [vmem:[%s1036 + $0x124] sm:$0xff]
        %v2926 = vld [vmem:[%s1036 + $0x12c] sm:$0xff]
        %v2927 = vld [vmem:[%s1036 + $0x13c] sm:$0xff]
        %v2928 = vld [vmem:[%s1036 + $0x144] sm:$0xff]
        %v2929 = vld [vmem:[%s1036 + $0x154] sm:$0xff]
        %v2930 = vld [vmem:[%s1036 + $0x15c] sm:$0xff]
        %v2931 = vld [vmem:[%s1036 + $0x16c] sm:$0xff]
        %v2932 = vld [vmem:[%s1036 + $0x174] sm:$0xff]
        %v2933 = vmax.f32 %v2869, %v2901
        %v2934 = vmax.f32 %v2870, %v2902
        %v2935 = vmax.f32 %v2871, %v2903
        %v2936 = vmax.f32 %v2872, %v2904
        %v2937 = vmax.f32 %v2873, %v2905
        %v2938 = vmax.f32 %v2874, %v2906
        %v2939 = vmax.f32 %v2875, %v2907
        %v2940 = vmax.f32 %v2876, %v2908
        %v2941 = vmax.f32 %v2877, %v2909
        %v2942 = vmax.f32 %v2878, %v2910
        %v2943 = vmax.f32 %v2879, %v2911
        %v2944 = vmax.f32 %v2880, %v2912
        %v2945 = vmax.f32 %v2881, %v2913
        %v2946 = vmax.f32 %v2882, %v2914
        %v2947 = vmax.f32 %v2883, %v2915
        %v2948 = vmax.f32 %v2884, %v2916
        %v2949 = vmax.f32 %v2885, %v2917
        %v2950 = vmax.f32 %v2886, %v2918
        %v2951 = vmax.f32 %v2887, %v2919
        %v2952 = vmax.f32 %v2888, %v2920
        %v2953 = vmax.f32 %v2889, %v2921
        %v2954 = vmax.f32 %v2890, %v2922
        %v2955 = vmax.f32 %v2891, %v2923
        %v2956 = vmax.f32 %v2892, %v2924
        %v2957 = vmax.f32 %v2893, %v2925
        %v2958 = vmax.f32 %v2894, %v2926
        %v2959 = vmax.f32 %v2895, %v2927
        %v2960 = vmax.f32 %v2896, %v2928
        %v2961 = vmax.f32 %v2897, %v2929
        %v2962 = vmax.f32 %v2898, %v2930
        %v2963 = vmax.f32 %v2899, %v2931
        %v2964 = vmax.f32 %v2900, %v2932
        %s2965 = scalar_lea.vmem [#allocation6], 32
        %v2966 = vld [vmem:[%s2965] sm:$0xff]
        %v2967 = vld [vmem:[%s2965 + $0x8] sm:$0xff]
        %v2969 = vsel %vm974, %v2933, 0
        %v2972 = vsel %vm974, %v2934, 0
        %v2975 = vsel %vm974, %v2935, 0
        %v2978 = vsel %vm974, %v2936, 0
        %v2981 = vsel %vm974, %v2937, 0
        %v2984 = vsel %vm974, %v2938, 0
        %v2987 = vsel %vm974, %v2939, 0
        %v2990 = vsel %vm974, %v2940, 0
        %v2993 = vsel %vm974, %v2941, 0
        %v2996 = vsel %vm974, %v2942, 0
        %v2999 = vsel %vm974, %v2943, 0
        %v3002 = vsel %vm974, %v2944, 0
        %v3005 = vsel %vm974, %v2945, 0
        %v3008 = vsel %vm974, %v2946, 0
        %v3011 = vsel %vm974, %v2947, 0
        %v3014 = vsel %vm974, %v2948, 0
        %v3017 = vsel %vm974, %v2949, 0
        %v3020 = vsel %vm974, %v2950, 0
        %v3023 = vsel %vm974, %v2951, 0
        %v3026 = vsel %vm974, %v2952, 0
        %v3029 = vsel %vm974, %v2953, 0
        %v3032 = vsel %vm974, %v2954, 0
        %v3035 = vsel %vm974, %v2955, 0
        %v3038 = vsel %vm974, %v2956, 0
        %v3041 = vsel %vm974, %v2957, 0
        %v3044 = vsel %vm974, %v2958, 0
        %v3047 = vsel %vm974, %v2959, 0
        %v3050 = vsel %vm974, %v2960, 0
        %v3053 = vsel %vm974, %v2961, 0
        %v3056 = vsel %vm974, %v2962, 0
        %v3059 = vsel %vm974, %v2963, 0
        %v3062 = vsel %vm974, %v2964, 0
        %3064 = vmatprep.subr.mxu0 0.0
        %3065 = vmatpush1.msra.mxu0 %v2966
        %3066 = vmatprep.subr.mxu0 0.0
        %3067 = vmatpush1.msra.mxu0 %v2967
        %3068 = vmatprep.subr.mxu0 0.0
        %3069 = vmatpush1.msra.mxu0 0.0
        %3070 = vmatprep.subr.mxu0 0.0
        %3071 = vmatpush1.msra.mxu0 0.0
        %3072 = vmatprep.subr.mxu0 0.0
        %3073 = vmatpush1.msra.mxu0 0.0
        %3074 = vmatprep.subr.mxu0 0.0
        %3075 = vmatpush1.msra.mxu0 0.0
        %3076 = vmatprep.subr.mxu0 0.0
        %3077 = vmatpush1.msra.mxu0 0.0
        %3078 = vmatprep.subr.mxu0 0.0
        %3079 = vmatpush1.msra.mxu0 0.0
        %3080 = vmatprep.subr.mxu0 0.0
        %3081 = vmatpush1.msra.mxu0 0.0
        %3082 = vmatprep.subr.mxu0 0.0
        %3083 = vmatpush1.msra.mxu0 0.0
        %3084 = vmatprep.subr.mxu0 0.0
        %3085 = vmatpush1.msra.mxu0 0.0
        %3086 = vmatprep.subr.mxu0 0.0
        %3087 = vmatpush1.msra.mxu0 0.0
        %3088 = vmatprep.subr.mxu0 0.0
        %3089 = vmatpush1.msra.mxu0 0.0
        %3090 = vmatprep.subr.mxu0 0.0
        %3091 = vmatpush1.msra.mxu0 0.0
        %3092 = vmatprep.subr.mxu0 0.0
        %3093 = vmatpush1.msra.mxu0 0.0
        %3094 = vmatprep.subr.mxu0 0.0
        %3095 = vmatpush1.msra.mxu0 0.0
        %3096 = vmatprep.subr.mxu0 0.0
        %3097 = vmatpush1.msra.mxu0 0.0
        %3098 = vmatprep.subr.mxu0 0.0
        %3099 = vmatpush1.msra.mxu0 0.0
        %3100 = vmatprep.subr.mxu0 0.0
        %3101 = vmatpush1.msra.mxu0 0.0
        %3102 = vmatprep.subr.mxu0 0.0
        %3103 = vmatpush1.msra.mxu0 0.0
        %3104 = vmatprep.subr.mxu0 0.0
        %3105 = vmatpush1.msra.mxu0 0.0
        %3106 = vmatprep.subr.mxu0 0.0
        %3107 = vmatpush1.msra.mxu0 0.0
        %3108 = vmatprep.subr.mxu0 0.0
        %3109 = vmatpush1.msra.mxu0 0.0
        %3110 = vmatprep.subr.mxu0 0.0
        %3111 = vmatpush1.msra.mxu0 0.0
        %3112 = vmatprep.subr.mxu0 0.0
        %3113 = vmatpush1.msra.mxu0 0.0
        %3114 = vmatprep.subr.mxu0 0.0
        %3115 = vmatpush1.msra.mxu0 0.0
        %3116 = vmatprep.subr.mxu0 0.0
        %3117 = vmatpush1.msra.mxu0 0.0
        %3118 = vmatprep.subr.mxu0 0.0
        %3119 = vmatpush1.msra.mxu0 0.0
        %3120 = vmatprep.subr.mxu0 0.0
        %3121 = vmatpush1.msra.mxu0 0.0
        %3122 = vmatprep.subr.mxu0 0.0
        %3123 = vmatpush1.msra.mxu0 0.0
        %3124 = vmatprep.subr.mxu0 0.0
        %3125 = vmatpush1.msra.mxu0 0.0
        %3126 = vmatprep.subr.mxu0 0.0
        %3127 = vmatpush1.msra.mxu0 0.0
        %3128 = vmatprep.mubr.f32.mxu0 0.0
        %3129 = vmatmul.mubr.f32.gmra.mrb[0].mxu0 %v2969
        %v3130 = vpop.f32.mrb[0].mxu0
        %v3131 = vadd.f32 0.0, %v3130
        %v3132 = vpop.f32.mrb[0].mxu0
        %3133 = vmatprep.mubr.f32.mxu0 0.0
        %3134 = vmatmul.mubr.f32.gmra.mrb[0].mxu0 %v2972
        %v3135 = vpop.f32.mrb[0].mxu0
        %v3136 = vadd.f32 0.0, %v3135
        %v3137 = vpop.f32.mrb[0].mxu0
        %3138 = vmatprep.mubr.f32.mxu0 0.0
        %3139 = vmatmul.mubr.f32.gmra.mrb[0].mxu0 %v2975
        %v3140 = vpop.f32.mrb[0].mxu0
        %v3141 = vadd.f32 0.0, %v3140
        %v3142 = vpop.f32.mrb[0].mxu0
        %3143 = vmatprep.mubr.f32.mxu0 0.0
        %3144 = vmatmul.mubr.f32.gmra.mrb[0].mxu0 %v2978
        %v3145 = vpop.f32.mrb[0].mxu0
        %v3146 = vadd.f32 0.0, %v3145
        %v3147 = vpop.f32.mrb[0].mxu0
        %3148 = vmatprep.mubr.f32.mxu0 0.0
        %3149 = vmatmul.mubr.f32.gmra.mrb[0].mxu0 %v2981
        %v3150 = vpop.f32.mrb[0].mxu0
        %v3151 = vadd.f32 0.0, %v3150
        %v3152 = vpop.f32.mrb[0].mxu0
        %3153 = vmatprep.mubr.f32.mxu0 0.0
        %3154 = vmatmul.mubr.f32.gmra.mrb[0].mxu0 %v2984
        %v3155 = vpop.f32.mrb[0].mxu0
        %v3156 = vadd.f32 0.0, %v3155
        %v3157 = vpop.f32.mrb[0].mxu0
        %3158 = vmatprep.mubr.f32.mxu0 0.0
        %3159 = vmatmul.mubr.f32.gmra.mrb[0].mxu0 %v2987
        %v3160 = vpop.f32.mrb[0].mxu0
        %v3161 = vadd.f32 0.0, %v3160
        %v3162 = vpop.f32.mrb[0].mxu0
        %3163 = vmatprep.mubr.f32.mxu0 0.0
        %3164 = vmatmul.mubr.f32.gmra.mrb[0].mxu0 %v2990
        %v3165 = vpop.f32.mrb[0].mxu0
        %v3166 = vadd.f32 0.0, %v3165
        %v3167 = vpop.f32.mrb[0].mxu0
        %3168 = vmatprep.mubr.f32.mxu0 0.0
        %3169 = vmatmul.mubr.f32.gmra.mrb[0].mxu0 %v2993
        %v3170 = vpop.f32.mrb[0].mxu0
        %v3171 = vadd.f32 0.0, %v3170
        %v3172 = vpop.f32.mrb[0].mxu0
        %3173 = vmatprep.mubr.f32.mxu0 0.0
        %3174 = vmatmul.mubr.f32.gmra.mrb[0].mxu0 %v2996
        %v3175 = vpop.f32.mrb[0].mxu0
        %v3176 = vadd.f32 0.0, %v3175
        %v3177 = vpop.f32.mrb[0].mxu0
        %3178 = vmatprep.mubr.f32.mxu0 0.0
        %3179 = vmatmul.mubr.f32.gmra.mrb[0].mxu0 %v2999
        %v3180 = vpop.f32.mrb[0].mxu0
        %v3181 = vadd.f32 0.0, %v3180
        %v3182 = vpop.f32.mrb[0].mxu0
        %3183 = vmatprep.mubr.f32.mxu0 0.0
        %3184 = vmatmul.mubr.f32.gmra.mrb[0].mxu0 %v3002
        %v3185 = vpop.f32.mrb[0].mxu0
        %v3186 = vadd.f32 0.0, %v3185
        %v3187 = vpop.f32.mrb[0].mxu0
        %3188 = vmatprep.mubr.f32.mxu0 0.0
        %3189 = vmatmul.mubr.f32.gmra.mrb[0].mxu0 %v3005
        %v3190 = vpop.f32.mrb[0].mxu0
        %v3191 = vadd.f32 0.0, %v3190
        %v3192 = vpop.f32.mrb[0].mxu0
        %3193 = vmatprep.mubr.f32.mxu0 0.0
        %3194 = vmatmul.mubr.f32.gmra.mrb[0].mxu0 %v3008
        %v3195 = vpop.f32.mrb[0].mxu0
        %v3196 = vadd.f32 0.0, %v3195
        %v3197 = vpop.f32.mrb[0].mxu0
        %3198 = vmatprep.mubr.f32.mxu0 0.0
        %3199 = vmatmul.mubr.f32.gmra.mrb[0].mxu0 %v3011
        %v3200 = vpop.f32.mrb[0].mxu0
        %v3201 = vadd.f32 0.0, %v3200
        %v3202 = vpop.f32.mrb[0].mxu0
        %3203 = vmatprep.mubr.f32.mxu0 0.0
        %3204 = vmatmul.mubr.f32.gmra.mrb[0].mxu0 %v3014
        %v3205 = vpop.f32.mrb[0].mxu0
        %v3206 = vadd.f32 0.0, %v3205
        %v3207 = vpop.f32.mrb[0].mxu0
        %3208 = vmatprep.mubr.f32.mxu0 0.0
        %3209 = vmatmul.mubr.f32.gmra.mrb[0].mxu0 %v3017
        %v3210 = vpop.f32.mrb[0].mxu0
        %v3211 = vadd.f32 0.0, %v3210
        %v3212 = vpop.f32.mrb[0].mxu0
        %3213 = vmatprep.mubr.f32.mxu0 0.0
        %3214 = vmatmul.mubr.f32.gmra.mrb[0].mxu0 %v3020
        %v3215 = vpop.f32.mrb[0].mxu0
        %v3216 = vadd.f32 0.0, %v3215
        %v3217 = vpop.f32.mrb[0].mxu0
        %3218 = vmatprep.mubr.f32.mxu0 0.0
        %3219 = vmatmul.mubr.f32.gmra.mrb[0].mxu0 %v3023
        %v3220 = vpop.f32.mrb[0].mxu0
        %v3221 = vadd.f32 0.0, %v3220
        %v3222 = vpop.f32.mrb[0].mxu0
        %3223 = vmatprep.mubr.f32.mxu0 0.0
        %3224 = vmatmul.mubr.f32.gmra.mrb[0].mxu0 %v3026
        %v3225 = vpop.f32.mrb[0].mxu0
        %v3226 = vadd.f32 0.0, %v3225
        %v3227 = vpop.f32.mrb[0].mxu0
        %3228 = vmatprep.mubr.f32.mxu0 0.0
        %3229 = vmatmul.mubr.f32.gmra.mrb[0].mxu0 %v3029
        %v3230 = vpop.f32.mrb[0].mxu0
        %v3231 = vadd.f32 0.0, %v3230
        %v3232 = vpop.f32.mrb[0].mxu0
        %3233 = vmatprep.mubr.f32.mxu0 0.0
        %3234 = vmatmul.mubr.f32.gmra.mrb[0].mxu0 %v3032
        %v3235 = vpop.f32.mrb[0].mxu0
        %v3236 = vadd.f32 0.0, %v3235
        %v3237 = vpop.f32.mrb[0].mxu0
        %3238 = vmatprep.mubr.f32.mxu0 0.0
        %3239 = vmatmul.mubr.f32.gmra.mrb[0].mxu0 %v3035
        %v3240 = vpop.f32.mrb[0].mxu0
        %v3241 = vadd.f32 0.0, %v3240
        %v3242 = vpop.f32.mrb[0].mxu0
        %3243 = vmatprep.mubr.f32.mxu0 0.0
        %3244 = vmatmul.mubr.f32.gmra.mrb[0].mxu0 %v3038
        %v3245 = vpop.f32.mrb[0].mxu0
        %v3246 = vadd.f32 0.0, %v3245
        %v3247 = vpop.f32.mrb[0].mxu0
        %3248 = vmatprep.mubr.f32.mxu0 0.0
        %3249 = vmatmul.mubr.f32.gmra.mrb[0].mxu0 %v3041
        %v3250 = vpop.f32.mrb[0].mxu0
        %v3251 = vadd.f32 0.0, %v3250
        %v3252 = vpop.f32.mrb[0].mxu0
        %3253 = vmatprep.mubr.f32.mxu0 0.0
        %3254 = vmatmul.mubr.f32.gmra.mrb[0].mxu0 %v3044
        %v3255 = vpop.f32.mrb[0].mxu0
        %v3256 = vadd.f32 0.0, %v3255
        %v3257 = vpop.f32.mrb[0].mxu0
        %3258 = vmatprep.mubr.f32.mxu0 0.0
        %3259 = vmatmul.mubr.f32.gmra.mrb[0].mxu0 %v3047
        %v3260 = vpop.f32.mrb[0].mxu0
        %v3261 = vadd.f32 0.0, %v3260
        %v3262 = vpop.f32.mrb[0].mxu0
        %3263 = vmatprep.mubr.f32.mxu0 0.0
        %3264 = vmatmul.mubr.f32.gmra.mrb[0].mxu0 %v3050
        %v3265 = vpop.f32.mrb[0].mxu0
        %v3266 = vadd.f32 0.0, %v3265
        %v3267 = vpop.f32.mrb[0].mxu0
        %3268 = vmatprep.mubr.f32.mxu0 0.0
        %3269 = vmatmul.mubr.f32.gmra.mrb[0].mxu0 %v3053
        %v3270 = vpop.f32.mrb[0].mxu0
        %v3271 = vadd.f32 0.0, %v3270
        %v3272 = vpop.f32.mrb[0].mxu0
        %3273 = vmatprep.mubr.f32.mxu0 0.0
        %3274 = vmatmul.mubr.f32.gmra.mrb[0].mxu0 %v3056
        %v3275 = vpop.f32.mrb[0].mxu0
        %v3276 = vadd.f32 0.0, %v3275
        %v3277 = vpop.f32.mrb[0].mxu0
        %3278 = vmatprep.mubr.f32.mxu0 0.0
        %3279 = vmatmul.mubr.f32.gmra.mrb[0].mxu0 %v3059
        %v3280 = vpop.f32.mrb[0].mxu0
        %v3281 = vadd.f32 0.0, %v3280
        %v3282 = vpop.f32.mrb[0].mxu0
        %3283 = vmatprep.mubr.f32.mxu0 0.0
        %3284 = vmatmul.mubr.f32.gmra.mrb[0].mxu0 %v3062
        %v3285 = vpop.f32.mrb[0].mxu0
        %v3286 = vadd.f32 0.0, %v3285
        %v3287 = vpop.f32.mrb[0].mxu0
        %3288 = vdwg.mxu0
        %v3289 = vadd.f32 %v2167, %v3131
        %v3290 = vadd.f32 %v2172, %v3136
        %v3291 = vadd.f32 %v2177, %v3141
        %v3292 = vadd.f32 %v2182, %v3146
        %v3293 = vadd.f32 %v2187, %v3151
        %v3294 = vadd.f32 %v2192, %v3156
        %v3295 = vadd.f32 %v2197, %v3161
        %v3296 = vadd.f32 %v2202, %v3166
        %v3297 = vadd.f32 %v2207, %v3171
        %v3298 = vadd.f32 %v2212, %v3176
        %v3299 = vadd.f32 %v2217, %v3181
        %v3300 = vadd.f32 %v2222, %v3186
        %v3301 = vadd.f32 %v2227, %v3191
        %v3302 = vadd.f32 %v2232, %v3196
        %v3303 = vadd.f32 %v2237, %v3201
        %v3304 = vadd.f32 %v2242, %v3206
        %v3305 = vadd.f32 %v2247, %v3211
        %v3306 = vadd.f32 %v2252, %v3216
        %v3307 = vadd.f32 %v2257, %v3221
        %v3308 = vadd.f32 %v2262, %v3226
        %v3309 = vadd.f32 %v2267, %v3231
        %v3310 = vadd.f32 %v2272, %v3236
        %v3311 = vadd.f32 %v2277, %v3241
        %v3312 = vadd.f32 %v2282, %v3246
        %v3313 = vadd.f32 %v2287, %v3251
        %v3314 = vadd.f32 %v2292, %v3256
        %v3315 = vadd.f32 %v2297, %v3261
        %v3316 = vadd.f32 %v2302, %v3266
        %v3317 = vadd.f32 %v2307, %v3271
        %v3318 = vadd.f32 %v2312, %v3276
        %v3319 = vadd.f32 %v2317, %v3281
        %v3320 = vadd.f32 %v2322, %v3286
        %3321 = vst.msk [vmem:[%s1036 + $0x2] sm:$0xff] %vm974, %v2933
        %3322 = vst.msk [vmem:[%s1036 + $0xa] sm:$0xff] %vm974, %v2934
        %3323 = vst.msk [vmem:[%s1036 + $0x1a] sm:$0xff] %vm974, %v2935
        %3324 = vst.msk [vmem:[%s1036 + $0x22] sm:$0xff] %vm974, %v2936
        %3325 = vst.msk [vmem:[%s1036 + $0x32] sm:$0xff] %vm974, %v2937
        %3326 = vst.msk [vmem:[%s1036 + $0x3a] sm:$0xff] %vm974, %v2938
        %3327 = vst.msk [vmem:[%s1036 + $0x4a] sm:$0xff] %vm974, %v2939
        %3328 = vst.msk [vmem:[%s1036 + $0x52] sm:$0xff] %vm974, %v2940
        %3329 = vst.msk [vmem:[%s1036 + $0x62] sm:$0xff] %vm974, %v2941
        %3330 = vst.msk [vmem:[%s1036 + $0x6a] sm:$0xff] %vm974, %v2942
        %3331 = vst.msk [vmem:[%s1036 + $0x7a] sm:$0xff] %vm974, %v2943
        %3332 = vst.msk [vmem:[%s1036 + $0x82] sm:$0xff] %vm974, %v2944
        %3333 = vst.msk [vmem:[%s1036 + $0x92] sm:$0xff] %vm974, %v2945
        %3334 = vst.msk [vmem:[%s1036 + $0x9a] sm:$0xff] %vm974, %v2946
        %3335 = vst.msk [vmem:[%s1036 + $0xaa] sm:$0xff] %vm974, %v2947
        %3336 = vst.msk [vmem:[%s1036 + $0xb2] sm:$0xff] %vm974, %v2948
        %3337 = vst.msk [vmem:[%s1036 + $0xc2] sm:$0xff] %vm974, %v2949
        %3338 = vst.msk [vmem:[%s1036 + $0xca] sm:$0xff] %vm974, %v2950
        %3339 = vst.msk [vmem:[%s1036 + $0xda] sm:$0xff] %vm974, %v2951
        %3340 = vst.msk [vmem:[%s1036 + $0xe2] sm:$0xff] %vm974, %v2952
        %3341 = vst.msk [vmem:[%s1036 + $0xf2] sm:$0xff] %vm974, %v2953
        %3342 = vst.msk [vmem:[%s1036 + $0xfa] sm:$0xff] %vm974, %v2954
        %3343 = vst.msk [vmem:[%s1036 + $0x10a] sm:$0xff] %vm974, %v2955
        %3344 = vst.msk [vmem:[%s1036 + $0x112] sm:$0xff] %vm974, %v2956
        %3345 = vst.msk [vmem:[%s1036 + $0x122] sm:$0xff] %vm974, %v2957
        %3346 = vst.msk [vmem:[%s1036 + $0x12a] sm:$0xff] %vm974, %v2958
        %3347 = vst.msk [vmem:[%s1036 + $0x13a] sm:$0xff] %vm974, %v2959
        %3348 = vst.msk [vmem:[%s1036 + $0x142] sm:$0xff] %vm974, %v2960
        %3349 = vst.msk [vmem:[%s1036 + $0x152] sm:$0xff] %vm974, %v2961
        %3350 = vst.msk [vmem:[%s1036 + $0x15a] sm:$0xff] %vm974, %v2962
        %3351 = vst.msk [vmem:[%s1036 + $0x16a] sm:$0xff] %vm974, %v2963
        %3352 = vst.msk [vmem:[%s1036 + $0x172] sm:$0xff] %vm974, %v2964
        %v3353 = vld [vmem:[#allocation2 + $0x2] sm:$0xff]
        %v3354 = vld [vmem:[#allocation2 + $0xa] sm:$0xff]
        %v3355 = vld [vmem:[#allocation2 + $0x1a] sm:$0xff]
        %v3356 = vld [vmem:[#allocation2 + $0x22] sm:$0xff]
        %v3357 = vld [vmem:[#allocation2 + $0x32] sm:$0xff]
        %v3358 = vld [vmem:[#allocation2 + $0x3a] sm:$0xff]
        %v3359 = vld [vmem:[#allocation2 + $0x4a] sm:$0xff]
        %v3360 = vld [vmem:[#allocation2 + $0x52] sm:$0xff]
        %v3361 = vld [vmem:[#allocation2 + $0x62] sm:$0xff]
        %v3362 = vld [vmem:[#allocation2 + $0x6a] sm:$0xff]
        %v3363 = vld [vmem:[#allocation2 + $0x7a] sm:$0xff]
        %v3364 = vld [vmem:[#allocation2 + $0x82] sm:$0xff]
        %v3365 = vld [vmem:[#allocation2 + $0x92] sm:$0xff]
        %v3366 = vld [vmem:[#allocation2 + $0x9a] sm:$0xff]
        %v3367 = vld [vmem:[#allocation2 + $0xaa] sm:$0xff]
        %v3368 = vld [vmem:[#allocation2 + $0xb2] sm:$0xff]
        %v3369 = vld [vmem:[#allocation2 + $0xc2] sm:$0xff]
        %v3370 = vld [vmem:[#allocation2 + $0xca] sm:$0xff]
        %v3371 = vld [vmem:[#allocation2 + $0xda] sm:$0xff]
        %v3372 = vld [vmem:[#allocation2 + $0xe2] sm:$0xff]
        %v3373 = vld [vmem:[#allocation2 + $0xf2] sm:$0xff]
        %v3374 = vld [vmem:[#allocation2 + $0xfa] sm:$0xff]
        %v3375 = vld [vmem:[#allocation2 + $0x10a] sm:$0xff]
        %v3376 = vld [vmem:[#allocation2 + $0x112] sm:$0xff]
        %v3377 = vld [vmem:[#allocation2 + $0x122] sm:$0xff]
        %v3378 = vld [vmem:[#allocation2 + $0x12a] sm:$0xff]
        %v3379 = vld [vmem:[#allocation2 + $0x13a] sm:$0xff]
        %v3380 = vld [vmem:[#allocation2 + $0x142] sm:$0xff]
        %v3381 = vld [vmem:[#allocation2 + $0x152] sm:$0xff]
        %v3382 = vld [vmem:[#allocation2 + $0x15a] sm:$0xff]
        %v3383 = vld [vmem:[#allocation2 + $0x16a] sm:$0xff]
        %v3384 = vld [vmem:[#allocation2 + $0x172] sm:$0xff]
        %v3385 = vld [vmem:[%s1101 + $0x2] sm:$0xff]
        %v3386 = vld [vmem:[%s1101 + $0xa] sm:$0xff]
        %v3387 = vld [vmem:[%s1101 + $0x1a] sm:$0xff]
        %v3388 = vld [vmem:[%s1101 + $0x22] sm:$0xff]
        %v3389 = vld [vmem:[%s1101 + $0x32] sm:$0xff]
        %v3390 = vld [vmem:[%s1101 + $0x3a] sm:$0xff]
        %v3391 = vld [vmem:[%s1101 + $0x4a] sm:$0xff]
        %v3392 = vld [vmem:[%s1101 + $0x52] sm:$0xff]
        %v3393 = vld [vmem:[%s1101 + $0x62] sm:$0xff]
        %v3394 = vld [vmem:[%s1101 + $0x6a] sm:$0xff]
        %v3395 = vld [vmem:[%s1101 + $0x7a] sm:$0xff]
        %v3396 = vld [vmem:[%s1101 + $0x82] sm:$0xff]
        %v3397 = vld [vmem:[%s1101 + $0x92] sm:$0xff]
        %v3398 = vld [vmem:[%s1101 + $0x9a] sm:$0xff]
        %v3399 = vld [vmem:[%s1101 + $0xaa] sm:$0xff]
        %v3400 = vld [vmem:[%s1101 + $0xb2] sm:$0xff]
        %v3401 = vld [vmem:[%s1101 + $0xc2] sm:$0xff]
        %v3402 = vld [vmem:[%s1101 + $0xca] sm:$0xff]
        %v3403 = vld [vmem:[%s1101 + $0xda] sm:$0xff]
        %v3404 = vld [vmem:[%s1101 + $0xe2] sm:$0xff]
        %v3405 = vld [vmem:[%s1101 + $0xf2] sm:$0xff]
        %v3406 = vld [vmem:[%s1101 + $0xfa] sm:$0xff]
        %v3407 = vld [vmem:[%s1101 + $0x10a] sm:$0xff]
        %v3408 = vld [vmem:[%s1101 + $0x112] sm:$0xff]
        %v3409 = vld [vmem:[%s1101 + $0x122] sm:$0xff]
        %v3410 = vld [vmem:[%s1101 + $0x12a] sm:$0xff]
        %v3411 = vld [vmem:[%s1101 + $0x13a] sm:$0xff]
        %v3412 = vld [vmem:[%s1101 + $0x142] sm:$0xff]
        %v3413 = vld [vmem:[%s1101 + $0x152] sm:$0xff]
        %v3414 = vld [vmem:[%s1101 + $0x15a] sm:$0xff]
        %v3415 = vld [vmem:[%s1101 + $0x16a] sm:$0xff]
        %v3416 = vld [vmem:[%s1101 + $0x172] sm:$0xff]
        %v3417 = vmax.f32 %v3353, %v3385
        %v3418 = vmax.f32 %v3354, %v3386
        %v3419 = vmax.f32 %v3355, %v3387
        %v3420 = vmax.f32 %v3356, %v3388
        %v3421 = vmax.f32 %v3357, %v3389
        %v3422 = vmax.f32 %v3358, %v3390
        %v3423 = vmax.f32 %v3359, %v3391
        %v3424 = vmax.f32 %v3360, %v3392
        %v3425 = vmax.f32 %v3361, %v3393
        %v3426 = vmax.f32 %v3362, %v3394
        %v3427 = vmax.f32 %v3363, %v3395
        %v3428 = vmax.f32 %v3364, %v3396
        %v3429 = vmax.f32 %v3365, %v3397
        %v3430 = vmax.f32 %v3366, %v3398
        %v3431 = vmax.f32 %v3367, %v3399
        %v3432 = vmax.f32 %v3368, %v3400
        %v3433 = vmax.f32 %v3369, %v3401
        %v3434 = vmax.f32 %v3370, %v3402
        %v3435 = vmax.f32 %v3371, %v3403
        %v3436 = vmax.f32 %v3372, %v3404
        %v3437 = vmax.f32 %v3373, %v3405
        %v3438 = vmax.f32 %v3374, %v3406
        %v3439 = vmax.f32 %v3375, %v3407
        %v3440 = vmax.f32 %v3376, %v3408
        %v3441 = vmax.f32 %v3377, %v3409
        %v3442 = vmax.f32 %v3378, %v3410
        %v3443 = vmax.f32 %v3379, %v3411
        %v3444 = vmax.f32 %v3380, %v3412
        %v3445 = vmax.f32 %v3381, %v3413
        %v3446 = vmax.f32 %v3382, %v3414
        %v3447 = vmax.f32 %v3383, %v3415
        %v3448 = vmax.f32 %v3384, %v3416
        %v3449 = vld [vmem:[%s1036 + $0x2] sm:$0xff]
        %v3450 = vld [vmem:[%s1036 + $0xa] sm:$0xff]
        %v3451 = vld [vmem:[%s1036 + $0x1a] sm:$0xff]
        %v3452 = vld [vmem:[%s1036 + $0x22] sm:$0xff]
        %v3453 = vld [vmem:[%s1036 + $0x32] sm:$0xff]
        %v3454 = vld [vmem:[%s1036 + $0x3a] sm:$0xff]
        %v3455 = vld [vmem:[%s1036 + $0x4a] sm:$0xff]
        %v3456 = vld [vmem:[%s1036 + $0x52] sm:$0xff]
        %v3457 = vld [vmem:[%s1036 + $0x62] sm:$0xff]
        %v3458 = vld [vmem:[%s1036 + $0x6a] sm:$0xff]
        %v3459 = vld [vmem:[%s1036 + $0x7a] sm:$0xff]
        %v3460 = vld [vmem:[%s1036 + $0x82] sm:$0xff]
        %v3461 = vld [vmem:[%s1036 + $0x92] sm:$0xff]
        %v3462 = vld [vmem:[%s1036 + $0x9a] sm:$0xff]
        %v3463 = vld [vmem:[%s1036 + $0xaa] sm:$0xff]
        %v3464 = vld [vmem:[%s1036 + $0xb2] sm:$0xff]
        %v3465 = vld [vmem:[%s1036 + $0xc2] sm:$0xff]
        %v3466 = vld [vmem:[%s1036 + $0xca] sm:$0xff]
        %v3467 = vld [vmem:[%s1036 + $0xda] sm:$0xff]
        %v3468 = vld [vmem:[%s1036 + $0xe2] sm:$0xff]
        %v3469 = vld [vmem:[%s1036 + $0xf2] sm:$0xff]
        %v3470 = vld [vmem:[%s1036 + $0xfa] sm:$0xff]
        %v3471 = vld [vmem:[%s1036 + $0x10a] sm:$0xff]
        %v3472 = vld [vmem:[%s1036 + $0x112] sm:$0xff]
        %v3473 = vld [vmem:[%s1036 + $0x122] sm:$0xff]
        %v3474 = vld [vmem:[%s1036 + $0x12a] sm:$0xff]
        %v3475 = vld [vmem:[%s1036 + $0x13a] sm:$0xff]
        %v3476 = vld [vmem:[%s1036 + $0x142] sm:$0xff]
        %v3477 = vld [vmem:[%s1036 + $0x152] sm:$0xff]
        %v3478 = vld [vmem:[%s1036 + $0x15a] sm:$0xff]
        %v3479 = vld [vmem:[%s1036 + $0x16a] sm:$0xff]
        %v3480 = vld [vmem:[%s1036 + $0x172] sm:$0xff]
        %v3481 = vmax.f32 %v3417, %v3449
        %v3482 = vmax.f32 %v3418, %v3450
        %v3483 = vmax.f32 %v3419, %v3451
        %v3484 = vmax.f32 %v3420, %v3452
        %v3485 = vmax.f32 %v3421, %v3453
        %v3486 = vmax.f32 %v3422, %v3454
        %v3487 = vmax.f32 %v3423, %v3455
        %v3488 = vmax.f32 %v3424, %v3456
        %v3489 = vmax.f32 %v3425, %v3457
        %v3490 = vmax.f32 %v3426, %v3458
        %v3491 = vmax.f32 %v3427, %v3459
        %v3492 = vmax.f32 %v3428, %v3460
        %v3493 = vmax.f32 %v3429, %v3461
        %v3494 = vmax.f32 %v3430, %v3462
        %v3495 = vmax.f32 %v3431, %v3463
        %v3496 = vmax.f32 %v3432, %v3464
        %v3497 = vmax.f32 %v3433, %v3465
        %v3498 = vmax.f32 %v3434, %v3466
        %v3499 = vmax.f32 %v3435, %v3467
        %v3500 = vmax.f32 %v3436, %v3468
        %v3501 = vmax.f32 %v3437, %v3469
        %v3502 = vmax.f32 %v3438, %v3470
        %v3503 = vmax.f32 %v3439, %v3471
        %v3504 = vmax.f32 %v3440, %v3472
        %v3505 = vmax.f32 %v3441, %v3473
        %v3506 = vmax.f32 %v3442, %v3474
        %v3507 = vmax.f32 %v3443, %v3475
        %v3508 = vmax.f32 %v3444, %v3476
        %v3509 = vmax.f32 %v3445, %v3477
        %v3510 = vmax.f32 %v3446, %v3478
        %v3511 = vmax.f32 %v3447, %v3479
        %v3512 = vmax.f32 %v3448, %v3480
        %v3513 = vld [vmem:[%s1230 + $0x2] sm:$0xff]
        %v3514 = vld [vmem:[%s1230 + $0xa] sm:$0xff]
        %v3515 = vld [vmem:[%s1230 + $0x1a] sm:$0xff]
        %v3516 = vld [vmem:[%s1230 + $0x22] sm:$0xff]
        %v3517 = vld [vmem:[%s1230 + $0x32] sm:$0xff]
        %v3518 = vld [vmem:[%s1230 + $0x3a] sm:$0xff]
        %v3519 = vld [vmem:[%s1230 + $0x4a] sm:$0xff]
        %v3520 = vld [vmem:[%s1230 + $0x52] sm:$0xff]
        %v3521 = vld [vmem:[%s1230 + $0x62] sm:$0xff]
        %v3522 = vld [vmem:[%s1230 + $0x6a] sm:$0xff]
        %v3523 = vld [vmem:[%s1230 + $0x7a] sm:$0xff]
        %v3524 = vld [vmem:[%s1230 + $0x82] sm:$0xff]
        %v3525 = vld [vmem:[%s1230 + $0x92] sm:$0xff]
        %v3526 = vld [vmem:[%s1230 + $0x9a] sm:$0xff]
        %v3527 = vld [vmem:[%s1230 + $0xaa] sm:$0xff]
        %v3528 = vld [vmem:[%s1230 + $0xb2] sm:$0xff]
        %v3529 = vld [vmem:[%s1230 + $0xc2] sm:$0xff]
        %v3530 = vld [vmem:[%s1230 + $0xca] sm:$0xff]
        %v3531 = vld [vmem:[%s1230 + $0xda] sm:$0xff]
        %v3532 = vld [vmem:[%s1230 + $0xe2] sm:$0xff]
        %v3533 = vld [vmem:[%s1230 + $0xf2] sm:$0xff]
        %v3534 = vld [vmem:[%s1230 + $0xfa] sm:$0xff]
        %v3535 = vld [vmem:[%s1230 + $0x10a] sm:$0xff]
        %v3536 = vld [vmem:[%s1230 + $0x112] sm:$0xff]
        %v3537 = vld [vmem:[%s1230 + $0x122] sm:$0xff]
        %v3538 = vld [vmem:[%s1230 + $0x12a] sm:$0xff]
        %v3539 = vld [vmem:[%s1230 + $0x13a] sm:$0xff]
        %v3540 = vld [vmem:[%s1230 + $0x142] sm:$0xff]
        %v3541 = vld [vmem:[%s1230 + $0x152] sm:$0xff]
        %v3542 = vld [vmem:[%s1230 + $0x15a] sm:$0xff]
        %v3543 = vld [vmem:[%s1230 + $0x16a] sm:$0xff]
        %v3544 = vld [vmem:[%s1230 + $0x172] sm:$0xff]
        %v3545 = vmax.f32 %v3481, %v3513
        %v3546 = vmax.f32 %v3482, %v3514
        %v3547 = vmax.f32 %v3483, %v3515
        %v3548 = vmax.f32 %v3484, %v3516
        %v3549 = vmax.f32 %v3485, %v3517
        %v3550 = vmax.f32 %v3486, %v3518
        %v3551 = vmax.f32 %v3487, %v3519
        %v3552 = vmax.f32 %v3488, %v3520
        %v3553 = vmax.f32 %v3489, %v3521
        %v3554 = vmax.f32 %v3490, %v3522
        %v3555 = vmax.f32 %v3491, %v3523
        %v3556 = vmax.f32 %v3492, %v3524
        %v3557 = vmax.f32 %v3493, %v3525
        %v3558 = vmax.f32 %v3494, %v3526
        %v3559 = vmax.f32 %v3495, %v3527
        %v3560 = vmax.f32 %v3496, %v3528
        %v3561 = vmax.f32 %v3497, %v3529
        %v3562 = vmax.f32 %v3498, %v3530
        %v3563 = vmax.f32 %v3499, %v3531
        %v3564 = vmax.f32 %v3500, %v3532
        %v3565 = vmax.f32 %v3501, %v3533
        %v3566 = vmax.f32 %v3502, %v3534
        %v3567 = vmax.f32 %v3503, %v3535
        %v3568 = vmax.f32 %v3504, %v3536
        %v3569 = vmax.f32 %v3505, %v3537
        %v3570 = vmax.f32 %v3506, %v3538
        %v3571 = vmax.f32 %v3507, %v3539
        %v3572 = vmax.f32 %v3508, %v3540
        %v3573 = vmax.f32 %v3509, %v3541
        %v3574 = vmax.f32 %v3510, %v3542
        %v3575 = vmax.f32 %v3511, %v3543
        %v3576 = vmax.f32 %v3512, %v3544
        %v3577 = vld [vmem:[%s1295 + $0x2] sm:$0xff]
        %v3578 = vld [vmem:[%s1295 + $0xa] sm:$0xff]
        %v3579 = vld [vmem:[%s1295 + $0x1a] sm:$0xff]
        %v3580 = vld [vmem:[%s1295 + $0x22] sm:$0xff]
        %v3581 = vld [vmem:[%s1295 + $0x32] sm:$0xff]
        %v3582 = vld [vmem:[%s1295 + $0x3a] sm:$0xff]
        %v3583 = vld [vmem:[%s1295 + $0x4a] sm:$0xff]
        %v3584 = vld [vmem:[%s1295 + $0x52] sm:$0xff]
        %v3585 = vld [vmem:[%s1295 + $0x62] sm:$0xff]
        %v3586 = vld [vmem:[%s1295 + $0x6a] sm:$0xff]
        %v3587 = vld [vmem:[%s1295 + $0x7a] sm:$0xff]
        %v3588 = vld [vmem:[%s1295 + $0x82] sm:$0xff]
        %v3589 = vld [vmem:[%s1295 + $0x92] sm:$0xff]
        %v3590 = vld [vmem:[%s1295 + $0x9a] sm:$0xff]
        %v3591 = vld [vmem:[%s1295 + $0xaa] sm:$0xff]
        %v3592 = vld [vmem:[%s1295 + $0xb2] sm:$0xff]
        %v3593 = vld [vmem:[%s1295 + $0xc2] sm:$0xff]
        %v3594 = vld [vmem:[%s1295 + $0xca] sm:$0xff]
        %v3595 = vld [vmem:[%s1295 + $0xda] sm:$0xff]
        %v3596 = vld [vmem:[%s1295 + $0xe2] sm:$0xff]
        %v3597 = vld [vmem:[%s1295 + $0xf2] sm:$0xff]
        %v3598 = vld [vmem:[%s1295 + $0xfa] sm:$0xff]
        %v3599 = vld [vmem:[%s1295 + $0x10a] sm:$0xff]
        %v3600 = vld [vmem:[%s1295 + $0x112] sm:$0xff]
        %v3601 = vld [vmem:[%s1295 + $0x122] sm:$0xff]
        %v3602 = vld [vmem:[%s1295 + $0x12a] sm:$0xff]
        %v3603 = vld [vmem:[%s1295 + $0x13a] sm:$0xff]
        %v3604 = vld [vmem:[%s1295 + $0x142] sm:$0xff]
        %v3605 = vld [vmem:[%s1295 + $0x152] sm:$0xff]
        %v3606 = vld [vmem:[%s1295 + $0x15a] sm:$0xff]
        %v3607 = vld [vmem:[%s1295 + $0x16a] sm:$0xff]
        %v3608 = vld [vmem:[%s1295 + $0x172] sm:$0xff]
        %v3609 = vmax.f32 %v3545, %v3577
        %v3610 = vmax.f32 %v3546, %v3578
        %v3611 = vmax.f32 %v3547, %v3579
        %v3612 = vmax.f32 %v3548, %v3580
        %v3613 = vmax.f32 %v3549, %v3581
        %v3614 = vmax.f32 %v3550, %v3582
        %v3615 = vmax.f32 %v3551, %v3583
        %v3616 = vmax.f32 %v3552, %v3584
        %v3617 = vmax.f32 %v3553, %v3585
        %v3618 = vmax.f32 %v3554, %v3586
        %v3619 = vmax.f32 %v3555, %v3587
        %v3620 = vmax.f32 %v3556, %v3588
        %v3621 = vmax.f32 %v3557, %v3589
        %v3622 = vmax.f32 %v3558, %v3590
        %v3623 = vmax.f32 %v3559, %v3591
        %v3624 = vmax.f32 %v3560, %v3592
        %v3625 = vmax.f32 %v3561, %v3593
        %v3626 = vmax.f32 %v3562, %v3594
        %v3627 = vmax.f32 %v3563, %v3595
        %v3628 = vmax.f32 %v3564, %v3596
        %v3629 = vmax.f32 %v3565, %v3597
        %v3630 = vmax.f32 %v3566, %v3598
        %v3631 = vmax.f32 %v3567, %v3599
        %v3632 = vmax.f32 %v3568, %v3600
        %v3633 = vmax.f32 %v3569, %v3601
        %v3634 = vmax.f32 %v3570, %v3602
        %v3635 = vmax.f32 %v3571, %v3603
        %v3636 = vmax.f32 %v3572, %v3604
        %v3637 = vmax.f32 %v3573, %v3605
        %v3638 = vmax.f32 %v3574, %v3606
        %v3639 = vmax.f32 %v3575, %v3607
        %v3640 = vmax.f32 %v3576, %v3608
        %3641 = vst.msk [vmem:[%s1036 + $0x2] sm:$0xff] %vm974, %v3609
        %3642 = vst.msk [vmem:[%s1036 + $0xa] sm:$0xff] %vm974, %v3610
        %3643 = vst.msk [vmem:[%s1036 + $0x1a] sm:$0xff] %vm974, %v3611
        %3644 = vst.msk [vmem:[%s1036 + $0x22] sm:$0xff] %vm974, %v3612
        %3645 = vst.msk [vmem:[%s1036 + $0x32] sm:$0xff] %vm974, %v3613
        %3646 = vst.msk [vmem:[%s1036 + $0x3a] sm:$0xff] %vm974, %v3614
        %3647 = vst.msk [vmem:[%s1036 + $0x4a] sm:$0xff] %vm974, %v3615
        %3648 = vst.msk [vmem:[%s1036 + $0x52] sm:$0xff] %vm974, %v3616
        %3649 = vst.msk [vmem:[%s1036 + $0x62] sm:$0xff] %vm974, %v3617
        %3650 = vst.msk [vmem:[%s1036 + $0x6a] sm:$0xff] %vm974, %v3618
        %3651 = vst.msk [vmem:[%s1036 + $0x7a] sm:$0xff] %vm974, %v3619
        %3652 = vst.msk [vmem:[%s1036 + $0x82] sm:$0xff] %vm974, %v3620
        %3653 = vst.msk [vmem:[%s1036 + $0x92] sm:$0xff] %vm974, %v3621
        %3654 = vst.msk [vmem:[%s1036 + $0x9a] sm:$0xff] %vm974, %v3622
        %3655 = vst.msk [vmem:[%s1036 + $0xaa] sm:$0xff] %vm974, %v3623
        %3656 = vst.msk [vmem:[%s1036 + $0xb2] sm:$0xff] %vm974, %v3624
        %3657 = vst.msk [vmem:[%s1036 + $0xc2] sm:$0xff] %vm974, %v3625
        %3658 = vst.msk [vmem:[%s1036 + $0xca] sm:$0xff] %vm974, %v3626
        %3659 = vst.msk [vmem:[%s1036 + $0xda] sm:$0xff] %vm974, %v3627
        %3660 = vst.msk [vmem:[%s1036 + $0xe2] sm:$0xff] %vm974, %v3628
        %3661 = vst.msk [vmem:[%s1036 + $0xf2] sm:$0xff] %vm974, %v3629
        %3662 = vst.msk [vmem:[%s1036 + $0xfa] sm:$0xff] %vm974, %v3630
        %3663 = vst.msk [vmem:[%s1036 + $0x10a] sm:$0xff] %vm974, %v3631
        %3664 = vst.msk [vmem:[%s1036 + $0x112] sm:$0xff] %vm974, %v3632
        %3665 = vst.msk [vmem:[%s1036 + $0x122] sm:$0xff] %vm974, %v3633
        %3666 = vst.msk [vmem:[%s1036 + $0x12a] sm:$0xff] %vm974, %v3634
        %3667 = vst.msk [vmem:[%s1036 + $0x13a] sm:$0xff] %vm974, %v3635
        %3668 = vst.msk [vmem:[%s1036 + $0x142] sm:$0xff] %vm974, %v3636
        %3669 = vst.msk [vmem:[%s1036 + $0x152] sm:$0xff] %vm974, %v3637
        %3670 = vst.msk [vmem:[%s1036 + $0x15a] sm:$0xff] %vm974, %v3638
        %3671 = vst.msk [vmem:[%s1036 + $0x16a] sm:$0xff] %vm974, %v3639
        %3672 = vst.msk [vmem:[%s1036 + $0x172] sm:$0xff] %vm974, %v3640
        %v3673 = vld [vmem:[%s1036] sm:$0xff]
        %v3674 = vld [vmem:[%s1036 + $0x8] sm:$0xff]
        %v3675 = vld [vmem:[%s1036 + $0x18] sm:$0xff]
        %v3676 = vld [vmem:[%s1036 + $0x20] sm:$0xff]
        %v3677 = vld [vmem:[%s1036 + $0x30] sm:$0xff]
        %v3678 = vld [vmem:[%s1036 + $0x38] sm:$0xff]
        %v3679 = vld [vmem:[%s1036 + $0x48] sm:$0xff]
        %v3680 = vld [vmem:[%s1036 + $0x50] sm:$0xff]
        %v3681 = vld [vmem:[%s1036 + $0x60] sm:$0xff]
        %v3682 = vld [vmem:[%s1036 + $0x68] sm:$0xff]
        %v3683 = vld [vmem:[%s1036 + $0x78] sm:$0xff]
        %v3684 = vld [vmem:[%s1036 + $0x80] sm:$0xff]
        %v3685 = vld [vmem:[%s1036 + $0x90] sm:$0xff]
        %v3686 = vld [vmem:[%s1036 + $0x98] sm:$0xff]
        %v3687 = vld [vmem:[%s1036 + $0xa8] sm:$0xff]
        %v3688 = vld [vmem:[%s1036 + $0xb0] sm:$0xff]
        %v3689 = vld [vmem:[%s1036 + $0xc0] sm:$0xff]
        %v3690 = vld [vmem:[%s1036 + $0xc8] sm:$0xff]
        %v3691 = vld [vmem:[%s1036 + $0xd8] sm:$0xff]
        %v3692 = vld [vmem:[%s1036 + $0xe0] sm:$0xff]
        %v3693 = vld [vmem:[%s1036 + $0xf0] sm:$0xff]
        %v3694 = vld [vmem:[%s1036 + $0xf8] sm:$0xff]
        %v3695 = vld [vmem:[%s1036 + $0x108] sm:$0xff]
        %v3696 = vld [vmem:[%s1036 + $0x110] sm:$0xff]
        %v3697 = vld [vmem:[%s1036 + $0x120] sm:$0xff]
        %v3698 = vld [vmem:[%s1036 + $0x128] sm:$0xff]
        %v3699 = vld [vmem:[%s1036 + $0x138] sm:$0xff]
        %v3700 = vld [vmem:[%s1036 + $0x140] sm:$0xff]
        %v3701 = vld [vmem:[%s1036 + $0x150] sm:$0xff]
        %v3702 = vld [vmem:[%s1036 + $0x158] sm:$0xff]
        %v3703 = vld [vmem:[%s1036 + $0x168] sm:$0xff]
        %v3704 = vld [vmem:[%s1036 + $0x170] sm:$0xff]
        %v3705 = vld [vmem:[%s1036 + $0x1] sm:$0xff]
        %v3706 = vld [vmem:[%s1036 + $0x9] sm:$0xff]
        %v3707 = vld [vmem:[%s1036 + $0x19] sm:$0xff]
        %v3708 = vld [vmem:[%s1036 + $0x21] sm:$0xff]
        %v3709 = vld [vmem:[%s1036 + $0x31] sm:$0xff]
        %v3710 = vld [vmem:[%s1036 + $0x39] sm:$0xff]
        %v3711 = vld [vmem:[%s1036 + $0x49] sm:$0xff]
        %v3712 = vld [vmem:[%s1036 + $0x51] sm:$0xff]
        %v3713 = vld [vmem:[%s1036 + $0x61] sm:$0xff]
        %v3714 = vld [vmem:[%s1036 + $0x69] sm:$0xff]
        %v3715 = vld [vmem:[%s1036 + $0x79] sm:$0xff]
        %v3716 = vld [vmem:[%s1036 + $0x81] sm:$0xff]
        %v3717 = vld [vmem:[%s1036 + $0x91] sm:$0xff]
        %v3718 = vld [vmem:[%s1036 + $0x99] sm:$0xff]
        %v3719 = vld [vmem:[%s1036 + $0xa9] sm:$0xff]
        %v3720 = vld [vmem:[%s1036 + $0xb1] sm:$0xff]
        %v3721 = vld [vmem:[%s1036 + $0xc1] sm:$0xff]
        %v3722 = vld [vmem:[%s1036 + $0xc9] sm:$0xff]
        %v3723 = vld [vmem:[%s1036 + $0xd9] sm:$0xff]
        %v3724 = vld [vmem:[%s1036 + $0xe1] sm:$0xff]
        %v3725 = vld [vmem:[%s1036 + $0xf1] sm:$0xff]
        %v3726 = vld [vmem:[%s1036 + $0xf9] sm:$0xff]
        %v3727 = vld [vmem:[%s1036 + $0x109] sm:$0xff]
        %v3728 = vld [vmem:[%s1036 + $0x111] sm:$0xff]
        %v3729 = vld [vmem:[%s1036 + $0x121] sm:$0xff]
        %v3730 = vld [vmem:[%s1036 + $0x129] sm:$0xff]
        %v3731 = vld [vmem:[%s1036 + $0x139] sm:$0xff]
        %v3732 = vld [vmem:[%s1036 + $0x141] sm:$0xff]
        %v3733 = vld [vmem:[%s1036 + $0x151] sm:$0xff]
        %v3734 = vld [vmem:[%s1036 + $0x159] sm:$0xff]
        %v3735 = vld [vmem:[%s1036 + $0x169] sm:$0xff]
        %v3736 = vld [vmem:[%s1036 + $0x171] sm:$0xff]
        %v3737 = vmax.f32 %v3673, %v3705
        %v3738 = vmax.f32 %v3674, %v3706
        %v3739 = vmax.f32 %v3675, %v3707
        %v3740 = vmax.f32 %v3676, %v3708
        %v3741 = vmax.f32 %v3677, %v3709
        %v3742 = vmax.f32 %v3678, %v3710
        %v3743 = vmax.f32 %v3679, %v3711
        %v3744 = vmax.f32 %v3680, %v3712
        %v3745 = vmax.f32 %v3681, %v3713
        %v3746 = vmax.f32 %v3682, %v3714
        %v3747 = vmax.f32 %v3683, %v3715
        %v3748 = vmax.f32 %v3684, %v3716
        %v3749 = vmax.f32 %v3685, %v3717
        %v3750 = vmax.f32 %v3686, %v3718
        %v3751 = vmax.f32 %v3687, %v3719
        %v3752 = vmax.f32 %v3688, %v3720
        %v3753 = vmax.f32 %v3689, %v3721
        %v3754 = vmax.f32 %v3690, %v3722
        %v3755 = vmax.f32 %v3691, %v3723
        %v3756 = vmax.f32 %v3692, %v3724
        %v3757 = vmax.f32 %v3693, %v3725
        %v3758 = vmax.f32 %v3694, %v3726
        %v3759 = vmax.f32 %v3695, %v3727
        %v3760 = vmax.f32 %v3696, %v3728
        %v3761 = vmax.f32 %v3697, %v3729
        %v3762 = vmax.f32 %v3698, %v3730
        %v3763 = vmax.f32 %v3699, %v3731
        %v3764 = vmax.f32 %v3700, %v3732
        %v3765 = vmax.f32 %v3701, %v3733
        %v3766 = vmax.f32 %v3702, %v3734
        %v3767 = vmax.f32 %v3703, %v3735
        %v3768 = vmax.f32 %v3704, %v3736
        %v3769 = vld [vmem:[%s1036 + $0x2] sm:$0xff]
        %v3770 = vld [vmem:[%s1036 + $0xa] sm:$0xff]
        %v3771 = vld [vmem:[%s1036 + $0x1a] sm:$0xff]
        %v3772 = vld [vmem:[%s1036 + $0x22] sm:$0xff]
        %v3773 = vld [vmem:[%s1036 + $0x32] sm:$0xff]
        %v3774 = vld [vmem:[%s1036 + $0x3a] sm:$0xff]
        %v3775 = vld [vmem:[%s1036 + $0x4a] sm:$0xff]
        %v3776 = vld [vmem:[%s1036 + $0x52] sm:$0xff]
        %v3777 = vld [vmem:[%s1036 + $0x62] sm:$0xff]
        %v3778 = vld [vmem:[%s1036 + $0x6a] sm:$0xff]
        %v3779 = vld [vmem:[%s1036 + $0x7a] sm:$0xff]
        %v3780 = vld [vmem:[%s1036 + $0x82] sm:$0xff]
        %v3781 = vld [vmem:[%s1036 + $0x92] sm:$0xff]
        %v3782 = vld [vmem:[%s1036 + $0x9a] sm:$0xff]
        %v3783 = vld [vmem:[%s1036 + $0xaa] sm:$0xff]
        %v3784 = vld [vmem:[%s1036 + $0xb2] sm:$0xff]
        %v3785 = vld [vmem:[%s1036 + $0xc2] sm:$0xff]
        %v3786 = vld [vmem:[%s1036 + $0xca] sm:$0xff]
        %v3787 = vld [vmem:[%s1036 + $0xda] sm:$0xff]
        %v3788 = vld [vmem:[%s1036 + $0xe2] sm:$0xff]
        %v3789 = vld [vmem:[%s1036 + $0xf2] sm:$0xff]
        %v3790 = vld [vmem:[%s1036 + $0xfa] sm:$0xff]
        %v3791 = vld [vmem:[%s1036 + $0x10a] sm:$0xff]
        %v3792 = vld [vmem:[%s1036 + $0x112] sm:$0xff]
        %v3793 = vld [vmem:[%s1036 + $0x122] sm:$0xff]
        %v3794 = vld [vmem:[%s1036 + $0x12a] sm:$0xff]
        %v3795 = vld [vmem:[%s1036 + $0x13a] sm:$0xff]
        %v3796 = vld [vmem:[%s1036 + $0x142] sm:$0xff]
        %v3797 = vld [vmem:[%s1036 + $0x152] sm:$0xff]
        %v3798 = vld [vmem:[%s1036 + $0x15a] sm:$0xff]
        %v3799 = vld [vmem:[%s1036 + $0x16a] sm:$0xff]
        %v3800 = vld [vmem:[%s1036 + $0x172] sm:$0xff]
        %v3801 = vmax.f32 %v3737, %v3769
        %v3802 = vmax.f32 %v3738, %v3770
        %v3803 = vmax.f32 %v3739, %v3771
        %v3804 = vmax.f32 %v3740, %v3772
        %v3805 = vmax.f32 %v3741, %v3773
        %v3806 = vmax.f32 %v3742, %v3774
        %v3807 = vmax.f32 %v3743, %v3775
        %v3808 = vmax.f32 %v3744, %v3776
        %v3809 = vmax.f32 %v3745, %v3777
        %v3810 = vmax.f32 %v3746, %v3778
        %v3811 = vmax.f32 %v3747, %v3779
        %v3812 = vmax.f32 %v3748, %v3780
        %v3813 = vmax.f32 %v3749, %v3781
        %v3814 = vmax.f32 %v3750, %v3782
        %v3815 = vmax.f32 %v3751, %v3783
        %v3816 = vmax.f32 %v3752, %v3784
        %v3817 = vmax.f32 %v3753, %v3785
        %v3818 = vmax.f32 %v3754, %v3786
        %v3819 = vmax.f32 %v3755, %v3787
        %v3820 = vmax.f32 %v3756, %v3788
        %v3821 = vmax.f32 %v3757, %v3789
        %v3822 = vmax.f32 %v3758, %v3790
        %v3823 = vmax.f32 %v3759, %v3791
        %v3824 = vmax.f32 %v3760, %v3792
        %v3825 = vmax.f32 %v3761, %v3793
        %v3826 = vmax.f32 %v3762, %v3794
        %v3827 = vmax.f32 %v3763, %v3795
        %v3828 = vmax.f32 %v3764, %v3796
        %v3829 = vmax.f32 %v3765, %v3797
        %v3830 = vmax.f32 %v3766, %v3798
        %v3831 = vmax.f32 %v3767, %v3799
        %v3832 = vmax.f32 %v3768, %v3800
        %v3833 = vld [vmem:[%s1036 + $0x3] sm:$0xff]
        %v3834 = vld [vmem:[%s1036 + $0xb] sm:$0xff]
        %v3835 = vld [vmem:[%s1036 + $0x1b] sm:$0xff]
        %v3836 = vld [vmem:[%s1036 + $0x23] sm:$0xff]
        %v3837 = vld [vmem:[%s1036 + $0x33] sm:$0xff]
        %v3838 = vld [vmem:[%s1036 + $0x3b] sm:$0xff]
        %v3839 = vld [vmem:[%s1036 + $0x4b] sm:$0xff]
        %v3840 = vld [vmem:[%s1036 + $0x53] sm:$0xff]
        %v3841 = vld [vmem:[%s1036 + $0x63] sm:$0xff]
        %v3842 = vld [vmem:[%s1036 + $0x6b] sm:$0xff]
        %v3843 = vld [vmem:[%s1036 + $0x7b] sm:$0xff]
        %v3844 = vld [vmem:[%s1036 + $0x83] sm:$0xff]
        %v3845 = vld [vmem:[%s1036 + $0x93] sm:$0xff]
        %v3846 = vld [vmem:[%s1036 + $0x9b] sm:$0xff]
        %v3847 = vld [vmem:[%s1036 + $0xab] sm:$0xff]
        %v3848 = vld [vmem:[%s1036 + $0xb3] sm:$0xff]
        %v3849 = vld [vmem:[%s1036 + $0xc3] sm:$0xff]
        %v3850 = vld [vmem:[%s1036 + $0xcb] sm:$0xff]
        %v3851 = vld [vmem:[%s1036 + $0xdb] sm:$0xff]
        %v3852 = vld [vmem:[%s1036 + $0xe3] sm:$0xff]
        %v3853 = vld [vmem:[%s1036 + $0xf3] sm:$0xff]
        %v3854 = vld [vmem:[%s1036 + $0xfb] sm:$0xff]
        %v3855 = vld [vmem:[%s1036 + $0x10b] sm:$0xff]
        %v3856 = vld [vmem:[%s1036 + $0x113] sm:$0xff]
        %v3857 = vld [vmem:[%s1036 + $0x123] sm:$0xff]
        %v3858 = vld [vmem:[%s1036 + $0x12b] sm:$0xff]
        %v3859 = vld [vmem:[%s1036 + $0x13b] sm:$0xff]
        %v3860 = vld [vmem:[%s1036 + $0x143] sm:$0xff]
        %v3861 = vld [vmem:[%s1036 + $0x153] sm:$0xff]
        %v3862 = vld [vmem:[%s1036 + $0x15b] sm:$0xff]
        %v3863 = vld [vmem:[%s1036 + $0x16b] sm:$0xff]
        %v3864 = vld [vmem:[%s1036 + $0x173] sm:$0xff]
        %v3865 = vmax.f32 %v3801, %v3833
        %v3866 = vmax.f32 %v3802, %v3834
        %v3867 = vmax.f32 %v3803, %v3835
        %v3868 = vmax.f32 %v3804, %v3836
        %v3869 = vmax.f32 %v3805, %v3837
        %v3870 = vmax.f32 %v3806, %v3838
        %v3871 = vmax.f32 %v3807, %v3839
        %v3872 = vmax.f32 %v3808, %v3840
        %v3873 = vmax.f32 %v3809, %v3841
        %v3874 = vmax.f32 %v3810, %v3842
        %v3875 = vmax.f32 %v3811, %v3843
        %v3876 = vmax.f32 %v3812, %v3844
        %v3877 = vmax.f32 %v3813, %v3845
        %v3878 = vmax.f32 %v3814, %v3846
        %v3879 = vmax.f32 %v3815, %v3847
        %v3880 = vmax.f32 %v3816, %v3848
        %v3881 = vmax.f32 %v3817, %v3849
        %v3882 = vmax.f32 %v3818, %v3850
        %v3883 = vmax.f32 %v3819, %v3851
        %v3884 = vmax.f32 %v3820, %v3852
        %v3885 = vmax.f32 %v3821, %v3853
        %v3886 = vmax.f32 %v3822, %v3854
        %v3887 = vmax.f32 %v3823, %v3855
        %v3888 = vmax.f32 %v3824, %v3856
        %v3889 = vmax.f32 %v3825, %v3857
        %v3890 = vmax.f32 %v3826, %v3858
        %v3891 = vmax.f32 %v3827, %v3859
        %v3892 = vmax.f32 %v3828, %v3860
        %v3893 = vmax.f32 %v3829, %v3861
        %v3894 = vmax.f32 %v3830, %v3862
        %v3895 = vmax.f32 %v3831, %v3863
        %v3896 = vmax.f32 %v3832, %v3864
        %v3897 = vld [vmem:[%s1036 + $0x4] sm:$0xff]
        %v3898 = vld [vmem:[%s1036 + $0xc] sm:$0xff]
        %v3899 = vld [vmem:[%s1036 + $0x1c] sm:$0xff]
        %v3900 = vld [vmem:[%s1036 + $0x24] sm:$0xff]
        %v3901 = vld [vmem:[%s1036 + $0x34] sm:$0xff]
        %v3902 = vld [vmem:[%s1036 + $0x3c] sm:$0xff]
        %v3903 = vld [vmem:[%s1036 + $0x4c] sm:$0xff]
        %v3904 = vld [vmem:[%s1036 + $0x54] sm:$0xff]
        %v3905 = vld [vmem:[%s1036 + $0x64] sm:$0xff]
        %v3906 = vld [vmem:[%s1036 + $0x6c] sm:$0xff]
        %v3907 = vld [vmem:[%s1036 + $0x7c] sm:$0xff]
        %v3908 = vld [vmem:[%s1036 + $0x84] sm:$0xff]
        %v3909 = vld [vmem:[%s1036 + $0x94] sm:$0xff]
        %v3910 = vld [vmem:[%s1036 + $0x9c] sm:$0xff]
        %v3911 = vld [vmem:[%s1036 + $0xac] sm:$0xff]
        %v3912 = vld [vmem:[%s1036 + $0xb4] sm:$0xff]
        %v3913 = vld [vmem:[%s1036 + $0xc4] sm:$0xff]
        %v3914 = vld [vmem:[%s1036 + $0xcc] sm:$0xff]
        %v3915 = vld [vmem:[%s1036 + $0xdc] sm:$0xff]
        %v3916 = vld [vmem:[%s1036 + $0xe4] sm:$0xff]
        %v3917 = vld [vmem:[%s1036 + $0xf4] sm:$0xff]
        %v3918 = vld [vmem:[%s1036 + $0xfc] sm:$0xff]
        %v3919 = vld [vmem:[%s1036 + $0x10c] sm:$0xff]
        %v3920 = vld [vmem:[%s1036 + $0x114] sm:$0xff]
        %v3921 = vld [vmem:[%s1036 + $0x124] sm:$0xff]
        %v3922 = vld [vmem:[%s1036 + $0x12c] sm:$0xff]
        %v3923 = vld [vmem:[%s1036 + $0x13c] sm:$0xff]
        %v3924 = vld [vmem:[%s1036 + $0x144] sm:$0xff]
        %v3925 = vld [vmem:[%s1036 + $0x154] sm:$0xff]
        %v3926 = vld [vmem:[%s1036 + $0x15c] sm:$0xff]
        %v3927 = vld [vmem:[%s1036 + $0x16c] sm:$0xff]
        %v3928 = vld [vmem:[%s1036 + $0x174] sm:$0xff]
        %v3929 = vmax.f32 %v3865, %v3897
        %v3930 = vmax.f32 %v3866, %v3898
        %v3931 = vmax.f32 %v3867, %v3899
        %v3932 = vmax.f32 %v3868, %v3900
        %v3933 = vmax.f32 %v3869, %v3901
        %v3934 = vmax.f32 %v3870, %v3902
        %v3935 = vmax.f32 %v3871, %v3903
        %v3936 = vmax.f32 %v3872, %v3904
        %v3937 = vmax.f32 %v3873, %v3905
        %v3938 = vmax.f32 %v3874, %v3906
        %v3939 = vmax.f32 %v3875, %v3907
        %v3940 = vmax.f32 %v3876, %v3908
        %v3941 = vmax.f32 %v3877, %v3909
        %v3942 = vmax.f32 %v3878, %v3910
        %v3943 = vmax.f32 %v3879, %v3911
        %v3944 = vmax.f32 %v3880, %v3912
        %v3945 = vmax.f32 %v3881, %v3913
        %v3946 = vmax.f32 %v3882, %v3914
        %v3947 = vmax.f32 %v3883, %v3915
        %v3948 = vmax.f32 %v3884, %v3916
        %v3949 = vmax.f32 %v3885, %v3917
        %v3950 = vmax.f32 %v3886, %v3918
        %v3951 = vmax.f32 %v3887, %v3919
        %v3952 = vmax.f32 %v3888, %v3920
        %v3953 = vmax.f32 %v3889, %v3921
        %v3954 = vmax.f32 %v3890, %v3922
        %v3955 = vmax.f32 %v3891, %v3923
        %v3956 = vmax.f32 %v3892, %v3924
        %v3957 = vmax.f32 %v3893, %v3925
        %v3958 = vmax.f32 %v3894, %v3926
        %v3959 = vmax.f32 %v3895, %v3927
        %v3960 = vmax.f32 %v3896, %v3928
        %s3961 = scalar_lea.vmem [#allocation6], 48
        %v3962 = vld [vmem:[%s3961] sm:$0xff]
        %v3963 = vld [vmem:[%s3961 + $0x8] sm:$0xff]
        %v3965 = vsel %vm974, %v3929, 0
        %v3968 = vsel %vm974, %v3930, 0
        %v3971 = vsel %vm974, %v3931, 0
        %v3974 = vsel %vm974, %v3932, 0
        %v3977 = vsel %vm974, %v3933, 0
        %v3980 = vsel %vm974, %v3934, 0
        %v3983 = vsel %vm974, %v3935, 0
        %v3986 = vsel %vm974, %v3936, 0
        %v3989 = vsel %vm974, %v3937, 0
        %v3992 = vsel %vm974, %v3938, 0
        %v3995 = vsel %vm974, %v3939, 0
        %v3998 = vsel %vm974, %v3940, 0
        %v4001 = vsel %vm974, %v3941, 0
        %v4004 = vsel %vm974, %v3942, 0
        %v4007 = vsel %vm974, %v3943, 0
        %v4010 = vsel %vm974, %v3944, 0
        %v4013 = vsel %vm974, %v3945, 0
        %v4016 = vsel %vm974, %v3946, 0
        %v4019 = vsel %vm974, %v3947, 0
        %v4022 = vsel %vm974, %v3948, 0
        %v4025 = vsel %vm974, %v3949, 0
        %v4028 = vsel %vm974, %v3950, 0
        %v4031 = vsel %vm974, %v3951, 0
        %v4034 = vsel %vm974, %v3952, 0
        %v4037 = vsel %vm974, %v3953, 0
        %v4040 = vsel %vm974, %v3954, 0
        %v4043 = vsel %vm974, %v3955, 0
        %v4046 = vsel %vm974, %v3956, 0
        %v4049 = vsel %vm974, %v3957, 0
        %v4052 = vsel %vm974, %v3958, 0
        %v4055 = vsel %vm974, %v3959, 0
        %v4058 = vsel %vm974, %v3960, 0
        %4060 = vmatprep.subr.mxu0 0.0
        %4061 = vmatpush1.msra.mxu0 %v3962
        %4062 = vmatprep.subr.mxu0 0.0
        %4063 = vmatpush1.msra.mxu0 %v3963
        %4064 = vmatprep.subr.mxu0 0.0
        %4065 = vmatpush1.msra.mxu0 0.0
        %4066 = vmatprep.subr.mxu0 0.0
        %4067 = vmatpush1.msra.mxu0 0.0
        %4068 = vmatprep.subr.mxu0 0.0
        %4069 = vmatpush1.msra.mxu0 0.0
        %4070 = vmatprep.subr.mxu0 0.0
        %4071 = vmatpush1.msra.mxu0 0.0
        %4072 = vmatprep.subr.mxu0 0.0
        %4073 = vmatpush1.msra.mxu0 0.0
        %4074 = vmatprep.subr.mxu0 0.0
        %4075 = vmatpush1.msra.mxu0 0.0
        %4076 = vmatprep.subr.mxu0 0.0
        %4077 = vmatpush1.msra.mxu0 0.0
        %4078 = vmatprep.subr.mxu0 0.0
        %4079 = vmatpush1.msra.mxu0 0.0
        %4080 = vmatprep.subr.mxu0 0.0
        %4081 = vmatpush1.msra.mxu0 0.0
        %4082 = vmatprep.subr.mxu0 0.0
        %4083 = vmatpush1.msra.mxu0 0.0
        %4084 = vmatprep.subr.mxu0 0.0
        %4085 = vmatpush1.msra.mxu0 0.0
        %4086 = vmatprep.subr.mxu0 0.0
        %4087 = vmatpush1.msra.mxu0 0.0
        %4088 = vmatprep.subr.mxu0 0.0
        %4089 = vmatpush1.msra.mxu0 0.0
        %4090 = vmatprep.subr.mxu0 0.0
        %4091 = vmatpush1.msra.mxu0 0.0
        %4092 = vmatprep.subr.mxu0 0.0
        %4093 = vmatpush1.msra.mxu0 0.0
        %4094 = vmatprep.subr.mxu0 0.0
        %4095 = vmatpush1.msra.mxu0 0.0
        %4096 = vmatprep.subr.mxu0 0.0
        %4097 = vmatpush1.msra.mxu0 0.0
        %4098 = vmatprep.subr.mxu0 0.0
        %4099 = vmatpush1.msra.mxu0 0.0
        %4100 = vmatprep.subr.mxu0 0.0
        %4101 = vmatpush1.msra.mxu0 0.0
        %4102 = vmatprep.subr.mxu0 0.0
        %4103 = vmatpush1.msra.mxu0 0.0
        %4104 = vmatprep.subr.mxu0 0.0
        %4105 = vmatpush1.msra.mxu0 0.0
        %4106 = vmatprep.subr.mxu0 0.0
        %4107 = vmatpush1.msra.mxu0 0.0
        %4108 = vmatprep.subr.mxu0 0.0
        %4109 = vmatpush1.msra.mxu0 0.0
        %4110 = vmatprep.subr.mxu0 0.0
        %4111 = vmatpush1.msra.mxu0 0.0
        %4112 = vmatprep.subr.mxu0 0.0
        %4113 = vmatpush1.msra.mxu0 0.0
        %4114 = vmatprep.subr.mxu0 0.0
        %4115 = vmatpush1.msra.mxu0 0.0
        %4116 = vmatprep.subr.mxu0 0.0
        %4117 = vmatpush1.msra.mxu0 0.0
        %4118 = vmatprep.subr.mxu0 0.0
        %4119 = vmatpush1.msra.mxu0 0.0
        %4120 = vmatprep.subr.mxu0 0.0
        %4121 = vmatpush1.msra.mxu0 0.0
        %4122 = vmatprep.subr.mxu0 0.0
        %4123 = vmatpush1.msra.mxu0 0.0
        %4124 = vmatprep.mubr.f32.mxu0 0.0
        %4125 = vmatmul.mubr.f32.gmra.mrb[0].mxu0 %v3965
        %v4126 = vpop.f32.mrb[0].mxu0
        %v4127 = vadd.f32 0.0, %v4126
        %v4128 = vpop.f32.mrb[0].mxu0
        %4129 = vmatprep.mubr.f32.mxu0 0.0
        %4130 = vmatmul.mubr.f32.gmra.mrb[0].mxu0 %v3968
        %v4131 = vpop.f32.mrb[0].mxu0
        %v4132 = vadd.f32 0.0, %v4131
        %v4133 = vpop.f32.mrb[0].mxu0
        %4134 = vmatprep.mubr.f32.mxu0 0.0
        %4135 = vmatmul.mubr.f32.gmra.mrb[0].mxu0 %v3971
        %v4136 = vpop.f32.mrb[0].mxu0
        %v4137 = vadd.f32 0.0, %v4136
        %v4138 = vpop.f32.mrb[0].mxu0
        %4139 = vmatprep.mubr.f32.mxu0 0.0
        %4140 = vmatmul.mubr.f32.gmra.mrb[0].mxu0 %v3974
        %v4141 = vpop.f32.mrb[0].mxu0
        %v4142 = vadd.f32 0.0, %v4141
        %v4143 = vpop.f32.mrb[0].mxu0
        %4144 = vmatprep.mubr.f32.mxu0 0.0
        %4145 = vmatmul.mubr.f32.gmra.mrb[0].mxu0 %v3977
        %v4146 = vpop.f32.mrb[0].mxu0
        %v4147 = vadd.f32 0.0, %v4146
        %v4148 = vpop.f32.mrb[0].mxu0
        %4149 = vmatprep.mubr.f32.mxu0 0.0
        %4150 = vmatmul.mubr.f32.gmra.mrb[0].mxu0 %v3980
        %v4151 = vpop.f32.mrb[0].mxu0
        %v4152 = vadd.f32 0.0, %v4151
        %v4153 = vpop.f32.mrb[0].mxu0
        %4154 = vmatprep.mubr.f32.mxu0 0.0
        %4155 = vmatmul.mubr.f32.gmra.mrb[0].mxu0 %v3983
        %v4156 = vpop.f32.mrb[0].mxu0
        %v4157 = vadd.f32 0.0, %v4156
        %v4158 = vpop.f32.mrb[0].mxu0
        %4159 = vmatprep.mubr.f32.mxu0 0.0
        %4160 = vmatmul.mubr.f32.gmra.mrb[0].mxu0 %v3986
        %v4161 = vpop.f32.mrb[0].mxu0
        %v4162 = vadd.f32 0.0, %v4161
        %v4163 = vpop.f32.mrb[0].mxu0
        %4164 = vmatprep.mubr.f32.mxu0 0.0
        %4165 = vmatmul.mubr.f32.gmra.mrb[0].mxu0 %v3989
        %v4166 = vpop.f32.mrb[0].mxu0
        %v4167 = vadd.f32 0.0, %v4166
        %v4168 = vpop.f32.mrb[0].mxu0
        %4169 = vmatprep.mubr.f32.mxu0 0.0
        %4170 = vmatmul.mubr.f32.gmra.mrb[0].mxu0 %v3992
        %v4171 = vpop.f32.mrb[0].mxu0
        %v4172 = vadd.f32 0.0, %v4171
        %v4173 = vpop.f32.mrb[0].mxu0
        %4174 = vmatprep.mubr.f32.mxu0 0.0
        %4175 = vmatmul.mubr.f32.gmra.mrb[0].mxu0 %v3995
        %v4176 = vpop.f32.mrb[0].mxu0
        %v4177 = vadd.f32 0.0, %v4176
        %v4178 = vpop.f32.mrb[0].mxu0
        %4179 = vmatprep.mubr.f32.mxu0 0.0
        %4180 = vmatmul.mubr.f32.gmra.mrb[0].mxu0 %v3998
        %v4181 = vpop.f32.mrb[0].mxu0
        %v4182 = vadd.f32 0.0, %v4181
        %v4183 = vpop.f32.mrb[0].mxu0
        %4184 = vmatprep.mubr.f32.mxu0 0.0
        %4185 = vmatmul.mubr.f32.gmra.mrb[0].mxu0 %v4001
        %v4186 = vpop.f32.mrb[0].mxu0
        %v4187 = vadd.f32 0.0, %v4186
        %v4188 = vpop.f32.mrb[0].mxu0
        %4189 = vmatprep.mubr.f32.mxu0 0.0
        %4190 = vmatmul.mubr.f32.gmra.mrb[0].mxu0 %v4004
        %v4191 = vpop.f32.mrb[0].mxu0
        %v4192 = vadd.f32 0.0, %v4191
        %v4193 = vpop.f32.mrb[0].mxu0
        %4194 = vmatprep.mubr.f32.mxu0 0.0
        %4195 = vmatmul.mubr.f32.gmra.mrb[0].mxu0 %v4007
        %v4196 = vpop.f32.mrb[0].mxu0
        %v4197 = vadd.f32 0.0, %v4196
        %v4198 = vpop.f32.mrb[0].mxu0
        %4199 = vmatprep.mubr.f32.mxu0 0.0
        %4200 = vmatmul.mubr.f32.gmra.mrb[0].mxu0 %v4010
        %v4201 = vpop.f32.mrb[0].mxu0
        %v4202 = vadd.f32 0.0, %v4201
        %v4203 = vpop.f32.mrb[0].mxu0
        %4204 = vmatprep.mubr.f32.mxu0 0.0
        %4205 = vmatmul.mubr.f32.gmra.mrb[0].mxu0 %v4013
        %v4206 = vpop.f32.mrb[0].mxu0
        %v4207 = vadd.f32 0.0, %v4206
        %v4208 = vpop.f32.mrb[0].mxu0
        %4209 = vmatprep.mubr.f32.mxu0 0.0
        %4210 = vmatmul.mubr.f32.gmra.mrb[0].mxu0 %v4016
        %v4211 = vpop.f32.mrb[0].mxu0
        %v4212 = vadd.f32 0.0, %v4211
        %v4213 = vpop.f32.mrb[0].mxu0
        %4214 = vmatprep.mubr.f32.mxu0 0.0
        %4215 = vmatmul.mubr.f32.gmra.mrb[0].mxu0 %v4019
        %v4216 = vpop.f32.mrb[0].mxu0
        %v4217 = vadd.f32 0.0, %v4216
        %v4218 = vpop.f32.mrb[0].mxu0
        %4219 = vmatprep.mubr.f32.mxu0 0.0
        %4220 = vmatmul.mubr.f32.gmra.mrb[0].mxu0 %v4022
        %v4221 = vpop.f32.mrb[0].mxu0
        %v4222 = vadd.f32 0.0, %v4221
        %v4223 = vpop.f32.mrb[0].mxu0
        %4224 = vmatprep.mubr.f32.mxu0 0.0
        %4225 = vmatmul.mubr.f32.gmra.mrb[0].mxu0 %v4025
        %v4226 = vpop.f32.mrb[0].mxu0
        %v4227 = vadd.f32 0.0, %v4226
        %v4228 = vpop.f32.mrb[0].mxu0
        %4229 = vmatprep.mubr.f32.mxu0 0.0
        %4230 = vmatmul.mubr.f32.gmra.mrb[0].mxu0 %v4028
        %v4231 = vpop.f32.mrb[0].mxu0
        %v4232 = vadd.f32 0.0, %v4231
        %v4233 = vpop.f32.mrb[0].mxu0
        %4234 = vmatprep.mubr.f32.mxu0 0.0
        %4235 = vmatmul.mubr.f32.gmra.mrb[0].mxu0 %v4031
        %v4236 = vpop.f32.mrb[0].mxu0
        %v4237 = vadd.f32 0.0, %v4236
        %v4238 = vpop.f32.mrb[0].mxu0
        %4239 = vmatprep.mubr.f32.mxu0 0.0
        %4240 = vmatmul.mubr.f32.gmra.mrb[0].mxu0 %v4034
        %v4241 = vpop.f32.mrb[0].mxu0
        %v4242 = vadd.f32 0.0, %v4241
        %v4243 = vpop.f32.mrb[0].mxu0
        %4244 = vmatprep.mubr.f32.mxu0 0.0
        %4245 = vmatmul.mubr.f32.gmra.mrb[0].mxu0 %v4037
        %v4246 = vpop.f32.mrb[0].mxu0
        %v4247 = vadd.f32 0.0, %v4246
        %v4248 = vpop.f32.mrb[0].mxu0
        %4249 = vmatprep.mubr.f32.mxu0 0.0
        %4250 = vmatmul.mubr.f32.gmra.mrb[0].mxu0 %v4040
        %v4251 = vpop.f32.mrb[0].mxu0
        %v4252 = vadd.f32 0.0, %v4251
        %v4253 = vpop.f32.mrb[0].mxu0
        %4254 = vmatprep.mubr.f32.mxu0 0.0
        %4255 = vmatmul.mubr.f32.gmra.mrb[0].mxu0 %v4043
        %v4256 = vpop.f32.mrb[0].mxu0
        %v4257 = vadd.f32 0.0, %v4256
        %v4258 = vpop.f32.mrb[0].mxu0
        %4259 = vmatprep.mubr.f32.mxu0 0.0
        %4260 = vmatmul.mubr.f32.gmra.mrb[0].mxu0 %v4046
        %v4261 = vpop.f32.mrb[0].mxu0
        %v4262 = vadd.f32 0.0, %v4261
        %v4263 = vpop.f32.mrb[0].mxu0
        %4264 = vmatprep.mubr.f32.mxu0 0.0
        %4265 = vmatmul.mubr.f32.gmra.mrb[0].mxu0 %v4049
        %v4266 = vpop.f32.mrb[0].mxu0
        %v4267 = vadd.f32 0.0, %v4266
        %v4268 = vpop.f32.mrb[0].mxu0
        %4269 = vmatprep.mubr.f32.mxu0 0.0
        %4270 = vmatmul.mubr.f32.gmra.mrb[0].mxu0 %v4052
        %v4271 = vpop.f32.mrb[0].mxu0
        %v4272 = vadd.f32 0.0, %v4271
        %v4273 = vpop.f32.mrb[0].mxu0
        %4274 = vmatprep.mubr.f32.mxu0 0.0
        %4275 = vmatmul.mubr.f32.gmra.mrb[0].mxu0 %v4055
        %v4276 = vpop.f32.mrb[0].mxu0
        %v4277 = vadd.f32 0.0, %v4276
        %v4278 = vpop.f32.mrb[0].mxu0
        %4279 = vmatprep.mubr.f32.mxu0 0.0
        %4280 = vmatmul.mubr.f32.gmra.mrb[0].mxu0 %v4058
        %v4281 = vpop.f32.mrb[0].mxu0
        %v4282 = vadd.f32 0.0, %v4281
        %v4283 = vpop.f32.mrb[0].mxu0
        %4284 = vdwg.mxu0
        %v4285 = vadd.f32 %v3289, %v4127
        %v4286 = vadd.f32 %v3290, %v4132
        %v4287 = vadd.f32 %v3291, %v4137
        %v4288 = vadd.f32 %v3292, %v4142
        %v4289 = vadd.f32 %v3293, %v4147
        %v4290 = vadd.f32 %v3294, %v4152
        %v4291 = vadd.f32 %v3295, %v4157
        %v4292 = vadd.f32 %v3296, %v4162
        %v4293 = vadd.f32 %v3297, %v4167
        %v4294 = vadd.f32 %v3298, %v4172
        %v4295 = vadd.f32 %v3299, %v4177
        %v4296 = vadd.f32 %v3300, %v4182
        %v4297 = vadd.f32 %v3301, %v4187
        %v4298 = vadd.f32 %v3302, %v4192
        %v4299 = vadd.f32 %v3303, %v4197
        %v4300 = vadd.f32 %v3304, %v4202
        %v4301 = vadd.f32 %v3305, %v4207
        %v4302 = vadd.f32 %v3306, %v4212
        %v4303 = vadd.f32 %v3307, %v4217
        %v4304 = vadd.f32 %v3308, %v4222
        %v4305 = vadd.f32 %v3309, %v4227
        %v4306 = vadd.f32 %v3310, %v4232
        %v4307 = vadd.f32 %v3311, %v4237
        %v4308 = vadd.f32 %v3312, %v4242
        %v4309 = vadd.f32 %v3313, %v4247
        %v4310 = vadd.f32 %v3314, %v4252
        %v4311 = vadd.f32 %v3315, %v4257
        %v4312 = vadd.f32 %v3316, %v4262
        %v4313 = vadd.f32 %v3317, %v4267
        %v4314 = vadd.f32 %v3318, %v4272
        %v4315 = vadd.f32 %v3319, %v4277
        %v4316 = vadd.f32 %v3320, %v4282
        %v4317 = vld [vmem:[%s5] sm:$0x1]
        %v4319 = vlaneseq
        %v4320 = vshrl.u32 %v4319, 7
        %v4321 = vsub.s32 0, %v4320
        %v4322 = vrot.slane %v4317, %v4321
        %v4324 = vmul.f32 %v4285, %v4322
        %v4325 = vmul.f32 %v4286, %v4322
        %v4326 = vmul.f32 %v4287, %v4322
        %v4327 = vmul.f32 %v4288, %v4322
        %v4328 = vmul.f32 %v4289, %v4322
        %v4329 = vmul.f32 %v4290, %v4322
        %v4330 = vmul.f32 %v4291, %v4322
        %v4331 = vmul.f32 %v4292, %v4322
        %v4332 = vmul.f32 %v4293, %v4322
        %v4333 = vmul.f32 %v4294, %v4322
        %v4334 = vmul.f32 %v4295, %v4322
        %v4335 = vmul.f32 %v4296, %v4322
        %v4336 = vmul.f32 %v4297, %v4322
        %v4337 = vmul.f32 %v4298, %v4322
        %v4338 = vmul.f32 %v4299, %v4322
        %v4339 = vmul.f32 %v4300, %v4322
        %v4340 = vmul.f32 %v4301, %v4322
        %v4341 = vmul.f32 %v4302, %v4322
        %v4342 = vmul.f32 %v4303, %v4322
        %v4343 = vmul.f32 %v4304, %v4322
        %v4344 = vmul.f32 %v4305, %v4322
        %v4345 = vmul.f32 %v4306, %v4322
        %v4346 = vmul.f32 %v4307, %v4322
        %v4347 = vmul.f32 %v4308, %v4322
        %v4348 = vmul.f32 %v4309, %v4322
        %v4349 = vmul.f32 %v4310, %v4322
        %v4350 = vmul.f32 %v4311, %v4322
        %v4351 = vmul.f32 %v4312, %v4322
        %v4352 = vmul.f32 %v4313, %v4322
        %v4353 = vmul.f32 %v4314, %v4322
        %v4354 = vmul.f32 %v4315, %v4322
        %v4355 = vmul.f32 %v4316, %v4322
        %v4356 = vld [vmem:[%s6] sm:$0x1]
        %v4358 = vlaneseq
        %v4359 = vshrl.u32 %v4358, 7
        %v4360 = vsub.s32 0, %v4359
        %v4361 = vrot.slane %v4356, %v4360
        %v4363 = vadd.f32 %v4324, %v4361
        %v4364 = vadd.f32 %v4325, %v4361
        %v4365 = vadd.f32 %v4326, %v4361
        %v4366 = vadd.f32 %v4327, %v4361
        %v4367 = vadd.f32 %v4328, %v4361
        %v4368 = vadd.f32 %v4329, %v4361
        %v4369 = vadd.f32 %v4330, %v4361
        %v4370 = vadd.f32 %v4331, %v4361
        %v4371 = vadd.f32 %v4332, %v4361
        %v4372 = vadd.f32 %v4333, %v4361
        %v4373 = vadd.f32 %v4334, %v4361
        %v4374 = vadd.f32 %v4335, %v4361
        %v4375 = vadd.f32 %v4336, %v4361
        %v4376 = vadd.f32 %v4337, %v4361
        %v4377 = vadd.f32 %v4338, %v4361
        %v4378 = vadd.f32 %v4339, %v4361
        %v4379 = vadd.f32 %v4340, %v4361
        %v4380 = vadd.f32 %v4341, %v4361
        %v4381 = vadd.f32 %v4342, %v4361
        %v4382 = vadd.f32 %v4343, %v4361
        %v4383 = vadd.f32 %v4344, %v4361
        %v4384 = vadd.f32 %v4345, %v4361
        %v4385 = vadd.f32 %v4346, %v4361
        %v4386 = vadd.f32 %v4347, %v4361
        %v4387 = vadd.f32 %v4348, %v4361
        %v4388 = vadd.f32 %v4349, %v4361
        %v4389 = vadd.f32 %v4350, %v4361
        %v4390 = vadd.f32 %v4351, %v4361
        %v4391 = vadd.f32 %v4352, %v4361
        %v4392 = vadd.f32 %v4353, %v4361
        %v4393 = vadd.f32 %v4354, %v4361
        %v4394 = vadd.f32 %v4355, %v4361
        %v4395 = vsub.f32 0.0, %v4363
        %v4396 = vsub.f32 0.0, %v4364
        %v4397 = vsub.f32 0.0, %v4365
        %v4398 = vsub.f32 0.0, %v4366
        %v4399 = vsub.f32 0.0, %v4367
        %v4400 = vsub.f32 0.0, %v4368
        %v4401 = vsub.f32 0.0, %v4369
        %v4402 = vsub.f32 0.0, %v4370
        %v4403 = vsub.f32 0.0, %v4371
        %v4404 = vsub.f32 0.0, %v4372
        %v4405 = vsub.f32 0.0, %v4373
        %v4406 = vsub.f32 0.0, %v4374
        %v4407 = vsub.f32 0.0, %v4375
        %v4408 = vsub.f32 0.0, %v4376
        %v4409 = vsub.f32 0.0, %v4377
        %v4410 = vsub.f32 0.0, %v4378
        %v4411 = vsub.f32 0.0, %v4379
        %v4412 = vsub.f32 0.0, %v4380
        %v4413 = vsub.f32 0.0, %v4381
        %v4414 = vsub.f32 0.0, %v4382
        %v4415 = vsub.f32 0.0, %v4383
        %v4416 = vsub.f32 0.0, %v4384
        %v4417 = vsub.f32 0.0, %v4385
        %v4418 = vsub.f32 0.0, %v4386
        %v4419 = vsub.f32 0.0, %v4387
        %v4420 = vsub.f32 0.0, %v4388
        %v4421 = vsub.f32 0.0, %v4389
        %v4422 = vsub.f32 0.0, %v4390
        %v4423 = vsub.f32 0.0, %v4391
        %v4424 = vsub.f32 0.0, %v4392
        %v4425 = vsub.f32 0.0, %v4393
        %v4426 = vsub.f32 0.0, %v4394
        %v4427 = vmul.f32 %v4395, 1.442695
        %v4428 = vpow.pop %v4427
        %v4429 = vmul.f32 %v4396, 1.442695
        %v4430 = vpow.pop %v4429
        %v4431 = vmul.f32 %v4397, 1.442695
        %v4432 = vpow.pop %v4431
        %v4433 = vmul.f32 %v4398, 1.442695
        %v4434 = vpow.pop %v4433
        %v4435 = vmul.f32 %v4399, 1.442695
        %v4436 = vpow.pop %v4435
        %v4437 = vmul.f32 %v4400, 1.442695
        %v4438 = vpow.pop %v4437
        %v4439 = vmul.f32 %v4401, 1.442695
        %v4440 = vpow.pop %v4439
        %v4441 = vmul.f32 %v4402, 1.442695
        %v4442 = vpow.pop %v4441
        %v4443 = vmul.f32 %v4403, 1.442695
        %v4444 = vpow.pop %v4443
        %v4445 = vmul.f32 %v4404, 1.442695
        %v4446 = vpow.pop %v4445
        %v4447 = vmul.f32 %v4405, 1.442695
        %v4448 = vpow.pop %v4447
        %v4449 = vmul.f32 %v4406, 1.442695
        %v4450 = vpow.pop %v4449
        %v4451 = vmul.f32 %v4407, 1.442695
        %v4452 = vpow.pop %v4451
        %v4453 = vmul.f32 %v4408, 1.442695
        %v4454 = vpow.pop %v4453
        %v4455 = vmul.f32 %v4409, 1.442695
        %v4456 = vpow.pop %v4455
        %v4457 = vmul.f32 %v4410, 1.442695
        %v4458 = vpow.pop %v4457
        %v4459 = vmul.f32 %v4411, 1.442695
        %v4460 = vpow.pop %v4459
        %v4461 = vmul.f32 %v4412, 1.442695
        %v4462 = vpow.pop %v4461
        %v4463 = vmul.f32 %v4413, 1.442695
        %v4464 = vpow.pop %v4463
        %v4465 = vmul.f32 %v4414, 1.442695
        %v4466 = vpow.pop %v4465
        %v4467 = vmul.f32 %v4415, 1.442695
        %v4468 = vpow.pop %v4467
        %v4469 = vmul.f32 %v4416, 1.442695
        %v4470 = vpow.pop %v4469
        %v4471 = vmul.f32 %v4417, 1.442695
        %v4472 = vpow.pop %v4471
        %v4473 = vmul.f32 %v4418, 1.442695
        %v4474 = vpow.pop %v4473
        %v4475 = vmul.f32 %v4419, 1.442695
        %v4476 = vpow.pop %v4475
        %v4477 = vmul.f32 %v4420, 1.442695
        %v4478 = vpow.pop %v4477
        %v4479 = vmul.f32 %v4421, 1.442695
        %v4480 = vpow.pop %v4479
        %v4481 = vmul.f32 %v4422, 1.442695
        %v4482 = vpow.pop %v4481
        %v4483 = vmul.f32 %v4423, 1.442695
        %v4484 = vpow.pop %v4483
        %v4485 = vmul.f32 %v4424, 1.442695
        %v4486 = vpow.pop %v4485
        %v4487 = vmul.f32 %v4425, 1.442695
        %v4488 = vpow.pop %v4487
        %v4489 = vmul.f32 %v4426, 1.442695
        %v4490 = vpow.pop %v4489
        %v4491 = vadd.f32 %v4428, 1.0
        %v4492 = vadd.f32 %v4430, 1.0
        %v4493 = vadd.f32 %v4432, 1.0
        %v4494 = vadd.f32 %v4434, 1.0
        %v4495 = vadd.f32 %v4436, 1.0
        %v4496 = vadd.f32 %v4438, 1.0
        %v4497 = vadd.f32 %v4440, 1.0
        %v4498 = vadd.f32 %v4442, 1.0
        %v4499 = vadd.f32 %v4444, 1.0
        %v4500 = vadd.f32 %v4446, 1.0
        %v4501 = vadd.f32 %v4448, 1.0
        %v4502 = vadd.f32 %v4450, 1.0
        %v4503 = vadd.f32 %v4452, 1.0
        %v4504 = vadd.f32 %v4454, 1.0
        %v4505 = vadd.f32 %v4456, 1.0
        %v4506 = vadd.f32 %v4458, 1.0
        %v4507 = vadd.f32 %v4460, 1.0
        %v4508 = vadd.f32 %v4462, 1.0
        %v4509 = vadd.f32 %v4464, 1.0
        %v4510 = vadd.f32 %v4466, 1.0
        %v4511 = vadd.f32 %v4468, 1.0
        %v4512 = vadd.f32 %v4470, 1.0
        %v4513 = vadd.f32 %v4472, 1.0
        %v4514 = vadd.f32 %v4474, 1.0
        %v4515 = vadd.f32 %v4476, 1.0
        %v4516 = vadd.f32 %v4478, 1.0
        %v4517 = vadd.f32 %v4480, 1.0
        %v4518 = vadd.f32 %v4482, 1.0
        %v4519 = vadd.f32 %v4484, 1.0
        %v4520 = vadd.f32 %v4486, 1.0
        %v4521 = vadd.f32 %v4488, 1.0
        %v4522 = vadd.f32 %v4490, 1.0
        %v4523 = vrcp.pop %v4491
        %v4524 = vmul.f32 1.0, %v4523
        %v4525 = vrcp.pop %v4492
        %v4526 = vmul.f32 1.0, %v4525
        %v4527 = vrcp.pop %v4493
        %v4528 = vmul.f32 1.0, %v4527
        %v4529 = vrcp.pop %v4494
        %v4530 = vmul.f32 1.0, %v4529
        %v4531 = vrcp.pop %v4495
        %v4532 = vmul.f32 1.0, %v4531
        %v4533 = vrcp.pop %v4496
        %v4534 = vmul.f32 1.0, %v4533
        %v4535 = vrcp.pop %v4497
        %v4536 = vmul.f32 1.0, %v4535
        %v4537 = vrcp.pop %v4498
        %v4538 = vmul.f32 1.0, %v4537
        %v4539 = vrcp.pop %v4499
        %v4540 = vmul.f32 1.0, %v4539
        %v4541 = vrcp.pop %v4500
        %v4542 = vmul.f32 1.0, %v4541
        %v4543 = vrcp.pop %v4501
        %v4544 = vmul.f32 1.0, %v4543
        %v4545 = vrcp.pop %v4502
        %v4546 = vmul.f32 1.0, %v4545
        %v4547 = vrcp.pop %v4503
        %v4548 = vmul.f32 1.0, %v4547
        %v4549 = vrcp.pop %v4504
        %v4550 = vmul.f32 1.0, %v4549
        %v4551 = vrcp.pop %v4505
        %v4552 = vmul.f32 1.0, %v4551
        %v4553 = vrcp.pop %v4506
        %v4554 = vmul.f32 1.0, %v4553
        %v4555 = vrcp.pop %v4507
        %v4556 = vmul.f32 1.0, %v4555
        %v4557 = vrcp.pop %v4508
        %v4558 = vmul.f32 1.0, %v4557
        %v4559 = vrcp.pop %v4509
        %v4560 = vmul.f32 1.0, %v4559
        %v4561 = vrcp.pop %v4510
        %v4562 = vmul.f32 1.0, %v4561
        %v4563 = vrcp.pop %v4511
        %v4564 = vmul.f32 1.0, %v4563
        %v4565 = vrcp.pop %v4512
        %v4566 = vmul.f32 1.0, %v4565
        %v4567 = vrcp.pop %v4513
        %v4568 = vmul.f32 1.0, %v4567
        %v4569 = vrcp.pop %v4514
        %v4570 = vmul.f32 1.0, %v4569
        %v4571 = vrcp.pop %v4515
        %v4572 = vmul.f32 1.0, %v4571
        %v4573 = vrcp.pop %v4516
        %v4574 = vmul.f32 1.0, %v4573
        %v4575 = vrcp.pop %v4517
        %v4576 = vmul.f32 1.0, %v4575
        %v4577 = vrcp.pop %v4518
        %v4578 = vmul.f32 1.0, %v4577
        %v4579 = vrcp.pop %v4519
        %v4580 = vmul.f32 1.0, %v4579
        %v4581 = vrcp.pop %v4520
        %v4582 = vmul.f32 1.0, %v4581
        %v4583 = vrcp.pop %v4521
        %v4584 = vmul.f32 1.0, %v4583
        %v4585 = vrcp.pop %v4522
        %v4586 = vmul.f32 1.0, %v4585
        %v4587 = vmul.f32 %v4363, %v4524
        %v4588 = vmul.f32 %v4364, %v4526
        %v4589 = vmul.f32 %v4365, %v4528
        %v4590 = vmul.f32 %v4366, %v4530
        %v4591 = vmul.f32 %v4367, %v4532
        %v4592 = vmul.f32 %v4368, %v4534
        %v4593 = vmul.f32 %v4369, %v4536
        %v4594 = vmul.f32 %v4370, %v4538
        %v4595 = vmul.f32 %v4371, %v4540
        %v4596 = vmul.f32 %v4372, %v4542
        %v4597 = vmul.f32 %v4373, %v4544
        %v4598 = vmul.f32 %v4374, %v4546
        %v4599 = vmul.f32 %v4375, %v4548
        %v4600 = vmul.f32 %v4376, %v4550
        %v4601 = vmul.f32 %v4377, %v4552
        %v4602 = vmul.f32 %v4378, %v4554
        %v4603 = vmul.f32 %v4379, %v4556
        %v4604 = vmul.f32 %v4380, %v4558
        %v4605 = vmul.f32 %v4381, %v4560
        %v4606 = vmul.f32 %v4382, %v4562
        %v4607 = vmul.f32 %v4383, %v4564
        %v4608 = vmul.f32 %v4384, %v4566
        %v4609 = vmul.f32 %v4385, %v4568
        %v4610 = vmul.f32 %v4386, %v4570
        %v4611 = vmul.f32 %v4387, %v4572
        %v4612 = vmul.f32 %v4388, %v4574
        %v4613 = vmul.f32 %v4389, %v4576
        %v4614 = vmul.f32 %v4390, %v4578
        %v4615 = vmul.f32 %v4391, %v4580
        %v4616 = vmul.f32 %v4392, %v4582
        %v4617 = vmul.f32 %v4393, %v4584
        %v4618 = vmul.f32 %v4394, %v4586
        %4619 = vst.msk [vmem:[%s311] sm:$0xff] %vm348, %v4587
        %4620 = vst.msk [vmem:[%s311 + $0x8] sm:$0xff] %vm348, %v4588
        %4621 = vst.msk [vmem:[%s311 + $0x10] sm:$0xff] %vm348, %v4589
        %4622 = vst.msk [vmem:[%s311 + $0x18] sm:$0xff] %vm348, %v4590
        %4623 = vst.msk [vmem:[%s311 + $0x20] sm:$0xff] %vm348, %v4591
        %4624 = vst.msk [vmem:[%s311 + $0x28] sm:$0xff] %vm348, %v4592
        %4625 = vst.msk [vmem:[%s311 + $0x30] sm:$0xff] %vm348, %v4593
        %4626 = vst.msk [vmem:[%s311 + $0x38] sm:$0xff] %vm348, %v4594
        %4627 = vst.msk [vmem:[%s311 + $0x40] sm:$0xff] %vm348, %v4595
        %4628 = vst.msk [vmem:[%s311 + $0x48] sm:$0xff] %vm348, %v4596
        %4629 = vst.msk [vmem:[%s311 + $0x50] sm:$0xff] %vm348, %v4597
        %4630 = vst.msk [vmem:[%s311 + $0x58] sm:$0xff] %vm348, %v4598
        %4631 = vst.msk [vmem:[%s311 + $0x60] sm:$0xff] %vm348, %v4599
        %4632 = vst.msk [vmem:[%s311 + $0x68] sm:$0xff] %vm348, %v4600
        %4633 = vst.msk [vmem:[%s311 + $0x70] sm:$0xff] %vm348, %v4601
        %4634 = vst.msk [vmem:[%s311 + $0x78] sm:$0xff] %vm348, %v4602
        %4635 = vst.msk [vmem:[%s311 + $0x80] sm:$0xff] %vm348, %v4603
        %4636 = vst.msk [vmem:[%s311 + $0x88] sm:$0xff] %vm348, %v4604
        %4637 = vst.msk [vmem:[%s311 + $0x90] sm:$0xff] %vm348, %v4605
        %4638 = vst.msk [vmem:[%s311 + $0x98] sm:$0xff] %vm348, %v4606
        %4639 = vst.msk [vmem:[%s311 + $0xa0] sm:$0xff] %vm348, %v4607
        %4640 = vst.msk [vmem:[%s311 + $0xa8] sm:$0xff] %vm348, %v4608
        %4641 = vst.msk [vmem:[%s311 + $0xb0] sm:$0xff] %vm348, %v4609
        %4642 = vst.msk [vmem:[%s311 + $0xb8] sm:$0xff] %vm348, %v4610
        %4643 = vst.msk [vmem:[%s311 + $0xc0] sm:$0xff] %vm348, %v4611
        %4644 = vst.msk [vmem:[%s311 + $0xc8] sm:$0xff] %vm348, %v4612
        %4645 = vst.msk [vmem:[%s311 + $0xd0] sm:$0xff] %vm348, %v4613
        %4646 = vst.msk [vmem:[%s311 + $0xd8] sm:$0xff] %vm348, %v4614
        %4647 = vst.msk [vmem:[%s311 + $0xe0] sm:$0xff] %vm348, %v4615
        %4648 = vst.msk [vmem:[%s311 + $0xe8] sm:$0xff] %vm348, %v4616
        %4649 = vst.msk [vmem:[%s311 + $0xf0] sm:$0xff] %vm348, %v4617
        %4650 = vst.msk [vmem:[%s311 + $0xf8] sm:$0xff] %vm348, %v4618
        %s4651 = sand.u32 %s185, 1
        %s4652 = scalar_lea.sflag [#allocation5], %s4651
        %s4653 = sand.u32 %s185, 1
        %s4654 = smul.addr %s4653, 256
        %s4655 = scalar_lea.vmem [#allocation8], %s4654
        // Predicated region
        $region57: #{tpu_custom_call.1} parent=47 // pred_check
          %p4656 = pneg %p195
        $region58: #{tpu_custom_call.1} parent=47 // pred_check_branch
          %4658 = sbr.rel (%p4656) target = $region60
        $region59: #{tpu_custom_call.1} parent=47 // pred_region
          %s4660 = ssub.s32 4096, 4096
          %4661 = vsyncadd %s4652, %s4660
          %s4662 = smul.addr %s25, 32
          %s4663 = smul.addr %s4662, 128
          %s4664 = scalar_lea.hbm %s7, %s4663
          %s4665 = sshll.u32 %s4655, 4
          %s4666 = int_to_ptr.vmem [resolvable:$true] %s4665
          %4671 = dma.vmem_to_hbm [thread:$0]  %s4666, 4096, %s4664, %s4652, 128, 128, 8
        $region60: #{tpu_custom_call.1} parent=47 // pred_fallthru
          _
      $region48: #{tpu_custom_call.1} parent=5 // pred_fallthru
        _
      %p4672 = scmp.le.s32.totalorder 2, %s20
      // Predicated region
      $region61: #{tpu_custom_call.1} parent=5 // pred_check
        %p4673 = pneg %p4672
      $region62: #{tpu_custom_call.1} parent=5 // pred_check_branch
        %4675 = sbr.rel (%p4673) target = $region64
      $region63: #{tpu_custom_call.1} parent=5 // pred_region
        %s4676 = ssub.s32 %s20, 2
        // Predicated region
        $region65: #{tpu_custom_call.1} parent=63 // pred_check
          %p4677 = pneg %p201
        $region66: #{tpu_custom_call.1} parent=63 // pred_check_branch
          %4679 = sbr.rel (%p4677) target = $region68
        $region67: #{tpu_custom_call.1} parent=63 // pred_region
          %s4680 = sand.u32 %s186, 1
          %s4681 = scalar_lea.sflag [#allocation5], %s4680
          %s4682 = sand.u32 %s186, 1
          %s4683 = smul.addr %s4682, 256
          %s4684 = scalar_lea.vmem [#allocation8], %s4683
          %4685 = dma.done %s4681, 4096
        $region68: #{tpu_custom_call.1} parent=63 // pred_fallthru
          _
      $region64: #{tpu_custom_call.1} parent=5 // pred_fallthru
        _
    $region6: #{tpu_custom_call.1} parent=1 // loop_footer
      %s24 = sadd.s32 1, %s20
    $region7: #{tpu_custom_call.1} parent=1 // loop_footer_branch
      %19 = sbr.rel target = $region3
    $region8: #{tpu_custom_call.1} parent=1 // loop_exit
      _
    %4686 = vsyncpa [#allocation4], 1
    %s4687 = scalar_lea.sflag [#allocation4], 1
    %4688 = vsyncpa %s4687, 1
    %4689 = vsyncpa [#allocation7], 1
    %4690 = vsyncpa [#allocation5], 1
    %s4691 = scalar_lea.sflag [#allocation5], 1
    %4692 = vsyncpa %s4691, 1

</llo_original>
